<compile_context>
chip_gen: v6e
topology: v6e:2x2x1
jax: 0.10.0
libtpu: 0.0.40
codegen_flags: <defaults>
</compile_context>

<pallas_src>
import jax
import jax.numpy as jnp
from jax.experimental import pallas as pl
from jax.experimental.pallas import tpu as pltpu


def _zero_halo(pad_ref, H, W, pad_l):
    """Zero only the 1-pixel conv halo of a padded scratch (never the interior)."""
    Wp = pad_ref.shape[1]
    C = pad_ref.shape[2]
    zrow = jnp.zeros((1, Wp, C), pad_ref.dtype)
    pad_ref[0:1, :, :] = zrow                                  # top halo row
    pad_ref[H + 1:H + 2, :, :] = zrow                          # bottom halo row
    zcol = jnp.zeros((H, 1, C), pad_ref.dtype)
    pad_ref[1:H + 1, pad_l - 1:pad_l, :] = zcol                # left halo col
    pad_ref[1:H + 1, pad_l + W:pad_l + W + 1, :] = zcol        # right halo col


def _conv3x3_strip(pad_ref, w_ref, b_ref, r0, th, W, pad_l):
    """3x3 'same' conv of output rows [r0, r0+th), fully accumulated in registers.

    pad_ref: [H+2, pad_l+W+1, Cin] bf16  zero-haloed input, interior cols at pad_l
    w_ref:   Ref[9, Cin, Cp]       bf16  tap k = ky*3 + kx (Cp lane-dense outputs)
    b_ref:   Ref[1, Cp]            f32
    Returns  [th, W, Cp] f32 = conv + bias (no VMEM accumulator, no RMW).
    """
    acc = None
    for dx in range(3):
        c0 = pad_l - 1 + dx
        # One width-shifted slab per dx; its three dy taps are slices along the
        # cheap major dim.  Row start r0 is dynamic (strip loop), columns static.
        slab = pad_ref[pl.ds(r0, th + 2), c0:c0 + W, :]        # [th+2, W, Cin] bf16
        for dy in range(3):
            part = jnp.einsum("hwc,co->hwo", slab[dy:dy + th], w_ref[dy * 3 + dx],
                              preferred_element_type=jnp.float32)
            acc = part if acc is None else acc + part
    return acc + b_ref[0]                                      # bias folded in (f32)


def res_block_kernel(x_ref, w1_ref, b1_ref, w2_ref, b2_ref, a_ref,
                     o_ref, xpad_ref, ypad_ref):
    _, H, W, C = x_ref.shape
    pad_l = xpad_ref.shape[1] - W - 1      # bf16-tile-aligned interior start (W axis)
    alpha = a_ref[0]                       # scalar PReLU slope from SMEM
    # TODO(synk): nn.PReLU(num_parameters=C) would need a per-channel alpha here.

    # ---- stage x (bf16) with a zero 1-pixel halo; interior store is aligned ----
    _zero_halo(xpad_ref, H, W, pad_l)
    xpad_ref[1:H + 1, pad_l:pad_l + W, :] = x_ref[0].astype(jnp.bfloat16)
    _zero_halo(ypad_ref, H, W, pad_l)

    TH = min(8, H)                         # strip height: <=16 f32 vregs of partial
    n_full, rem = H // TH, H % TH

    def conv1_strip(r0, th):               # conv1 + PReLU -> haloed intermediate
        acc = _conv3x3_strip(xpad_ref, w1_ref, b1_ref, r0, th, W, pad_l)
        y = jnp.where(acc >= 0.0, acc, alpha * acc)            # f32 PReLU
        ypad_ref[pl.ds(r0 + 1, th), pad_l:pad_l + W, :] = \
            y[:, :, :C].astype(jnp.bfloat16)

    def conv2_strip(r0, th):               # conv2 + residual -> output block
        acc = _conv3x3_strip(ypad_ref, w2_ref, b2_ref, r0, th, W, pad_l)
        x_strip = x_ref[0, pl.ds(r0, th)].astype(jnp.float32)  # residual re-read late
        o_ref[0, pl.ds(r0, th)] = (x_strip + acc[:, :, :C]).astype(o_ref.dtype)

    @pl.loop(0, n_full)
    def _(s):
        conv1_strip(s * TH, TH)
    if rem:                                # static tail strip (H not multiple of TH)
        conv1_strip(n_full * TH, rem)

    @pl.loop(0, n_full)
    def _(s):
        conv2_strip(s * TH, TH)
    if rem:
        conv2_strip(n_full * TH, rem)


def res_block(x, w1, b1, alpha, w2, b2):
    """x: [B, C, H, W] NCHW (PyTorch convention). Weights: [Cout, Cin, 3, 3]."""
    B, C, H, W = x.shape
    Cp = ((C + 127) // 128) * 128          # lane-dense output-channel padding
    PADL = 16                              # bf16 sublane-tile-aligned interior offset

    alpha_arr = jnp.asarray(alpha, jnp.float32).reshape(-1)
    if alpha_arr.shape[0] != 1:
        raise NotImplementedError(
            "only nn.PReLU() default (num_parameters=1) is supported")

    # Layout glue: NCHW -> NHWC once at the boundary (no spatial pad in HBM).
    x_nhwc = jnp.transpose(x, (0, 2, 3, 1))

    def prep_w(w):   # [Cout, Cin, 3, 3] -> [9, Cin, Cp] bf16 (tap k = ky*3 + kx)
        wr = jnp.transpose(w, (2, 3, 1, 0)).reshape(9, C, C).astype(jnp.float32)
        return jnp.zeros((9, C, Cp), jnp.float32).at[:, :, :C].set(wr) \
                  .astype(jnp.bfloat16)

    def prep_b(b):   # biases stay f32 (added on the f32 accumulator)
        return jnp.zeros((1, Cp), jnp.float32).at[0, :C].set(b.astype(jnp.float32))

    w1_p, w2_p = prep_w(w1), prep_w(w2)    # both compact: K = C, ~9 KB each (bf16)
    b1_p, b2_p = prep_b(b1), prep_b(b2)

    out_nhwc = pl.pallas_call(
        res_block_kernel,
        out_shape=jax.ShapeDtypeStruct((B, H, W, C), x.dtype),
        grid_spec=pltpu.PrefetchScalarGridSpec(
            num_scalar_prefetch=0,
            grid=(B,),
            in_specs=[
                pl.BlockSpec((1, H, W, C), lambda b: (b, 0, 0, 0)),   # x (compact HBM)
                pl.BlockSpec((9, C, Cp), lambda b: (0, 0, 0)),        # w1 (bf16 compact)
                pl.BlockSpec((1, Cp), lambda b: (0, 0)),              # b1 (f32)
                pl.BlockSpec((9, C, Cp), lambda b: (0, 0, 0)),        # w2 (bf16 compact)
                pl.BlockSpec((1, Cp), lambda b: (0, 0)),              # b2 (f32)
                pl.BlockSpec(memory_space=pltpu.MemorySpace.SMEM),    # alpha scalar
            ],
            out_specs=pl.BlockSpec((1, H, W, C), lambda b: (b, 0, 0, 0)),
            scratch_shapes=[
                pltpu.VMEM((H + 2, PADL + W + 1, C), jnp.bfloat16),   # zero-haloed x
                pltpu.VMEM((H + 2, PADL + W + 1, C), jnp.bfloat16),   # haloed PReLU(conv1)
            ],
        ),
        compiler_params=pltpu.CompilerParams(
            dimension_semantics=("parallel",),
            vmem_limit_bytes=32 * 1024 * 1024),
    )(x_nhwc, w1_p, b1_p, w2_p, b2_p, alpha_arr)
    return jnp.transpose(out_nhwc, (0, 3, 1, 2))


def ref_forward(x, w1, b1, alpha, w2, b2):
    # pure-JAX f32 reference (NCHW, same semantics as the PyTorch module)
    dn = jax.lax.conv_dimension_numbers(x.shape, w1.shape,
                                        ("NCHW", "OIHW", "NCHW"))
    y = jax.lax.conv_general_dilated(x, w1, (1, 1), ((1, 1), (1, 1)),
                                     dimension_numbers=dn)
    y = y + b1[None, :, None, None]
    y = jnp.where(y >= 0, y, alpha * y)
    y = jax.lax.conv_general_dilated(y, w2, (1, 1), ((1, 1), (1, 1)),
                                     dimension_numbers=dn)
    y = y + b2[None, :, None, None]
    return x + y


if __name__ == "__main__":
    B, C, H, W = 2, 4, 16, 16
    key = jax.random.PRNGKey(0)
    kx, k1, kb1, k2, kb2 = jax.random.split(key, 5)

    x = jax.random.normal(kx, (B, C, H, W), jnp.float32)
    fan_in = C * 3 * 3
    w1 = jax.random.normal(k1, (C, C, 3, 3), jnp.float32) / jnp.sqrt(fan_in)
    b1 = jax.random.normal(kb1, (C,), jnp.float32) * 0.01
    w2 = jax.random.normal(k2, (C, C, 3, 3), jnp.float32) / jnp.sqrt(fan_in)
    b2 = jax.random.normal(kb2, (C,), jnp.float32) * 0.01
    alpha = jnp.float32(0.25)  # PyTorch PReLU default init (single parameter)

    out = jax.block_until_ready(res_block(x, w1, b1, alpha, w2, b2))
    ref = jax.block_until_ready(ref_forward(x, w1, b1, alpha, w2, b2))

    assert out.shape == ref.shape == (B, C, H, W)
    # bf16 MXU operands + f32 accumulation vs the all-f32 reference.
    err = float(jnp.max(jnp.abs(out - ref)))
    assert jnp.allclose(out, ref, atol=5e-2, rtol=5e-2), err
    print("KERNEL_OK")
</pallas_src>

<mosaic_0001>
module attributes {stable_mosaic.version = 11 : i64} {
  func.func @res_block_kernel(%arg0: i32, %arg1: memref<1x16x16x4xf32, #tpu.memory_space<vmem>>, %arg2: memref<9x4x128xbf16, #tpu.memory_space<vmem>>, %arg3: memref<1x128xf32, #tpu.memory_space<vmem>>, %arg4: memref<9x4x128xbf16, #tpu.memory_space<vmem>>, %arg5: memref<1x128xf32, #tpu.memory_space<vmem>>, %arg6: memref<1xf32, #tpu.memory_space<smem>>, %arg7: memref<1x16x16x4xf32, #tpu.memory_space<vmem>>, %arg8: memref<18x33x4xbf16, #tpu.memory_space<vmem>>, %arg9: memref<18x33x4xbf16, #tpu.memory_space<vmem>>) attributes {dimension_semantics = [#tpu.dimension_semantics<parallel>], iteration_bounds = array<i64: 2>, scalar_prefetch = 0 : i64, scratch_operands = 2 : i64, tpu.core_type = #tpu.core_type<tc>, window_params = [{transform_indices = @transform_0, window_bounds = array<i64: 1, 16, 16, 4>}, {pipeline_mode = #tpu.pipeline_mode<synchronous>, transform_indices = @transform_1, window_bounds = array<i64: 9, 4, 128>}, {pipeline_mode = #tpu.pipeline_mode<synchronous>, transform_indices = @transform_2, window_bounds = array<i64: 1, 128>}, {pipeline_mode = #tpu.pipeline_mode<synchronous>, transform_indices = @transform_3, window_bounds = array<i64: 9, 4, 128>}, {pipeline_mode = #tpu.pipeline_mode<synchronous>, transform_indices = @transform_4, window_bounds = array<i64: 1, 128>}, {transform_indices = @transform_5, window_bounds = array<i64: 1>}, {transform_indices = @transform_6, window_bounds = array<i64: 1, 16, 16, 4>}]} {
    %c0 = arith.constant 0 : index
    %0 = memref.load %arg6[%c0] : memref<1xf32, #tpu.memory_space<smem>>
    %cst = arith.constant 0.000000e+00 : bf16
    %1 = vector.broadcast %cst : bf16 to vector<1x33x4xbf16>
    %c0_0 = arith.constant 0 : index
    %c0_1 = arith.constant 0 : index
    %c0_2 = arith.constant 0 : index
    %2 = vector.load %arg8[%c0_0, %c0_1, %c0_2] : memref<18x33x4xbf16, #tpu.memory_space<vmem>>, vector<1x33x4xbf16>
    tpu.vector_store %arg8[%c0_0, %c0_1, %c0_2], %1 {strides = array<i32>} : memref<18x33x4xbf16, #tpu.memory_space<vmem>>, vector<1x33x4xbf16>,
    %c17 = arith.constant 17 : index
    %c0_3 = arith.constant 0 : index
    %c0_4 = arith.constant 0 : index
    %3 = vector.load %arg8[%c17, %c0_3, %c0_4] : memref<18x33x4xbf16, #tpu.memory_space<vmem>>, vector<1x33x4xbf16>
    tpu.vector_store %arg8[%c17, %c0_3, %c0_4], %1 {strides = array<i32>} : memref<18x33x4xbf16, #tpu.memory_space<vmem>>, vector<1x33x4xbf16>,
    %cst_5 = arith.constant 0.000000e+00 : bf16
    %4 = vector.broadcast %cst_5 : bf16 to vector<16x1x4xbf16>
    %c1 = arith.constant 1 : index
    %c15 = arith.constant 15 : index
    %c0_6 = arith.constant 0 : index
    %5 = vector.load %arg8[%c1, %c15, %c0_6] : memref<18x33x4xbf16, #tpu.memory_space<vmem>>, vector<16x1x4xbf16>
    tpu.vector_store %arg8[%c1, %c15, %c0_6], %4 {strides = array<i32>} : memref<18x33x4xbf16, #tpu.memory_space<vmem>>, vector<16x1x4xbf16>,
    %c1_7 = arith.constant 1 : index
    %c32 = arith.constant 32 : index
    %c0_8 = arith.constant 0 : index
    %6 = vector.load %arg8[%c1_7, %c32, %c0_8] : memref<18x33x4xbf16, #tpu.memory_space<vmem>>, vector<16x1x4xbf16>
    tpu.vector_store %arg8[%c1_7, %c32, %c0_8], %4 {strides = array<i32>} : memref<18x33x4xbf16, #tpu.memory_space<vmem>>, vector<16x1x4xbf16>,
    %c0_9 = arith.constant 0 : index
    %c0_10 = arith.constant 0 : index
    %c0_11 = arith.constant 0 : index
    %c0_12 = arith.constant 0 : index
    %7 = vector.load %arg1[%c0_9, %c0_10, %c0_11, %c0_12] : memref<1x16x16x4xf32, #tpu.memory_space<vmem>>, vector<1x16x16x4xf32>
    %8 = vector.shape_cast %7 : vector<1x16x16x4xf32> to vector<16x16x4xf32>
    %9 = arith.truncf %8 : vector<16x16x4xf32> to vector<16x16x4xbf16>
    %c1_13 = arith.constant 1 : index
    %c16 = arith.constant 16 : index
    %c0_14 = arith.constant 0 : index
    %10 = vector.load %arg8[%c1_13, %c16, %c0_14] : memref<18x33x4xbf16, #tpu.memory_space<vmem>>, vector<16x16x4xbf16>
    tpu.vector_store %arg8[%c1_13, %c16, %c0_14], %9 {strides = array<i32>} : memref<18x33x4xbf16, #tpu.memory_space<vmem>>, vector<16x16x4xbf16>,
    %cst_15 = arith.constant 0.000000e+00 : bf16
    %11 = vector.broadcast %cst_15 : bf16 to vector<1x33x4xbf16>
    %c0_16 = arith.constant 0 : index
    %c0_17 = arith.constant 0 : index
    %c0_18 = arith.constant 0 : index
    %12 = vector.load %arg9[%c0_16, %c0_17, %c0_18] : memref<18x33x4xbf16, #tpu.memory_space<vmem>>, vector<1x33x4xbf16>
    tpu.vector_store %arg9[%c0_16, %c0_17, %c0_18], %11 {strides = array<i32>} : memref<18x33x4xbf16, #tpu.memory_space<vmem>>, vector<1x33x4xbf16>,
    %c17_19 = arith.constant 17 : index
    %c0_20 = arith.constant 0 : index
    %c0_21 = arith.constant 0 : index
    %13 = vector.load %arg9[%c17_19, %c0_20, %c0_21] : memref<18x33x4xbf16, #tpu.memory_space<vmem>>, vector<1x33x4xbf16>
    tpu.vector_store %arg9[%c17_19, %c0_20, %c0_21], %11 {strides = array<i32>} : memref<18x33x4xbf16, #tpu.memory_space<vmem>>, vector<1x33x4xbf16>,
    %cst_22 = arith.constant 0.000000e+00 : bf16
    %14 = vector.broadcast %cst_22 : bf16 to vector<16x1x4xbf16>
    %c1_23 = arith.constant 1 : index
    %c15_24 = arith.constant 15 : index
    %c0_25 = arith.constant 0 : index
    %15 = vector.load %arg9[%c1_23, %c15_24, %c0_25] : memref<18x33x4xbf16, #tpu.memory_space<vmem>>, vector<16x1x4xbf16>
    tpu.vector_store %arg9[%c1_23, %c15_24, %c0_25], %14 {strides = array<i32>} : memref<18x33x4xbf16, #tpu.memory_space<vmem>>, vector<16x1x4xbf16>,
    %c1_26 = arith.constant 1 : index
    %c32_27 = arith.constant 32 : index
    %c0_28 = arith.constant 0 : index
    %16 = vector.load %arg9[%c1_26, %c32_27, %c0_28] : memref<18x33x4xbf16, #tpu.memory_space<vmem>>, vector<16x1x4xbf16>
    tpu.vector_store %arg9[%c1_26, %c32_27, %c0_28], %14 {strides = array<i32>} : memref<18x33x4xbf16, #tpu.memory_space<vmem>>, vector<16x1x4xbf16>,
    %c0_i32 = arith.constant 0 : i32
    %c2_i32 = arith.constant 2 : i32
    %17 = arith.addi %c0_i32, %c2_i32 : i32
    %c1_i32 = arith.constant 1 : i32
    scf.for %arg10 = %c0_i32 to %17 step %c1_i32  : i32 {
      %c1_i32_34 = arith.constant 1 : i32
      %19 = arith.muli %arg10, %c1_i32_34 : i32
      %c0_i32_35 = arith.constant 0 : i32
      %20 = arith.addi %c0_i32_35, %19 : i32
      %c8_i32 = arith.constant 8 : i32
      %21 = arith.muli %20, %c8_i32 : i32
      %22 = arith.index_cast %21 : i32 to index
      %c15_36 = arith.constant 15 : index
      %c0_37 = arith.constant 0 : index
      %23 = vector.load %arg8[%22, %c15_36, %c0_37] : memref<18x33x4xbf16, #tpu.memory_space<vmem>>, vector<10x16x4xbf16>
      %24 = vector.extract_strided_slice %23 {offsets = [0, 0, 0], sizes = [8, 16, 4], strides = [1, 1, 1]} : vector<10x16x4xbf16> to vector<8x16x4xbf16>
      %c0_38 = arith.constant 0 : index
      %c0_39 = arith.constant 0 : index
      %c0_40 = arith.constant 0 : index
      %25 = vector.load %arg2[%c0_38, %c0_39, %c0_40] : memref<9x4x128xbf16, #tpu.memory_space<vmem>>, vector<1x4x128xbf16>
      %26 = vector.shape_cast %25 : vector<1x4x128xbf16> to vector<4x128xbf16>
      "tpu.trace_start"() <{level = 10 : i32, message = "hwc,co->hwo"}> : () -> ()
      %cst_41 = arith.constant dense<0.000000e+00> : vector<8x16x128xf32>
      %27 = tpu.matmul %24, %26, %cst_41 {dimension_numbers = #tpu.dot_dimension_numbers<[2], [0], [0, 1], [1], [0, 0, 0, 1, 1, 1], [], []>} : vector<8x16x4xbf16>, vector<4x128xbf16>, vector<8x16x128xf32> -> vector<8x16x128xf32>
      "tpu.trace_stop"() : () -> ()
      %28 = vector.extract_strided_slice %23 {offsets = [1, 0, 0], sizes = [8, 16, 4], strides = [1, 1, 1]} : vector<10x16x4xbf16> to vector<8x16x4xbf16>
      %c3 = arith.constant 3 : index
      %c0_42 = arith.constant 0 : index
      %c0_43 = arith.constant 0 : index
      %29 = vector.load %arg2[%c3, %c0_42, %c0_43] : memref<9x4x128xbf16, #tpu.memory_space<vmem>>, vector<1x4x128xbf16>
      %30 = vector.shape_cast %29 : vector<1x4x128xbf16> to vector<4x128xbf16>
      "tpu.trace_start"() <{level = 10 : i32, message = "hwc,co->hwo"}> : () -> ()
      %cst_44 = arith.constant dense<0.000000e+00> : vector<8x16x128xf32>
      %31 = tpu.matmul %28, %30, %cst_44 {dimension_numbers = #tpu.dot_dimension_numbers<[2], [0], [0, 1], [1], [0, 0, 0, 1, 1, 1], [], []>} : vector<8x16x4xbf16>, vector<4x128xbf16>, vector<8x16x128xf32> -> vector<8x16x128xf32>
      "tpu.trace_stop"() : () -> ()
      %32 = arith.addf %27, %31 : vector<8x16x128xf32>
      %33 = vector.extract_strided_slice %23 {offsets = [2, 0, 0], sizes = [8, 16, 4], strides = [1, 1, 1]} : vector<10x16x4xbf16> to vector<8x16x4xbf16>
      %c6 = arith.constant 6 : index
      %c0_45 = arith.constant 0 : index
      %c0_46 = arith.constant 0 : index
      %34 = vector.load %arg2[%c6, %c0_45, %c0_46] : memref<9x4x128xbf16, #tpu.memory_space<vmem>>, vector<1x4x128xbf16>
      %35 = vector.shape_cast %34 : vector<1x4x128xbf16> to vector<4x128xbf16>
      "tpu.trace_start"() <{level = 10 : i32, message = "hwc,co->hwo"}> : () -> ()
      %cst_47 = arith.constant dense<0.000000e+00> : vector<8x16x128xf32>
      %36 = tpu.matmul %33, %35, %cst_47 {dimension_numbers = #tpu.dot_dimension_numbers<[2], [0], [0, 1], [1], [0, 0, 0, 1, 1, 1], [], []>} : vector<8x16x4xbf16>, vector<4x128xbf16>, vector<8x16x128xf32> -> vector<8x16x128xf32>
      "tpu.trace_stop"() : () -> ()
      %37 = arith.addf %32, %36 : vector<8x16x128xf32>
      %38 = arith.index_cast %21 : i32 to index
      %c16_48 = arith.constant 16 : index
      %c0_49 = arith.constant 0 : index
      %39 = vector.load %arg8[%38, %c16_48, %c0_49] : memref<18x33x4xbf16, #tpu.memory_space<vmem>>, vector<10x16x4xbf16>
      %40 = vector.extract_strided_slice %39 {offsets = [0, 0, 0], sizes = [8, 16, 4], strides = [1, 1, 1]} : vector<10x16x4xbf16> to vector<8x16x4xbf16>
      %c1_50 = arith.constant 1 : index
      %c0_51 = arith.constant 0 : index
      %c0_52 = arith.constant 0 : index
      %41 = vector.load %arg2[%c1_50, %c0_51, %c0_52] : memref<9x4x128xbf16, #tpu.memory_space<vmem>>, vector<1x4x128xbf16>
      %42 = vector.shape_cast %41 : vector<1x4x128xbf16> to vector<4x128xbf16>
      "tpu.trace_start"() <{level = 10 : i32, message = "hwc,co->hwo"}> : () -> ()
      %cst_53 = arith.constant dense<0.000000e+00> : vector<8x16x128xf32>
      %43 = tpu.matmul %40, %42, %cst_53 {dimension_numbers = #tpu.dot_dimension_numbers<[2], [0], [0, 1], [1], [0, 0, 0, 1, 1, 1], [], []>} : vector<8x16x4xbf16>, vector<4x128xbf16>, vector<8x16x128xf32> -> vector<8x16x128xf32>
      "tpu.trace_stop"() : () -> ()
      %44 = arith.addf %37, %43 : vector<8x16x128xf32>
      %45 = vector.extract_strided_slice %39 {offsets = [1, 0, 0], sizes = [8, 16, 4], strides = [1, 1, 1]} : vector<10x16x4xbf16> to vector<8x16x4xbf16>
      %c4 = arith.constant 4 : index
      %c0_54 = arith.constant 0 : index
      %c0_55 = arith.constant 0 : index
      %46 = vector.load %arg2[%c4, %c0_54, %c0_55] : memref<9x4x128xbf16, #tpu.memory_space<vmem>>, vector<1x4x128xbf16>
      %47 = vector.shape_cast %46 : vector<1x4x128xbf16> to vector<4x128xbf16>
      "tpu.trace_start"() <{level = 10 : i32, message = "hwc,co->hwo"}> : () -> ()
      %cst_56 = arith.constant dense<0.000000e+00> : vector<8x16x128xf32>
      %48 = tpu.matmul %45, %47, %cst_56 {dimension_numbers = #tpu.dot_dimension_numbers<[2], [0], [0, 1], [1], [0, 0, 0, 1, 1, 1], [], []>} : vector<8x16x4xbf16>, vector<4x128xbf16>, vector<8x16x128xf32> -> vector<8x16x128xf32>
      "tpu.trace_stop"() : () -> ()
      %49 = arith.addf %44, %48 : vector<8x16x128xf32>
      %50 = vector.extract_strided_slice %39 {offsets = [2, 0, 0], sizes = [8, 16, 4], strides = [1, 1, 1]} : vector<10x16x4xbf16> to vector<8x16x4xbf16>
      %c7 = arith.constant 7 : index
      %c0_57 = arith.constant 0 : index
      %c0_58 = arith.constant 0 : index
      %51 = vector.load %arg2[%c7, %c0_57, %c0_58] : memref<9x4x128xbf16, #tpu.memory_space<vmem>>, vector<1x4x128xbf16>
      %52 = vector.shape_cast %51 : vector<1x4x128xbf16> to vector<4x128xbf16>
      "tpu.trace_start"() <{level = 10 : i32, message = "hwc,co->hwo"}> : () -> ()
      %cst_59 = arith.constant dense<0.000000e+00> : vector<8x16x128xf32>
      %53 = tpu.matmul %50, %52, %cst_59 {dimension_numbers = #tpu.dot_dimension_numbers<[2], [0], [0, 1], [1], [0, 0, 0, 1, 1, 1], [], []>} : vector<8x16x4xbf16>, vector<4x128xbf16>, vector<8x16x128xf32> -> vector<8x16x128xf32>
      "tpu.trace_stop"() : () -> ()
      %54 = arith.addf %49, %53 : vector<8x16x128xf32>
      %55 = arith.index_cast %21 : i32 to index
      %c17_60 = arith.constant 17 : index
      %c0_61 = arith.constant 0 : index
      %56 = vector.load %arg8[%55, %c17_60, %c0_61] : memref<18x33x4xbf16, #tpu.memory_space<vmem>>, vector<10x16x4xbf16>
      %57 = vector.extract_strided_slice %56 {offsets = [0, 0, 0], sizes = [8, 16, 4], strides = [1, 1, 1]} : vector<10x16x4xbf16> to vector<8x16x4xbf16>
      %c2 = arith.constant 2 : index
      %c0_62 = arith.constant 0 : index
      %c0_63 = arith.constant 0 : index
      %58 = vector.load %arg2[%c2, %c0_62, %c0_63] : memref<9x4x128xbf16, #tpu.memory_space<vmem>>, vector<1x4x128xbf16>
      %59 = vector.shape_cast %58 : vector<1x4x128xbf16> to vector<4x128xbf16>
      "tpu.trace_start"() <{level = 10 : i32, message = "hwc,co->hwo"}> : () -> ()
      %cst_64 = arith.constant dense<0.000000e+00> : vector<8x16x128xf32>
      %60 = tpu.matmul %57, %59, %cst_64 {dimension_numbers = #tpu.dot_dimension_numbers<[2], [0], [0, 1], [1], [0, 0, 0, 1, 1, 1], [], []>} : vector<8x16x4xbf16>, vector<4x128xbf16>, vector<8x16x128xf32> -> vector<8x16x128xf32>
      "tpu.trace_stop"() : () -> ()
      %61 = arith.addf %54, %60 : vector<8x16x128xf32>
      %62 = vector.extract_strided_slice %56 {offsets = [1, 0, 0], sizes = [8, 16, 4], strides = [1, 1, 1]} : vector<10x16x4xbf16> to vector<8x16x4xbf16>
      %c5 = arith.constant 5 : index
      %c0_65 = arith.constant 0 : index
      %c0_66 = arith.constant 0 : index
      %63 = vector.load %arg2[%c5, %c0_65, %c0_66] : memref<9x4x128xbf16, #tpu.memory_space<vmem>>, vector<1x4x128xbf16>
      %64 = vector.shape_cast %63 : vector<1x4x128xbf16> to vector<4x128xbf16>
      "tpu.trace_start"() <{level = 10 : i32, message = "hwc,co->hwo"}> : () -> ()
      %cst_67 = arith.constant dense<0.000000e+00> : vector<8x16x128xf32>
      %65 = tpu.matmul %62, %64, %cst_67 {dimension_numbers = #tpu.dot_dimension_numbers<[2], [0], [0, 1], [1], [0, 0, 0, 1, 1, 1], [], []>} : vector<8x16x4xbf16>, vector<4x128xbf16>, vector<8x16x128xf32> -> vector<8x16x128xf32>
      "tpu.trace_stop"() : () -> ()
      %66 = arith.addf %61, %65 : vector<8x16x128xf32>
      %67 = vector.extract_strided_slice %56 {offsets = [2, 0, 0], sizes = [8, 16, 4], strides = [1, 1, 1]} : vector<10x16x4xbf16> to vector<8x16x4xbf16>
      %c8 = arith.constant 8 : index
      %c0_68 = arith.constant 0 : index
      %c0_69 = arith.constant 0 : index
      %68 = vector.load %arg2[%c8, %c0_68, %c0_69] : memref<9x4x128xbf16, #tpu.memory_space<vmem>>, vector<1x4x128xbf16>
      %69 = vector.shape_cast %68 : vector<1x4x128xbf16> to vector<4x128xbf16>
      "tpu.trace_start"() <{level = 10 : i32, message = "hwc,co->hwo"}> : () -> ()
      %cst_70 = arith.constant dense<0.000000e+00> : vector<8x16x128xf32>
      %70 = tpu.matmul %67, %69, %cst_70 {dimension_numbers = #tpu.dot_dimension_numbers<[2], [0], [0, 1], [1], [0, 0, 0, 1, 1, 1], [], []>} : vector<8x16x4xbf16>, vector<4x128xbf16>, vector<8x16x128xf32> -> vector<8x16x128xf32>
      "tpu.trace_stop"() : () -> ()
      %71 = arith.addf %66, %70 : vector<8x16x128xf32>
      %c0_71 = arith.constant 0 : index
      %c0_72 = arith.constant 0 : index
      %72 = vector.load %arg3[%c0_71, %c0_72] : memref<1x128xf32, #tpu.memory_space<vmem>>, vector<1x128xf32>
      %73 = vector.shape_cast %72 : vector<1x128xf32> to vector<128xf32>
      %74 = vector.shape_cast %73 : vector<128xf32> to vector<1x1x128xf32>
      %75 = vector.broadcast %74 : vector<1x1x128xf32> to vector<8x16x128xf32>
      %76 = arith.addf %71, %75 : vector<8x16x128xf32>
      %cst_73 = arith.constant 0.000000e+00 : f32
      %77 = vector.broadcast %cst_73 : f32 to vector<8x16x128xf32>
      %78 = arith.cmpf oge, %76, %77 : vector<8x16x128xf32>
      %79 = vector.broadcast %0 : f32 to vector<8x16x128xf32>
      %80 = arith.mulf %79, %76 : vector<8x16x128xf32>
      %81 = arith.select %78, %76, %80 : vector<8x16x128xi1>, vector<8x16x128xf32>
      %82 = vector.extract_strided_slice %81 {offsets = [0, 0, 0], sizes = [8, 16, 4], strides = [1, 1, 1]} : vector<8x16x128xf32> to vector<8x16x4xf32>
      %83 = arith.truncf %82 : vector<8x16x4xf32> to vector<8x16x4xbf16>
      %c1_i32_74 = arith.constant 1 : i32
      %84 = arith.addi %21, %c1_i32_74 : i32
      %85 = arith.index_cast %84 : i32 to index
      %c16_75 = arith.constant 16 : index
      %c0_76 = arith.constant 0 : index
      %86 = vector.load %arg9[%85, %c16_75, %c0_76] : memref<18x33x4xbf16, #tpu.memory_space<vmem>>, vector<8x16x4xbf16>
      tpu.vector_store %arg9[%85, %c16_75, %c0_76], %83 {strides = array<i32>} : memref<18x33x4xbf16, #tpu.memory_space<vmem>>, vector<8x16x4xbf16>,
    }
    %c2_i32_29 = arith.constant 2 : i32
    %c0_i32_30 = arith.constant 0 : i32
    %c2_i32_31 = arith.constant 2 : i32
    %18 = arith.addi %c0_i32_30, %c2_i32_31 : i32
    %c1_i32_32 = arith.constant 1 : i32
    scf.for %arg10 = %c0_i32_30 to %18 step %c1_i32_32  : i32 {
      %c1_i32_34 = arith.constant 1 : i32
      %19 = arith.muli %arg10, %c1_i32_34 : i32
      %c0_i32_35 = arith.constant 0 : i32
      %20 = arith.addi %c0_i32_35, %19 : i32
      %c8_i32 = arith.constant 8 : i32
      %21 = arith.muli %20, %c8_i32 : i32
      %22 = arith.index_cast %21 : i32 to index
      %c15_36 = arith.constant 15 : index
      %c0_37 = arith.constant 0 : index
      %23 = vector.load %arg9[%22, %c15_36, %c0_37] : memref<18x33x4xbf16, #tpu.memory_space<vmem>>, vector<10x16x4xbf16>
      %24 = vector.extract_strided_slice %23 {offsets = [0, 0, 0], sizes = [8, 16, 4], strides = [1, 1, 1]} : vector<10x16x4xbf16> to vector<8x16x4xbf16>
      %c0_38 = arith.constant 0 : index
      %c0_39 = arith.constant 0 : index
      %c0_40 = arith.constant 0 : index
      %25 = vector.load %arg4[%c0_38, %c0_39, %c0_40] : memref<9x4x128xbf16, #tpu.memory_space<vmem>>, vector<1x4x128xbf16>
      %26 = vector.shape_cast %25 : vector<1x4x128xbf16> to vector<4x128xbf16>
      "tpu.trace_start"() <{level = 10 : i32, message = "hwc,co->hwo"}> : () -> ()
      %cst_41 = arith.constant dense<0.000000e+00> : vector<8x16x128xf32>
      %27 = tpu.matmul %24, %26, %cst_41 {dimension_numbers = #tpu.dot_dimension_numbers<[2], [0], [0, 1], [1], [0, 0, 0, 1, 1, 1], [], []>} : vector<8x16x4xbf16>, vector<4x128xbf16>, vector<8x16x128xf32> -> vector<8x16x128xf32>
      "tpu.trace_stop"() : () -> ()
      %28 = vector.extract_strided_slice %23 {offsets = [1, 0, 0], sizes = [8, 16, 4], strides = [1, 1, 1]} : vector<10x16x4xbf16> to vector<8x16x4xbf16>
      %c3 = arith.constant 3 : index
      %c0_42 = arith.constant 0 : index
      %c0_43 = arith.constant 0 : index
      %29 = vector.load %arg4[%c3, %c0_42, %c0_43] : memref<9x4x128xbf16, #tpu.memory_space<vmem>>, vector<1x4x128xbf16>
      %30 = vector.shape_cast %29 : vector<1x4x128xbf16> to vector<4x128xbf16>
      "tpu.trace_start"() <{level = 10 : i32, message = "hwc,co->hwo"}> : () -> ()
      %cst_44 = arith.constant dense<0.000000e+00> : vector<8x16x128xf32>
      %31 = tpu.matmul %28, %30, %cst_44 {dimension_numbers = #tpu.dot_dimension_numbers<[2], [0], [0, 1], [1], [0, 0, 0, 1, 1, 1], [], []>} : vector<8x16x4xbf16>, vector<4x128xbf16>, vector<8x16x128xf32> -> vector<8x16x128xf32>
      "tpu.trace_stop"() : () -> ()
      %32 = arith.addf %27, %31 : vector<8x16x128xf32>
      %33 = vector.extract_strided_slice %23 {offsets = [2, 0, 0], sizes = [8, 16, 4], strides = [1, 1, 1]} : vector<10x16x4xbf16> to vector<8x16x4xbf16>
      %c6 = arith.constant 6 : index
      %c0_45 = arith.constant 0 : index
      %c0_46 = arith.constant 0 : index
      %34 = vector.load %arg4[%c6, %c0_45, %c0_46] : memref<9x4x128xbf16, #tpu.memory_space<vmem>>, vector<1x4x128xbf16>
      %35 = vector.shape_cast %34 : vector<1x4x128xbf16> to vector<4x128xbf16>
      "tpu.trace_start"() <{level = 10 : i32, message = "hwc,co->hwo"}> : () -> ()
      %cst_47 = arith.constant dense<0.000000e+00> : vector<8x16x128xf32>
      %36 = tpu.matmul %33, %35, %cst_47 {dimension_numbers = #tpu.dot_dimension_numbers<[2], [0], [0, 1], [1], [0, 0, 0, 1, 1, 1], [], []>} : vector<8x16x4xbf16>, vector<4x128xbf16>, vector<8x16x128xf32> -> vector<8x16x128xf32>
      "tpu.trace_stop"() : () -> ()
      %37 = arith.addf %32, %36 : vector<8x16x128xf32>
      %38 = arith.index_cast %21 : i32 to index
      %c16_48 = arith.constant 16 : index
      %c0_49 = arith.constant 0 : index
      %39 = vector.load %arg9[%38, %c16_48, %c0_49] : memref<18x33x4xbf16, #tpu.memory_space<vmem>>, vector<10x16x4xbf16>
      %40 = vector.extract_strided_slice %39 {offsets = [0, 0, 0], sizes = [8, 16, 4], strides = [1, 1, 1]} : vector<10x16x4xbf16> to vector<8x16x4xbf16>
      %c1_50 = arith.constant 1 : index
      %c0_51 = arith.constant 0 : index
      %c0_52 = arith.constant 0 : index
      %41 = vector.load %arg4[%c1_50, %c0_51, %c0_52] : memref<9x4x128xbf16, #tpu.memory_space<vmem>>, vector<1x4x128xbf16>
      %42 = vector.shape_cast %41 : vector<1x4x128xbf16> to vector<4x128xbf16>
      "tpu.trace_start"() <{level = 10 : i32, message = "hwc,co->hwo"}> : () -> ()
      %cst_53 = arith.constant dense<0.000000e+00> : vector<8x16x128xf32>
      %43 = tpu.matmul %40, %42, %cst_53 {dimension_numbers = #tpu.dot_dimension_numbers<[2], [0], [0, 1], [1], [0, 0, 0, 1, 1, 1], [], []>} : vector<8x16x4xbf16>, vector<4x128xbf16>, vector<8x16x128xf32> -> vector<8x16x128xf32>
      "tpu.trace_stop"() : () -> ()
      %44 = arith.addf %37, %43 : vector<8x16x128xf32>
      %45 = vector.extract_strided_slice %39 {offsets = [1, 0, 0], sizes = [8, 16, 4], strides = [1, 1, 1]} : vector<10x16x4xbf16> to vector<8x16x4xbf16>
      %c4 = arith.constant 4 : index
      %c0_54 = arith.constant 0 : index
      %c0_55 = arith.constant 0 : index
      %46 = vector.load %arg4[%c4, %c0_54, %c0_55] : memref<9x4x128xbf16, #tpu.memory_space<vmem>>, vector<1x4x128xbf16>
      %47 = vector.shape_cast %46 : vector<1x4x128xbf16> to vector<4x128xbf16>
      "tpu.trace_start"() <{level = 10 : i32, message = "hwc,co->hwo"}> : () -> ()
      %cst_56 = arith.constant dense<0.000000e+00> : vector<8x16x128xf32>
      %48 = tpu.matmul %45, %47, %cst_56 {dimension_numbers = #tpu.dot_dimension_numbers<[2], [0], [0, 1], [1], [0, 0, 0, 1, 1, 1], [], []>} : vector<8x16x4xbf16>, vector<4x128xbf16>, vector<8x16x128xf32> -> vector<8x16x128xf32>
      "tpu.trace_stop"() : () -> ()
      %49 = arith.addf %44, %48 : vector<8x16x128xf32>
      %50 = vector.extract_strided_slice %39 {offsets = [2, 0, 0], sizes = [8, 16, 4], strides = [1, 1, 1]} : vector<10x16x4xbf16> to vector<8x16x4xbf16>
      %c7 = arith.constant 7 : index
      %c0_57 = arith.constant 0 : index
      %c0_58 = arith.constant 0 : index
      %51 = vector.load %arg4[%c7, %c0_57, %c0_58] : memref<9x4x128xbf16, #tpu.memory_space<vmem>>, vector<1x4x128xbf16>
      %52 = vector.shape_cast %51 : vector<1x4x128xbf16> to vector<4x128xbf16>
      "tpu.trace_start"() <{level = 10 : i32, message = "hwc,co->hwo"}> : () -> ()
      %cst_59 = arith.constant dense<0.000000e+00> : vector<8x16x128xf32>
      %53 = tpu.matmul %50, %52, %cst_59 {dimension_numbers = #tpu.dot_dimension_numbers<[2], [0], [0, 1], [1], [0, 0, 0, 1, 1, 1], [], []>} : vector<8x16x4xbf16>, vector<4x128xbf16>, vector<8x16x128xf32> -> vector<8x16x128xf32>
      "tpu.trace_stop"() : () -> ()
      %54 = arith.addf %49, %53 : vector<8x16x128xf32>
      %55 = arith.index_cast %21 : i32 to index
      %c17_60 = arith.constant 17 : index
      %c0_61 = arith.constant 0 : index
      %56 = vector.load %arg9[%55, %c17_60, %c0_61] : memref<18x33x4xbf16, #tpu.memory_space<vmem>>, vector<10x16x4xbf16>
      %57 = vector.extract_strided_slice %56 {offsets = [0, 0, 0], sizes = [8, 16, 4], strides = [1, 1, 1]} : vector<10x16x4xbf16> to vector<8x16x4xbf16>
      %c2 = arith.constant 2 : index
      %c0_62 = arith.constant 0 : index
      %c0_63 = arith.constant 0 : index
      %58 = vector.load %arg4[%c2, %c0_62, %c0_63] : memref<9x4x128xbf16, #tpu.memory_space<vmem>>, vector<1x4x128xbf16>
      %59 = vector.shape_cast %58 : vector<1x4x128xbf16> to vector<4x128xbf16>
      "tpu.trace_start"() <{level = 10 : i32, message = "hwc,co->hwo"}> : () -> ()
      %cst_64 = arith.constant dense<0.000000e+00> : vector<8x16x128xf32>
      %60 = tpu.matmul %57, %59, %cst_64 {dimension_numbers = #tpu.dot_dimension_numbers<[2], [0], [0, 1], [1], [0, 0, 0, 1, 1, 1], [], []>} : vector<8x16x4xbf16>, vector<4x128xbf16>, vector<8x16x128xf32> -> vector<8x16x128xf32>
      "tpu.trace_stop"() : () -> ()
      %61 = arith.addf %54, %60 : vector<8x16x128xf32>
      %62 = vector.extract_strided_slice %56 {offsets = [1, 0, 0], sizes = [8, 16, 4], strides = [1, 1, 1]} : vector<10x16x4xbf16> to vector<8x16x4xbf16>
      %c5 = arith.constant 5 : index
      %c0_65 = arith.constant 0 : index
      %c0_66 = arith.constant 0 : index
      %63 = vector.load %arg4[%c5, %c0_65, %c0_66] : memref<9x4x128xbf16, #tpu.memory_space<vmem>>, vector<1x4x128xbf16>
      %64 = vector.shape_cast %63 : vector<1x4x128xbf16> to vector<4x128xbf16>
      "tpu.trace_start"() <{level = 10 : i32, message = "hwc,co->hwo"}> : () -> ()
      %cst_67 = arith.constant dense<0.000000e+00> : vector<8x16x128xf32>
      %65 = tpu.matmul %62, %64, %cst_67 {dimension_numbers = #tpu.dot_dimension_numbers<[2], [0], [0, 1], [1], [0, 0, 0, 1, 1, 1], [], []>} : vector<8x16x4xbf16>, vector<4x128xbf16>, vector<8x16x128xf32> -> vector<8x16x128xf32>
      "tpu.trace_stop"() : () -> ()
      %66 = arith.addf %61, %65 : vector<8x16x128xf32>
      %67 = vector.extract_strided_slice %56 {offsets = [2, 0, 0], sizes = [8, 16, 4], strides = [1, 1, 1]} : vector<10x16x4xbf16> to vector<8x16x4xbf16>
      %c8 = arith.constant 8 : index
      %c0_68 = arith.constant 0 : index
      %c0_69 = arith.constant 0 : index
      %68 = vector.load %arg4[%c8, %c0_68, %c0_69] : memref<9x4x128xbf16, #tpu.memory_space<vmem>>, vector<1x4x128xbf16>
      %69 = vector.shape_cast %68 : vector<1x4x128xbf16> to vector<4x128xbf16>
      "tpu.trace_start"() <{level = 10 : i32, message = "hwc,co->hwo"}> : () -> ()
      %cst_70 = arith.constant dense<0.000000e+00> : vector<8x16x128xf32>
      %70 = tpu.matmul %67, %69, %cst_70 {dimension_numbers = #tpu.dot_dimension_numbers<[2], [0], [0, 1], [1], [0, 0, 0, 1, 1, 1], [], []>} : vector<8x16x4xbf16>, vector<4x128xbf16>, vector<8x16x128xf32> -> vector<8x16x128xf32>
      "tpu.trace_stop"() : () -> ()
      %71 = arith.addf %66, %70 : vector<8x16x128xf32>
      %c0_71 = arith.constant 0 : index
      %c0_72 = arith.constant 0 : index
      %72 = vector.load %arg5[%c0_71, %c0_72] : memref<1x128xf32, #tpu.memory_space<vmem>>, vector<1x128xf32>
      %73 = vector.shape_cast %72 : vector<1x128xf32> to vector<128xf32>
      %74 = vector.shape_cast %73 : vector<128xf32> to vector<1x1x128xf32>
      %75 = vector.broadcast %74 : vector<1x1x128xf32> to vector<8x16x128xf32>
      %76 = arith.addf %71, %75 : vector<8x16x128xf32>
      %c0_73 = arith.constant 0 : index
      %77 = arith.index_cast %21 : i32 to index
      %c0_74 = arith.constant 0 : index
      %c0_75 = arith.constant 0 : index
      %78 = vector.load %arg1[%c0_73, %77, %c0_74, %c0_75] : memref<1x16x16x4xf32, #tpu.memory_space<vmem>>, vector<1x8x16x4xf32>
      %79 = vector.shape_cast %78 : vector<1x8x16x4xf32> to vector<8x16x4xf32>
      %80 = vector.extract_strided_slice %76 {offsets = [0, 0, 0], sizes = [8, 16, 4], strides = [1, 1, 1]} : vector<8x16x128xf32> to vector<8x16x4xf32>
      %81 = arith.addf %79, %80 : vector<8x16x4xf32>
      %c0_76 = arith.constant 0 : index
      %82 = arith.index_cast %21 : i32 to index
      %c0_77 = arith.constant 0 : index
      %c0_78 = arith.constant 0 : index
      %83 = vector.load %arg7[%c0_76, %82, %c0_77, %c0_78] : memref<1x16x16x4xf32, #tpu.memory_space<vmem>>, vector<1x8x16x4xf32>
      %84 = vector.shape_cast %83 : vector<1x8x16x4xf32> to vector<8x16x4xf32>
      %85 = vector.shape_cast %81 : vector<8x16x4xf32> to vector<1x8x16x4xf32>
      tpu.vector_store %arg7[%c0_76, %82, %c0_77, %c0_78], %85 {strides = array<i32>} : memref<1x16x16x4xf32, #tpu.memory_space<vmem>>, vector<1x8x16x4xf32>,
    }
    %c2_i32_33 = arith.constant 2 : i32
    return
  }
  func.func @transform_0(%arg0: i32) -> (i32, i32, i32, i32) {
    %c0_i32 = arith.constant 0 : i32
    %c0_i32_0 = arith.constant 0 : i32
    %c0_i32_1 = arith.constant 0 : i32
    %c0_i32_2 = arith.constant 0 : i32
    return %arg0, %c0_i32, %c0_i32_0, %c0_i32_1 : i32, i32, i32, i32
  }
  func.func @transform_1(%arg0: i32) -> (i32, i32, i32) {
    %c0_i32 = arith.constant 0 : i32
    %c0_i32_0 = arith.constant 0 : i32
    %c0_i32_1 = arith.constant 0 : i32
    %c0_i32_2 = arith.constant 0 : i32
    return %c0_i32, %c0_i32_0, %c0_i32_1 : i32, i32, i32
  }
  func.func @transform_2(%arg0: i32) -> (i32, i32) {
    %c0_i32 = arith.constant 0 : i32
    %c0_i32_0 = arith.constant 0 : i32
    %c0_i32_1 = arith.constant 0 : i32
    return %c0_i32, %c0_i32_0 : i32, i32
  }
  func.func @transform_3(%arg0: i32) -> (i32, i32, i32) {
    %c0_i32 = arith.constant 0 : i32
    %c0_i32_0 = arith.constant 0 : i32
    %c0_i32_1 = arith.constant 0 : i32
    %c0_i32_2 = arith.constant 0 : i32
    return %c0_i32, %c0_i32_0, %c0_i32_1 : i32, i32, i32
  }
  func.func @transform_4(%arg0: i32) -> (i32, i32) {
    %c0_i32 = arith.constant 0 : i32
    %c0_i32_0 = arith.constant 0 : i32
    %c0_i32_1 = arith.constant 0 : i32
    return %c0_i32, %c0_i32_0 : i32, i32
  }
  func.func @transform_5(%arg0: i32) -> i32 {
    %c0_i32 = arith.constant 0 : i32
    %c0_i32_0 = arith.constant 0 : i32
    return %c0_i32 : i32
  }
  func.func @transform_6(%arg0: i32) -> (i32, i32, i32, i32) {
    %c0_i32 = arith.constant 0 : i32
    %c0_i32_0 = arith.constant 0 : i32
    %c0_i32_1 = arith.constant 0 : i32
    %c0_i32_2 = arith.constant 0 : i32
    return %arg0, %c0_i32, %c0_i32_0, %c0_i32_1 : i32, i32, i32, i32
  }
}

</mosaic_0001>

<llo_original>
// kernel: tpu_custom_call.1
$region0: #{tpu_custom_call.1}
  #allocation0 [shape = 'u32[]', space=smem, size = 0x4, offset = 0x4, fixed_abs, tag = 'smem constant byte address 0x4 - core index']
  #allocation1 [shape = 'u32[144,128]{1,0:T(1,128)}', space=vmem, size = 0x12000, scoped, tag = 'internal scratch']
  #allocation2 [shape = 'bf16[18,33,4]{2,1,0:T(8,128)(2,1)}', space=vmem, size = 0x2d000, scoped, tag = 'scratch operand']
  #allocation3 [shape = 'bf16[18,33,4]{2,1,0:T(8,128)(2,1)}', space=vmem, size = 0x2d000, scoped, tag = 'scratch operand']
  #allocation4 [shape = 'f32[1]{0:T(128)S(6)}', space=smem, size = 0x200, scoped, tag = 'scoped memory for tpu_custom_call.1']
  %s0 = inlined_call_operand.vmem [shape: f32[2,16,16,4], index: 0, kind: input, shape index: {}]
  %s1 = inlined_call_operand.vmem [shape: bf16[9,4,128], index: 1, kind: input, shape index: {}]
  %s2 = inlined_call_operand.vmem [shape: f32[1,128], index: 2, kind: input, shape index: {}]
  %s3 = inlined_call_operand.vmem [shape: bf16[9,4,128], index: 3, kind: input, shape index: {}]
  %s4 = inlined_call_operand.vmem [shape: f32[1,128], index: 4, kind: input, shape index: {}]
  %s5 = inlined_call_operand.<no memory space> [shape: f32[1], index: 5, kind: input, shape index: {}]
  %s6 = inlined_call_operand.vmem [shape: f32[2,16,16,4], index: 6, kind: output, shape index: {}]
  %s7 = sld [smem:[#allocation0]]
  $region71: #{tpu_custom_call.1} parent=0
    _
  %s9 = ssub.s32 1, %s7
  %s10 = scalar_select 0, %s9, %s7
  %11 = sst [smem:[#allocation4]] %s5
  loop: start=0, step=1, limit=4
  $region2: #{tpu_custom_call.1} parent=0 // loop_pre_header
    _
  $region3: #{tpu_custom_call.1} parent=0 // loop_header
    %s13 = sphi 0, %s17
    %p14 = scmp.ge.s32.totalorder %s13, 4
    %s23 = sphi 0, %s25
    %s26 = sphi 0, %s23
    %s27 = sphi 0, %s26
    %s43 = sphi 0, %s27
    %s47 = sphi 0, %s47
    %s49 = sphi 0, %s47
    %s50 = sphi 0, %s49
    %s64 = sphi 0, %s50
    %s68 = sphi 0, %s68
    %s70 = sphi 0, %s68
    %s71 = sphi 0, %s70
    %s85 = sphi 0, %s71
    %s89 = sphi 0, %s89
    %s91 = sphi 0, %s89
    %s92 = sphi 0, %s91
    %s106 = sphi 0, %s92
    %s110 = sphi 0, %s110
    %s112 = sphi 0, %s110
    %s113 = sphi 0, %s112
    %s127 = sphi 0, %s113
    %s131 = sphi 0, %s131
    %s133 = sphi 0, %s131
    %s134 = sphi 0, %s133
    %s148 = sphi 0, %s134
    %s154 = sphi 0, %s156
    %s157 = sphi 0, %s154
    %s158 = sphi 0, %s157
    %s174 = sphi 0, %s158
  $region4: #{tpu_custom_call.1} parent=0 // loop_header_branch
    %16 = sbr.rel (%p14) target = $region8
  $region5: #{tpu_custom_call.1} parent=0 // loop_body
    %s18 = ssub.s32 %s13, 1
    %s19 = ssub.s32 %s13, 2
    %s20 = sadd.s32 %s13, 1
    %s21 = ssub.s32 %s13, %s20
    %p22 = scmp.eq.s32.totalorder %s21, 0
    %s24 = sadd.s32 %s23, 1
    %s25 = scalar_select %p22, %s23, %s24
    %p28 = pneg %p22
    %p29 = scmp.eq.s32.totalorder %s13, 1
    %p30 = por %p28, %p29
    %p31 = scmp.ne.s32.totalorder %s23, %s26
    %p32 = scmp.eq.s32.totalorder %s13, 0
    %p33 = por %p31, %p32
    %p34 = scmp.ne.s32.totalorder %s23, %s26
    %p35 = scmp.eq.s32.totalorder %s18, 1
    %p36 = por %p34, %p35
    %p37 = scmp.ne.s32.totalorder %s26, %s27
    %p38 = scmp.eq.s32.totalorder %s18, 0
    %p39 = por %p37, %p38
    %p40 = scmp.ne.s32.totalorder %s26, %s27
    %p41 = scmp.eq.s32.totalorder %s19, 1
    %p42 = por %p40, %p41
    %p44 = scmp.ne.s32.totalorder %s27, %s43
    %p45 = scmp.eq.s32.totalorder %s19, 0
    %p46 = por %p44, %p45
    %s48 = sadd.s32 %s47, 1
    %p51 = scmp.eq.s32.totalorder %s13, 1
    %p52 = scmp.ne.s32.totalorder %s47, %s49
    %p53 = scmp.eq.s32.totalorder %s13, 0
    %p54 = por %p52, %p53
    %p55 = scmp.ne.s32.totalorder %s47, %s49
    %p56 = scmp.eq.s32.totalorder %s18, 1
    %p57 = por %p55, %p56
    %p58 = scmp.ne.s32.totalorder %s49, %s50
    %p59 = scmp.eq.s32.totalorder %s18, 0
    %p60 = por %p58, %p59
    %p61 = scmp.ne.s32.totalorder %s49, %s50
    %p62 = scmp.eq.s32.totalorder %s19, 1
    %p63 = por %p61, %p62
    %p65 = scmp.ne.s32.totalorder %s50, %s64
    %p66 = scmp.eq.s32.totalorder %s19, 0
    %p67 = por %p65, %p66
    %s69 = sadd.s32 %s68, 1
    %p72 = scmp.eq.s32.totalorder %s13, 1
    %p73 = scmp.ne.s32.totalorder %s68, %s70
    %p74 = scmp.eq.s32.totalorder %s13, 0
    %p75 = por %p73, %p74
    %p76 = scmp.ne.s32.totalorder %s68, %s70
    %p77 = scmp.eq.s32.totalorder %s18, 1
    %p78 = por %p76, %p77
    %p79 = scmp.ne.s32.totalorder %s70, %s71
    %p80 = scmp.eq.s32.totalorder %s18, 0
    %p81 = por %p79, %p80
    %p82 = scmp.ne.s32.totalorder %s70, %s71
    %p83 = scmp.eq.s32.totalorder %s19, 1
    %p84 = por %p82, %p83
    %p86 = scmp.ne.s32.totalorder %s71, %s85
    %p87 = scmp.eq.s32.totalorder %s19, 0
    %p88 = por %p86, %p87
    %s90 = sadd.s32 %s89, 1
    %p93 = scmp.eq.s32.totalorder %s13, 1
    %p94 = scmp.ne.s32.totalorder %s89, %s91
    %p95 = scmp.eq.s32.totalorder %s13, 0
    %p96 = por %p94, %p95
    %p97 = scmp.ne.s32.totalorder %s89, %s91
    %p98 = scmp.eq.s32.totalorder %s18, 1
    %p99 = por %p97, %p98
    %p100 = scmp.ne.s32.totalorder %s91, %s92
    %p101 = scmp.eq.s32.totalorder %s18, 0
    %p102 = por %p100, %p101
    %p103 = scmp.ne.s32.totalorder %s91, %s92
    %p104 = scmp.eq.s32.totalorder %s19, 1
    %p105 = por %p103, %p104
    %p107 = scmp.ne.s32.totalorder %s92, %s106
    %p108 = scmp.eq.s32.totalorder %s19, 0
    %p109 = por %p107, %p108
    %s111 = sadd.s32 %s110, 1
    %p114 = scmp.eq.s32.totalorder %s13, 1
    %p115 = scmp.ne.s32.totalorder %s110, %s112
    %p116 = scmp.eq.s32.totalorder %s13, 0
    %p117 = por %p115, %p116
    %p118 = scmp.ne.s32.totalorder %s110, %s112
    %p119 = scmp.eq.s32.totalorder %s18, 1
    %p120 = por %p118, %p119
    %p121 = scmp.ne.s32.totalorder %s112, %s113
    %p122 = scmp.eq.s32.totalorder %s18, 0
    %p123 = por %p121, %p122
    %p124 = scmp.ne.s32.totalorder %s112, %s113
    %p125 = scmp.eq.s32.totalorder %s19, 1
    %p126 = por %p124, %p125
    %p128 = scmp.ne.s32.totalorder %s113, %s127
    %p129 = scmp.eq.s32.totalorder %s19, 0
    %p130 = por %p128, %p129
    %s132 = sadd.s32 %s131, 1
    %p135 = scmp.eq.s32.totalorder %s13, 1
    %p136 = scmp.ne.s32.totalorder %s131, %s133
    %p137 = scmp.eq.s32.totalorder %s13, 0
    %p138 = por %p136, %p137
    %p139 = scmp.ne.s32.totalorder %s131, %s133
    %p140 = scmp.eq.s32.totalorder %s18, 1
    %p141 = por %p139, %p140
    %p142 = scmp.ne.s32.totalorder %s133, %s134
    %p143 = scmp.eq.s32.totalorder %s18, 0
    %p144 = por %p142, %p143
    %p145 = scmp.ne.s32.totalorder %s133, %s134
    %p146 = scmp.eq.s32.totalorder %s19, 1
    %p147 = por %p145, %p146
    %p149 = scmp.ne.s32.totalorder %s134, %s148
    %p150 = scmp.eq.s32.totalorder %s19, 0
    %p151 = por %p149, %p150
    %s152 = ssub.s32 %s13, %s20
    %p153 = scmp.eq.s32.totalorder %s152, 0
    %s155 = sadd.s32 %s154, 1
    %s156 = scalar_select %p153, %s154, %s155
    %p159 = pneg %p153
    %p160 = scmp.eq.s32.totalorder %s13, 1
    %p161 = por %p159, %p160
    %p162 = scmp.ne.s32.totalorder %s154, %s157
    %p163 = scmp.eq.s32.totalorder %s13, 0
    %p164 = por %p162, %p163
    %p165 = scmp.ne.s32.totalorder %s154, %s157
    %p166 = scmp.eq.s32.totalorder %s18, 1
    %p167 = por %p165, %p166
    %p168 = scmp.ne.s32.totalorder %s157, %s158
    %p169 = scmp.eq.s32.totalorder %s18, 0
    %p170 = por %p168, %p169
    %p171 = scmp.ne.s32.totalorder %s157, %s158
    %p172 = scmp.eq.s32.totalorder %s19, 1
    %p173 = por %p171, %p172
    %p175 = scmp.ne.s32.totalorder %s158, %s174
    %p176 = scmp.eq.s32.totalorder %s19, 0
    %p177 = por %p175, %p176
    %p178 = scmp.le.s32.totalorder 1, %s13
    %p179 = scmp.lt.s32.totalorder %s13, 3
    %p180 = pnand %p178, %p179
    %p181 = pneg %p180
    // Predicated region
    $region9: #{tpu_custom_call.1} parent=5 // pred_check
      _
    $region10: #{tpu_custom_call.1} parent=5 // pred_check_branch
      %183 = sbr.rel (%p180) target = $region12
    $region11: #{tpu_custom_call.1} parent=5 // pred_region
      %s184 = ssub.s32 %s13, 1
      // Predicated region
      $region13: #{tpu_custom_call.1} parent=11 // pred_check
        %p185 = pneg %p60
      $region14: #{tpu_custom_call.1} parent=11 // pred_check_branch
        %187 = sbr.rel (%p185) target = $region16
      $region15: #{tpu_custom_call.1} parent=11 // pred_region
        _
      $region16: #{tpu_custom_call.1} parent=11 // pred_fallthru
        _
      // Predicated region
      $region17: #{tpu_custom_call.1} parent=11 // pred_check
        %p188 = pneg %p81
      $region18: #{tpu_custom_call.1} parent=11 // pred_check_branch
        %190 = sbr.rel (%p188) target = $region20
      $region19: #{tpu_custom_call.1} parent=11 // pred_region
        _
      $region20: #{tpu_custom_call.1} parent=11 // pred_fallthru
        _
      // Predicated region
      $region21: #{tpu_custom_call.1} parent=11 // pred_check
        %p191 = pneg %p102
      $region22: #{tpu_custom_call.1} parent=11 // pred_check_branch
        %193 = sbr.rel (%p191) target = $region24
      $region23: #{tpu_custom_call.1} parent=11 // pred_region
        _
      $region24: #{tpu_custom_call.1} parent=11 // pred_fallthru
        _
      // Predicated region
      $region25: #{tpu_custom_call.1} parent=11 // pred_check
        %p194 = pneg %p123
      $region26: #{tpu_custom_call.1} parent=11 // pred_check_branch
        %196 = sbr.rel (%p194) target = $region28
      $region27: #{tpu_custom_call.1} parent=11 // pred_region
        _
      $region28: #{tpu_custom_call.1} parent=11 // pred_fallthru
        _
      // Predicated region
      $region29: #{tpu_custom_call.1} parent=11 // pred_check
        %p197 = pneg %p144
      $region30: #{tpu_custom_call.1} parent=11 // pred_check_branch
        %199 = sbr.rel (%p197) target = $region32
      $region31: #{tpu_custom_call.1} parent=11 // pred_region
        _
      $region32: #{tpu_custom_call.1} parent=11 // pred_fallthru
        _
    $region12: #{tpu_custom_call.1} parent=5 // pred_fallthru
      _
    %p200 = scmp.lt.s32.totalorder %s13, 2
    // Predicated region
    $region33: #{tpu_custom_call.1} parent=5 // pred_check
      %p201 = pneg %p200
    $region34: #{tpu_custom_call.1} parent=5 // pred_check_branch
      %203 = sbr.rel (%p201) target = $region36
    $region35: #{tpu_custom_call.1} parent=5 // pred_region
      // Predicated region
      $region37: #{tpu_custom_call.1} parent=35 // pred_check
        %p204 = pneg %p33
      $region38: #{tpu_custom_call.1} parent=35 // pred_check_branch
        %206 = sbr.rel (%p204) target = $region40
      $region39: #{tpu_custom_call.1} parent=35 // pred_region
        %p207 = scmp.lt.s32.totalorder %s13, 1
        %s208 = scalar_select %p207, %s13, 1
        %s209 = smul.addr %s208, 32
        %s210 = smul.addr %s209, 8
        %s211 = scalar_lea.vmem %s0, %s210
      $region40: #{tpu_custom_call.1} parent=35 // pred_fallthru
        _
    $region36: #{tpu_custom_call.1} parent=5 // pred_fallthru
      _
    %p212 = scmp.le.s32.totalorder 1, %s13
    %p213 = scmp.lt.s32.totalorder %s13, 3
    %p214 = pnand %p212, %p213
    %p215 = pneg %p214
    // Predicated region
    $region41: #{tpu_custom_call.1} parent=5 // pred_check
      _
    $region42: #{tpu_custom_call.1} parent=5 // pred_check_branch
      %217 = sbr.rel (%p214) target = $region44
    $region43: #{tpu_custom_call.1} parent=5 // pred_region
      %s218 = ssub.s32 %s13, 1
      %p219 = scmp.lt.s32.totalorder %s18, 1
      %s220 = scalar_select %p219, %s18, 1
      %s221 = smul.addr %s220, 32
      %s222 = smul.addr %s221, 8
      %s223 = scalar_lea.vmem %s0, %s222
      %p224 = pneg %p39
      %p225 = pneg %p36
      %p226 = pneg %p60
      %p227 = pneg %p57
      %p228 = pneg %p81
      %p229 = pneg %p78
      %p230 = pneg %p102
      %p231 = pneg %p99
      %p232 = pneg %p123
      %p233 = pneg %p120
      %p234 = pneg %p144
      %p235 = pneg %p141
      %p236 = pneg %p170
      %p237 = pneg %p167
      %p238 = scmp.lt.s32.totalorder %s18, 1
      %s239 = scalar_select %p238, %s18, 1
      %s240 = smul.addr %s239, 32
      %s241 = smul.addr %s240, 8
      %s242 = scalar_lea.vmem %s6, %s241
      %p243 = scmp.lt.s32.totalorder %s18, 1
      %s244 = scalar_select %p243, %s18, 1
      %s245 = smul.addr %s244, 32
      %s246 = smul.addr %s245, 8
      %s247 = scalar_lea.vmem %s0, %s246
      %p248 = scmp.lt.s32.totalorder %s18, 1
      %s249 = scalar_select %p248, %s18, 1
      %s250 = smul.addr %s249, 32
      %s251 = smul.addr %s250, 8
      %s252 = scalar_lea.vmem %s6, %s251
      %s254 = sld [smem:[#allocation4]]
      %vm255 = vcmask 27648
      %256 = vst.msk [vmem:[#allocation2] sm:$0xf] %vm255, 0
      %257 = vst.msk [vmem:[#allocation2 + $0x4] sm:$0xf] %vm255, 0
      %258 = vst.msk [vmem:[#allocation2 + $0x8] sm:$0xf] %vm255, 0
      %259 = vst.msk [vmem:[#allocation2 + $0xc] sm:$0xf] %vm255, 0
      %vm260 = vcmask 24576
      %vm261 = vsmask.f32 256
      %vm262 = vmand %vm260, %vm261
      %v263 = vld [vmem:[#allocation2 + $0x10] sm:$0x1]
      %v264 = vsel %vm262, 0, %v263
      %265 = vst [vmem:[#allocation2 + $0x10] sm:$0x1] %v264
      %s266 = scalar_lea.vmem [#allocation2], 340
      %267 = vst.msk [vmem:[%s266] sm:$0xf] %vm255, 0
      %268 = vst.msk [vmem:[%s266 + $0x4] sm:$0xf] %vm255, 0
      %269 = vst.msk [vmem:[%s266 + $0x8] sm:$0xf] %vm255, 0
      %270 = vst.msk [vmem:[%s266 + $0xc] sm:$0xf] %vm255, 0
      %v271 = vld [vmem:[%s266 + $0x10] sm:$0x1]
      %v272 = vsel %vm262, 0, %v271
      %273 = vst [vmem:[%s266 + $0x10] sm:$0x1] %v272
      %s274 = scalar_lea.vmem [#allocation2], 20
      %vm275 = vcmask 27651
      %vm276 = vsmask.f32 7950
      %vm277 = vmand %vm275, %vm276
      %v278 = vld [vmem:[%s274 + $0x4] sm:$0x8]
      %v279 = vsel %vm277, 0, %v278
      %280 = vst [vmem:[%s274 + $0x4] sm:$0x8] %v279
      %v281 = vld [vmem:[%s274 + $0x18] sm:$0x8]
      %v282 = vsel %vm277, 0, %v281
      %283 = vst [vmem:[%s274 + $0x18] sm:$0x8] %v282
      %v284 = vld [vmem:[%s274 + $0x2c] sm:$0x8]
      %v285 = vsel %vm277, 0, %v284
      %286 = vst [vmem:[%s274 + $0x2c] sm:$0x8] %v285
      %v287 = vld [vmem:[%s274 + $0x40] sm:$0x8]
      %v288 = vsel %vm277, 0, %v287
      %289 = vst [vmem:[%s274 + $0x40] sm:$0x8] %v288
      %v290 = vld [vmem:[%s274 + $0x54] sm:$0x8]
      %v291 = vsel %vm277, 0, %v290
      %292 = vst [vmem:[%s274 + $0x54] sm:$0x8] %v291
      %v293 = vld [vmem:[%s274 + $0x68] sm:$0x8]
      %v294 = vsel %vm277, 0, %v293
      %295 = vst [vmem:[%s274 + $0x68] sm:$0x8] %v294
      %v296 = vld [vmem:[%s274 + $0x7c] sm:$0x8]
      %v297 = vsel %vm277, 0, %v296
      %298 = vst [vmem:[%s274 + $0x7c] sm:$0x8] %v297
      %v299 = vld [vmem:[%s274 + $0x90] sm:$0x8]
      %v300 = vsel %vm277, 0, %v299
      %301 = vst [vmem:[%s274 + $0x90] sm:$0x8] %v300
      %v302 = vld [vmem:[%s274 + $0xa4] sm:$0x8]
      %v303 = vsel %vm277, 0, %v302
      %304 = vst [vmem:[%s274 + $0xa4] sm:$0x8] %v303
      %v305 = vld [vmem:[%s274 + $0xb8] sm:$0x8]
      %v306 = vsel %vm277, 0, %v305
      %307 = vst [vmem:[%s274 + $0xb8] sm:$0x8] %v306
      %v308 = vld [vmem:[%s274 + $0xcc] sm:$0x8]
      %v309 = vsel %vm277, 0, %v308
      %310 = vst [vmem:[%s274 + $0xcc] sm:$0x8] %v309
      %v311 = vld [vmem:[%s274 + $0xe0] sm:$0x8]
      %v312 = vsel %vm277, 0, %v311
      %313 = vst [vmem:[%s274 + $0xe0] sm:$0x8] %v312
      %v314 = vld [vmem:[%s274 + $0xf4] sm:$0x8]
      %v315 = vsel %vm277, 0, %v314
      %316 = vst [vmem:[%s274 + $0xf4] sm:$0x8] %v315
      %v317 = vld [vmem:[%s274 + $0x108] sm:$0x8]
      %v318 = vsel %vm277, 0, %v317
      %319 = vst [vmem:[%s274 + $0x108] sm:$0x8] %v318
      %v320 = vld [vmem:[%s274 + $0x11c] sm:$0x8]
      %v321 = vsel %vm277, 0, %v320
      %322 = vst [vmem:[%s274 + $0x11c] sm:$0x8] %v321
      %v323 = vld [vmem:[%s274 + $0x130] sm:$0x8]
      %v324 = vsel %vm277, 0, %v323
      %325 = vst [vmem:[%s274 + $0x130] sm:$0x8] %v324
      %v326 = vld [vmem:[%s274 + $0x10] sm:$0x1]
      %v327 = vsel %vm262, 0, %v326
      %328 = vst [vmem:[%s274 + $0x10] sm:$0x1] %v327
      %v329 = vld [vmem:[%s274 + $0x24] sm:$0x1]
      %v330 = vsel %vm262, 0, %v329
      %331 = vst [vmem:[%s274 + $0x24] sm:$0x1] %v330
      %v332 = vld [vmem:[%s274 + $0x38] sm:$0x1]
      %v333 = vsel %vm262, 0, %v332
      %334 = vst [vmem:[%s274 + $0x38] sm:$0x1] %v333
      %v335 = vld [vmem:[%s274 + $0x4c] sm:$0x1]
      %v336 = vsel %vm262, 0, %v335
      %337 = vst [vmem:[%s274 + $0x4c] sm:$0x1] %v336
      %v338 = vld [vmem:[%s274 + $0x60] sm:$0x1]
      %v339 = vsel %vm262, 0, %v338
      %340 = vst [vmem:[%s274 + $0x60] sm:$0x1] %v339
      %v341 = vld [vmem:[%s274 + $0x74] sm:$0x1]
      %v342 = vsel %vm262, 0, %v341
      %343 = vst [vmem:[%s274 + $0x74] sm:$0x1] %v342
      %v344 = vld [vmem:[%s274 + $0x88] sm:$0x1]
      %v345 = vsel %vm262, 0, %v344
      %346 = vst [vmem:[%s274 + $0x88] sm:$0x1] %v345
      %v347 = vld [vmem:[%s274 + $0x9c] sm:$0x1]
      %v348 = vsel %vm262, 0, %v347
      %349 = vst [vmem:[%s274 + $0x9c] sm:$0x1] %v348
      %v350 = vld [vmem:[%s274 + $0xb0] sm:$0x1]
      %v351 = vsel %vm262, 0, %v350
      %352 = vst [vmem:[%s274 + $0xb0] sm:$0x1] %v351
      %v353 = vld [vmem:[%s274 + $0xc4] sm:$0x1]
      %v354 = vsel %vm262, 0, %v353
      %355 = vst [vmem:[%s274 + $0xc4] sm:$0x1] %v354
      %v356 = vld [vmem:[%s274 + $0xd8] sm:$0x1]
      %v357 = vsel %vm262, 0, %v356
      %358 = vst [vmem:[%s274 + $0xd8] sm:$0x1] %v357
      %v359 = vld [vmem:[%s274 + $0xec] sm:$0x1]
      %v360 = vsel %vm262, 0, %v359
      %361 = vst [vmem:[%s274 + $0xec] sm:$0x1] %v360
      %v362 = vld [vmem:[%s274 + $0x100] sm:$0x1]
      %v363 = vsel %vm262, 0, %v362
      %364 = vst [vmem:[%s274 + $0x100] sm:$0x1] %v363
      %v365 = vld [vmem:[%s274 + $0x114] sm:$0x1]
      %v366 = vsel %vm262, 0, %v365
      %367 = vst [vmem:[%s274 + $0x114] sm:$0x1] %v366
      %v368 = vld [vmem:[%s274 + $0x128] sm:$0x1]
      %v369 = vsel %vm262, 0, %v368
      %370 = vst [vmem:[%s274 + $0x128] sm:$0x1] %v369
      %v371 = vld [vmem:[%s274 + $0x13c] sm:$0x1]
      %v372 = vsel %vm262, 0, %v371
      %373 = vst [vmem:[%s274 + $0x13c] sm:$0x1] %v372
      %v374 = vld [vmem:[%s247] sm:$0xff]
      %v375 = vld [vmem:[%s247 + $0x8] sm:$0xff]
      %v376 = vld [vmem:[%s247 + $0x10] sm:$0xff]
      %v377 = vld [vmem:[%s247 + $0x18] sm:$0xff]
      %v378 = vld [vmem:[%s247 + $0x20] sm:$0xff]
      %v379 = vld [vmem:[%s247 + $0x28] sm:$0xff]
      %v380 = vld [vmem:[%s247 + $0x30] sm:$0xff]
      %v381 = vld [vmem:[%s247 + $0x38] sm:$0xff]
      %v382 = vld [vmem:[%s247 + $0x40] sm:$0xff]
      %v383 = vld [vmem:[%s247 + $0x48] sm:$0xff]
      %v384 = vld [vmem:[%s247 + $0x50] sm:$0xff]
      %v385 = vld [vmem:[%s247 + $0x58] sm:$0xff]
      %v386 = vld [vmem:[%s247 + $0x60] sm:$0xff]
      %v387 = vld [vmem:[%s247 + $0x68] sm:$0xff]
      %v388 = vld [vmem:[%s247 + $0x70] sm:$0xff]
      %v389 = vld [vmem:[%s247 + $0x78] sm:$0xff]
      %v390 = vld [vmem:[%s247 + $0x80] sm:$0xff]
      %v391 = vld [vmem:[%s247 + $0x88] sm:$0xff]
      %v392 = vld [vmem:[%s247 + $0x90] sm:$0xff]
      %v393 = vld [vmem:[%s247 + $0x98] sm:$0xff]
      %v394 = vld [vmem:[%s247 + $0xa0] sm:$0xff]
      %v395 = vld [vmem:[%s247 + $0xa8] sm:$0xff]
      %v396 = vld [vmem:[%s247 + $0xb0] sm:$0xff]
      %v397 = vld [vmem:[%s247 + $0xb8] sm:$0xff]
      %v398 = vld [vmem:[%s247 + $0xc0] sm:$0xff]
      %v399 = vld [vmem:[%s247 + $0xc8] sm:$0xff]
      %v400 = vld [vmem:[%s247 + $0xd0] sm:$0xff]
      %v401 = vld [vmem:[%s247 + $0xd8] sm:$0xff]
      %v402 = vld [vmem:[%s247 + $0xe0] sm:$0xff]
      %v403 = vld [vmem:[%s247 + $0xe8] sm:$0xff]
      %v404 = vld [vmem:[%s247 + $0xf0] sm:$0xff]
      %v405 = vld [vmem:[%s247 + $0xf8] sm:$0xff]
      %v406 = vpack.c.bf16 %v375, %v374
      %v407 = vpack.c.bf16 %v377, %v376
      %v408 = vpack.c.bf16 %v379, %v378
      %v409 = vpack.c.bf16 %v381, %v380
      %v410 = vpack.c.bf16 %v383, %v382
      %v411 = vpack.c.bf16 %v385, %v384
      %v412 = vpack.c.bf16 %v387, %v386
      %v413 = vpack.c.bf16 %v389, %v388
      %v414 = vpack.c.bf16 %v391, %v390
      %v415 = vpack.c.bf16 %v393, %v392
      %v416 = vpack.c.bf16 %v395, %v394
      %v417 = vpack.c.bf16 %v397, %v396
      %v418 = vpack.c.bf16 %v399, %v398
      %v419 = vpack.c.bf16 %v401, %v400
      %v420 = vpack.c.bf16 %v403, %v402
      %v421 = vpack.c.bf16 %v405, %v404
      %v438 = vunpack.c.l.b16 %v406
      %v439 = vunpack.c.h.b16 %v406
      %v440 = vunpack.c.l.b16 %v407
      %v441 = vunpack.c.h.b16 %v407
      %v442 = vunpack.c.l.b16 %v408
      %v443 = vunpack.c.h.b16 %v408
      %v444 = vunpack.c.l.b16 %v409
      %v445 = vunpack.c.h.b16 %v409
      %v446 = vunpack.c.l.b16 %v410
      %v447 = vunpack.c.h.b16 %v410
      %v448 = vunpack.c.l.b16 %v411
      %v449 = vunpack.c.h.b16 %v411
      %v450 = vunpack.c.l.b16 %v412
      %v451 = vunpack.c.h.b16 %v412
      %v452 = vunpack.c.l.b16 %v413
      %v453 = vunpack.c.h.b16 %v413
      %v454 = vunpack.c.l.b16 %v414
      %v455 = vunpack.c.h.b16 %v414
      %v456 = vunpack.c.l.b16 %v415
      %v457 = vunpack.c.h.b16 %v415
      %v458 = vunpack.c.l.b16 %v416
      %v459 = vunpack.c.h.b16 %v416
      %v460 = vunpack.c.l.b16 %v417
      %v461 = vunpack.c.h.b16 %v417
      %v462 = vunpack.c.l.b16 %v418
      %v463 = vunpack.c.h.b16 %v418
      %v464 = vunpack.c.l.b16 %v419
      %v465 = vunpack.c.h.b16 %v419
      %v466 = vunpack.c.l.b16 %v420
      %v467 = vunpack.c.h.b16 %v420
      %v468 = vunpack.c.l.b16 %v421
      %v469 = vunpack.c.h.b16 %v421
      %v470 = vpack.c.b16 %v438, %v438
      %v471 = vpack.c.b16 %v439, %v439
      %v472 = vpack.c.b16 %v440, %v440
      %v473 = vpack.c.b16 %v441, %v441
      %v474 = vpack.c.b16 %v442, %v442
      %v475 = vpack.c.b16 %v443, %v443
      %v476 = vpack.c.b16 %v444, %v444
      %v477 = vpack.c.b16 %v445, %v445
      %v478 = vpack.c.b16 %v446, %v446
      %v479 = vpack.c.b16 %v447, %v447
      %v480 = vpack.c.b16 %v448, %v448
      %v481 = vpack.c.b16 %v449, %v449
      %v482 = vpack.c.b16 %v450, %v450
      %v483 = vpack.c.b16 %v451, %v451
      %v484 = vpack.c.b16 %v452, %v452
      %v485 = vpack.c.b16 %v453, %v453
      %v486 = vpack.c.b16 %v454, %v454
      %v487 = vpack.c.b16 %v455, %v455
      %v488 = vpack.c.b16 %v456, %v456
      %v489 = vpack.c.b16 %v457, %v457
      %v490 = vpack.c.b16 %v458, %v458
      %v491 = vpack.c.b16 %v459, %v459
      %v492 = vpack.c.b16 %v460, %v460
      %v493 = vpack.c.b16 %v461, %v461
      %v494 = vpack.c.b16 %v462, %v462
      %v495 = vpack.c.b16 %v463, %v463
      %v496 = vpack.c.b16 %v464, %v464
      %v497 = vpack.c.b16 %v465, %v465
      %v498 = vpack.c.b16 %v466, %v466
      %v499 = vpack.c.b16 %v467, %v467
      %v500 = vpack.c.b16 %v468, %v468
      %v501 = vpack.c.b16 %v469, %v469
      %534 = vst.msk [vmem:[%s274 + $0x8] sm:$0xf] %vm255, %v470
      %535 = vst.msk [vmem:[%s274 + $0xc] sm:$0xf] %vm255, %v471
      %536 = vst.msk [vmem:[%s274 + $0x1c] sm:$0xf] %vm255, %v472
      %537 = vst.msk [vmem:[%s274 + $0x20] sm:$0xf] %vm255, %v473
      %538 = vst.msk [vmem:[%s274 + $0x30] sm:$0xf] %vm255, %v474
      %539 = vst.msk [vmem:[%s274 + $0x34] sm:$0xf] %vm255, %v475
      %540 = vst.msk [vmem:[%s274 + $0x44] sm:$0xf] %vm255, %v476
      %541 = vst.msk [vmem:[%s274 + $0x48] sm:$0xf] %vm255, %v477
      %542 = vst.msk [vmem:[%s274 + $0x58] sm:$0xf] %vm255, %v478
      %543 = vst.msk [vmem:[%s274 + $0x5c] sm:$0xf] %vm255, %v479
      %544 = vst.msk [vmem:[%s274 + $0x6c] sm:$0xf] %vm255, %v480
      %545 = vst.msk [vmem:[%s274 + $0x70] sm:$0xf] %vm255, %v481
      %546 = vst.msk [vmem:[%s274 + $0x80] sm:$0xf] %vm255, %v482
      %547 = vst.msk [vmem:[%s274 + $0x84] sm:$0xf] %vm255, %v483
      %548 = vst.msk [vmem:[%s274 + $0x94] sm:$0xf] %vm255, %v484
      %549 = vst.msk [vmem:[%s274 + $0x98] sm:$0xf] %vm255, %v485
      %550 = vst.msk [vmem:[%s274 + $0xa8] sm:$0xf] %vm255, %v486
      %551 = vst.msk [vmem:[%s274 + $0xac] sm:$0xf] %vm255, %v487
      %552 = vst.msk [vmem:[%s274 + $0xbc] sm:$0xf] %vm255, %v488
      %553 = vst.msk [vmem:[%s274 + $0xc0] sm:$0xf] %vm255, %v489
      %554 = vst.msk [vmem:[%s274 + $0xd0] sm:$0xf] %vm255, %v490
      %555 = vst.msk [vmem:[%s274 + $0xd4] sm:$0xf] %vm255, %v491
      %556 = vst.msk [vmem:[%s274 + $0xe4] sm:$0xf] %vm255, %v492
      %557 = vst.msk [vmem:[%s274 + $0xe8] sm:$0xf] %vm255, %v493
      %558 = vst.msk [vmem:[%s274 + $0xf8] sm:$0xf] %vm255, %v494
      %559 = vst.msk [vmem:[%s274 + $0xfc] sm:$0xf] %vm255, %v495
      %560 = vst.msk [vmem:[%s274 + $0x10c] sm:$0xf] %vm255, %v496
      %561 = vst.msk [vmem:[%s274 + $0x110] sm:$0xf] %vm255, %v497
      %562 = vst.msk [vmem:[%s274 + $0x120] sm:$0xf] %vm255, %v498
      %563 = vst.msk [vmem:[%s274 + $0x124] sm:$0xf] %vm255, %v499
      %564 = vst.msk [vmem:[%s274 + $0x134] sm:$0xf] %vm255, %v500
      %565 = vst.msk [vmem:[%s274 + $0x138] sm:$0xf] %vm255, %v501
      %566 = vst.msk [vmem:[#allocation3] sm:$0xf] %vm255, 0
      %567 = vst.msk [vmem:[#allocation3 + $0x4] sm:$0xf] %vm255, 0
      %568 = vst.msk [vmem:[#allocation3 + $0x8] sm:$0xf] %vm255, 0
      %569 = vst.msk [vmem:[#allocation3 + $0xc] sm:$0xf] %vm255, 0
      %v570 = vld [vmem:[#allocation3 + $0x10] sm:$0x1]
      %v571 = vsel %vm262, 0, %v570
      %572 = vst [vmem:[#allocation3 + $0x10] sm:$0x1] %v571
      %s573 = scalar_lea.vmem [#allocation3], 340
      %574 = vst.msk [vmem:[%s573] sm:$0xf] %vm255, 0
      %575 = vst.msk [vmem:[%s573 + $0x4] sm:$0xf] %vm255, 0
      %576 = vst.msk [vmem:[%s573 + $0x8] sm:$0xf] %vm255, 0
      %577 = vst.msk [vmem:[%s573 + $0xc] sm:$0xf] %vm255, 0
      %v578 = vld [vmem:[%s573 + $0x10] sm:$0x1]
      %v579 = vsel %vm262, 0, %v578
      %580 = vst [vmem:[%s573 + $0x10] sm:$0x1] %v579
      %s581 = scalar_lea.vmem [#allocation3], 20
      %v582 = vld [vmem:[%s581 + $0x4] sm:$0x8]
      %v583 = vsel %vm277, 0, %v582
      %584 = vst [vmem:[%s581 + $0x4] sm:$0x8] %v583
      %v585 = vld [vmem:[%s581 + $0x18] sm:$0x8]
      %v586 = vsel %vm277, 0, %v585
      %587 = vst [vmem:[%s581 + $0x18] sm:$0x8] %v586
      %v588 = vld [vmem:[%s581 + $0x2c] sm:$0x8]
      %v589 = vsel %vm277, 0, %v588
      %590 = vst [vmem:[%s581 + $0x2c] sm:$0x8] %v589
      %v591 = vld [vmem:[%s581 + $0x40] sm:$0x8]
      %v592 = vsel %vm277, 0, %v591
      %593 = vst [vmem:[%s581 + $0x40] sm:$0x8] %v592
      %v594 = vld [vmem:[%s581 + $0x54] sm:$0x8]
      %v595 = vsel %vm277, 0, %v594
      %596 = vst [vmem:[%s581 + $0x54] sm:$0x8] %v595
      %v597 = vld [vmem:[%s581 + $0x68] sm:$0x8]
      %v598 = vsel %vm277, 0, %v597
      %599 = vst [vmem:[%s581 + $0x68] sm:$0x8] %v598
      %v600 = vld [vmem:[%s581 + $0x7c] sm:$0x8]
      %v601 = vsel %vm277, 0, %v600
      %602 = vst [vmem:[%s581 + $0x7c] sm:$0x8] %v601
      %v603 = vld [vmem:[%s581 + $0x90] sm:$0x8]
      %v604 = vsel %vm277, 0, %v603
      %605 = vst [vmem:[%s581 + $0x90] sm:$0x8] %v604
      %v606 = vld [vmem:[%s581 + $0xa4] sm:$0x8]
      %v607 = vsel %vm277, 0, %v606
      %608 = vst [vmem:[%s581 + $0xa4] sm:$0x8] %v607
      %v609 = vld [vmem:[%s581 + $0xb8] sm:$0x8]
      %v610 = vsel %vm277, 0, %v609
      %611 = vst [vmem:[%s581 + $0xb8] sm:$0x8] %v610
      %v612 = vld [vmem:[%s581 + $0xcc] sm:$0x8]
      %v613 = vsel %vm277, 0, %v612
      %614 = vst [vmem:[%s581 + $0xcc] sm:$0x8] %v613
      %v615 = vld [vmem:[%s581 + $0xe0] sm:$0x8]
      %v616 = vsel %vm277, 0, %v615
      %617 = vst [vmem:[%s581 + $0xe0] sm:$0x8] %v616
      %v618 = vld [vmem:[%s581 + $0xf4] sm:$0x8]
      %v619 = vsel %vm277, 0, %v618
      %620 = vst [vmem:[%s581 + $0xf4] sm:$0x8] %v619
      %v621 = vld [vmem:[%s581 + $0x108] sm:$0x8]
      %v622 = vsel %vm277, 0, %v621
      %623 = vst [vmem:[%s581 + $0x108] sm:$0x8] %v622
      %v624 = vld [vmem:[%s581 + $0x11c] sm:$0x8]
      %v625 = vsel %vm277, 0, %v624
      %626 = vst [vmem:[%s581 + $0x11c] sm:$0x8] %v625
      %v627 = vld [vmem:[%s581 + $0x130] sm:$0x8]
      %v628 = vsel %vm277, 0, %v627
      %629 = vst [vmem:[%s581 + $0x130] sm:$0x8] %v628
      %v630 = vld [vmem:[%s581 + $0x10] sm:$0x1]
      %v631 = vsel %vm262, 0, %v630
      %632 = vst [vmem:[%s581 + $0x10] sm:$0x1] %v631
      %v633 = vld [vmem:[%s581 + $0x24] sm:$0x1]
      %v634 = vsel %vm262, 0, %v633
      %635 = vst [vmem:[%s581 + $0x24] sm:$0x1] %v634
      %v636 = vld [vmem:[%s581 + $0x38] sm:$0x1]
      %v637 = vsel %vm262, 0, %v636
      %638 = vst [vmem:[%s581 + $0x38] sm:$0x1] %v637
      %v639 = vld [vmem:[%s581 + $0x4c] sm:$0x1]
      %v640 = vsel %vm262, 0, %v639
      %641 = vst [vmem:[%s581 + $0x4c] sm:$0x1] %v640
      %v642 = vld [vmem:[%s581 + $0x60] sm:$0x1]
      %v643 = vsel %vm262, 0, %v642
      %644 = vst [vmem:[%s581 + $0x60] sm:$0x1] %v643
      %v645 = vld [vmem:[%s581 + $0x74] sm:$0x1]
      %v646 = vsel %vm262, 0, %v645
      %647 = vst [vmem:[%s581 + $0x74] sm:$0x1] %v646
      %v648 = vld [vmem:[%s581 + $0x88] sm:$0x1]
      %v649 = vsel %vm262, 0, %v648
      %650 = vst [vmem:[%s581 + $0x88] sm:$0x1] %v649
      %v651 = vld [vmem:[%s581 + $0x9c] sm:$0x1]
      %v652 = vsel %vm262, 0, %v651
      %653 = vst [vmem:[%s581 + $0x9c] sm:$0x1] %v652
      %v654 = vld [vmem:[%s581 + $0xb0] sm:$0x1]
      %v655 = vsel %vm262, 0, %v654
      %656 = vst [vmem:[%s581 + $0xb0] sm:$0x1] %v655
      %v657 = vld [vmem:[%s581 + $0xc4] sm:$0x1]
      %v658 = vsel %vm262, 0, %v657
      %659 = vst [vmem:[%s581 + $0xc4] sm:$0x1] %v658
      %v660 = vld [vmem:[%s581 + $0xd8] sm:$0x1]
      %v661 = vsel %vm262, 0, %v660
      %662 = vst [vmem:[%s581 + $0xd8] sm:$0x1] %v661
      %v663 = vld [vmem:[%s581 + $0xec] sm:$0x1]
      %v664 = vsel %vm262, 0, %v663
      %665 = vst [vmem:[%s581 + $0xec] sm:$0x1] %v664
      %v666 = vld [vmem:[%s581 + $0x100] sm:$0x1]
      %v667 = vsel %vm262, 0, %v666
      %668 = vst [vmem:[%s581 + $0x100] sm:$0x1] %v667
      %v669 = vld [vmem:[%s581 + $0x114] sm:$0x1]
      %v670 = vsel %vm262, 0, %v669
      %671 = vst [vmem:[%s581 + $0x114] sm:$0x1] %v670
      %v672 = vld [vmem:[%s581 + $0x128] sm:$0x1]
      %v673 = vsel %vm262, 0, %v672
      %674 = vst [vmem:[%s581 + $0x128] sm:$0x1] %v673
      %v675 = vld [vmem:[%s581 + $0x13c] sm:$0x1]
      %v676 = vsel %vm262, 0, %v675
      %677 = vst [vmem:[%s581 + $0x13c] sm:$0x1] %v676
      loop: start=0, step=1, limit=2
      $region45: #{tpu_custom_call.1} parent=43 // loop_pre_header
        _
      $region46: #{tpu_custom_call.1} parent=43 // loop_header
        %s679 = sphi 0, %s683
        %p680 = scmp.ge.s32.totalorder %s679, 2
      $region47: #{tpu_custom_call.1} parent=43 // loop_header_branch
        %682 = sbr.rel (%p680) target = $region51
      $region48: #{tpu_custom_call.1} parent=43 // loop_body
        %s684 = smul.u32 %s679, 8
        %s685 = smul.u32 %s684, 5
        %s686 = smul.addr %s685, 4
        %s687 = scalar_lea.vmem [#allocation2], %s686
        %v688 = vld [vmem:[%s687 + $0x4] sm:$0x8]
        %v689 = vld [vmem:[%s687 + $0x8] sm:$0xf]
        %v690 = vld [vmem:[%s687 + $0xc] sm:$0xf]
        %v691 = vld [vmem:[%s687 + $0x18] sm:$0x8]
        %v692 = vld [vmem:[%s687 + $0x1c] sm:$0xf]
        %v693 = vld [vmem:[%s687 + $0x20] sm:$0xf]
        %v694 = vld [vmem:[%s687 + $0x2c] sm:$0x8]
        %v695 = vld [vmem:[%s687 + $0x30] sm:$0xf]
        %v696 = vld [vmem:[%s687 + $0x34] sm:$0xf]
        %v697 = vld [vmem:[%s687 + $0x40] sm:$0x8]
        %v698 = vld [vmem:[%s687 + $0x44] sm:$0xf]
        %v699 = vld [vmem:[%s687 + $0x48] sm:$0xf]
        %v700 = vld [vmem:[%s687 + $0x54] sm:$0x8]
        %v701 = vld [vmem:[%s687 + $0x58] sm:$0xf]
        %v702 = vld [vmem:[%s687 + $0x5c] sm:$0xf]
        %v703 = vld [vmem:[%s687 + $0x68] sm:$0x8]
        %v704 = vld [vmem:[%s687 + $0x6c] sm:$0xf]
        %v705 = vld [vmem:[%s687 + $0x70] sm:$0xf]
        %v706 = vld [vmem:[%s687 + $0x7c] sm:$0x8]
        %v707 = vld [vmem:[%s687 + $0x80] sm:$0xf]
        %v708 = vld [vmem:[%s687 + $0x84] sm:$0xf]
        %v709 = vld [vmem:[%s687 + $0x90] sm:$0x8]
        %v710 = vld [vmem:[%s687 + $0x94] sm:$0xf]
        %v711 = vld [vmem:[%s687 + $0x98] sm:$0xf]
        %v712 = vld [vmem:[%s687 + $0xa4] sm:$0x8]
        %v713 = vld [vmem:[%s687 + $0xa8] sm:$0xf]
        %v714 = vld [vmem:[%s687 + $0xac] sm:$0xf]
        %v715 = vld [vmem:[%s687 + $0xb8] sm:$0x8]
        %v716 = vld [vmem:[%s687 + $0xbc] sm:$0xf]
        %v717 = vld [vmem:[%s687 + $0xc0] sm:$0xf]
        %v718 = vld [vmem:[%s1] sm:$0x3]
        %s719 = scalar_lea.vmem %s1, 6
        %v720 = vld [vmem:[%s719] sm:$0x3]
        %vm721 = vsmask.f32 4368
        %vm722 = vmor %vm261, %vm721
        %v724 = vshrl.u32 %v691, 16
        %v726 = vrot.slane %v724, 7
        %v727 = vrot.slane %v726, 4
        %v729 = vshrl.u32 %v692, 16
        %v731 = vrot.slane %v729, 7
        %v732 = vshll.u32 %v692, 16
        %v734 = vor.u32 %v731, %v732
        %v735 = vsel %vm722, %v727, %v734
        %v736 = vrot.slane %v731, 4
        %v738 = vshrl.u32 %v693, 16
        %v740 = vrot.slane %v738, 7
        %v741 = vshll.u32 %v693, 16
        %v743 = vor.u32 %v740, %v741
        %v744 = vsel %vm722, %v736, %v743
        %v746 = vshrl.u32 %v694, 16
        %v748 = vrot.slane %v746, 7
        %v749 = vrot.slane %v748, 4
        %v751 = vshrl.u32 %v695, 16
        %v753 = vrot.slane %v751, 7
        %v754 = vshll.u32 %v695, 16
        %v756 = vor.u32 %v753, %v754
        %v757 = vsel %vm722, %v749, %v756
        %v758 = vrot.slane %v753, 4
        %v760 = vshrl.u32 %v696, 16
        %v762 = vrot.slane %v760, 7
        %v763 = vshll.u32 %v696, 16
        %v765 = vor.u32 %v762, %v763
        %v766 = vsel %vm722, %v758, %v765
        %v768 = vshrl.u32 %v697, 16
        %v770 = vrot.slane %v768, 7
        %v771 = vrot.slane %v770, 4
        %v773 = vshrl.u32 %v698, 16
        %v775 = vrot.slane %v773, 7
        %v776 = vshll.u32 %v698, 16
        %v778 = vor.u32 %v775, %v776
        %v779 = vsel %vm722, %v771, %v778
        %v780 = vrot.slane %v775, 4
        %v782 = vshrl.u32 %v699, 16
        %v784 = vrot.slane %v782, 7
        %v785 = vshll.u32 %v699, 16
        %v787 = vor.u32 %v784, %v785
        %v788 = vsel %vm722, %v780, %v787
        %v790 = vshrl.u32 %v700, 16
        %v792 = vrot.slane %v790, 7
        %v793 = vrot.slane %v792, 4
        %v795 = vshrl.u32 %v701, 16
        %v797 = vrot.slane %v795, 7
        %v798 = vshll.u32 %v701, 16
        %v800 = vor.u32 %v797, %v798
        %v801 = vsel %vm722, %v793, %v800
        %v802 = vrot.slane %v797, 4
        %v804 = vshrl.u32 %v702, 16
        %v806 = vrot.slane %v804, 7
        %v807 = vshll.u32 %v702, 16
        %v809 = vor.u32 %v806, %v807
        %v810 = vsel %vm722, %v802, %v809
        %v812 = vshrl.u32 %v703, 16
        %v814 = vrot.slane %v812, 7
        %v815 = vrot.slane %v814, 4
        %v817 = vshrl.u32 %v704, 16
        %v819 = vrot.slane %v817, 7
        %v820 = vshll.u32 %v704, 16
        %v822 = vor.u32 %v819, %v820
        %v823 = vsel %vm722, %v815, %v822
        %v824 = vrot.slane %v819, 4
        %v826 = vshrl.u32 %v705, 16
        %v828 = vrot.slane %v826, 7
        %v829 = vshll.u32 %v705, 16
        %v831 = vor.u32 %v828, %v829
        %v832 = vsel %vm722, %v824, %v831
        %v834 = vshrl.u32 %v706, 16
        %v836 = vrot.slane %v834, 7
        %v837 = vrot.slane %v836, 4
        %v839 = vshrl.u32 %v707, 16
        %v841 = vrot.slane %v839, 7
        %v842 = vshll.u32 %v707, 16
        %v844 = vor.u32 %v841, %v842
        %v845 = vsel %vm722, %v837, %v844
        %v846 = vrot.slane %v841, 4
        %v848 = vshrl.u32 %v708, 16
        %v850 = vrot.slane %v848, 7
        %v851 = vshll.u32 %v708, 16
        %v853 = vor.u32 %v850, %v851
        %v854 = vsel %vm722, %v846, %v853
        %v856 = vshrl.u32 %v709, 16
        %v858 = vrot.slane %v856, 7
        %v859 = vrot.slane %v858, 4
        %v861 = vshrl.u32 %v710, 16
        %v863 = vrot.slane %v861, 7
        %v864 = vshll.u32 %v710, 16
        %v866 = vor.u32 %v863, %v864
        %v867 = vsel %vm722, %v859, %v866
        %v868 = vrot.slane %v863, 4
        %v870 = vshrl.u32 %v711, 16
        %v872 = vrot.slane %v870, 7
        %v873 = vshll.u32 %v711, 16
        %v875 = vor.u32 %v872, %v873
        %v876 = vsel %vm722, %v868, %v875
        %v878 = vshrl.u32 %v712, 16
        %v880 = vrot.slane %v878, 7
        %v881 = vrot.slane %v880, 4
        %v883 = vshrl.u32 %v713, 16
        %v885 = vrot.slane %v883, 7
        %v886 = vshll.u32 %v713, 16
        %v888 = vor.u32 %v885, %v886
        %v889 = vsel %vm722, %v881, %v888
        %v890 = vrot.slane %v885, 4
        %v892 = vshrl.u32 %v714, 16
        %v894 = vrot.slane %v892, 7
        %v895 = vshll.u32 %v714, 16
        %v897 = vor.u32 %v894, %v895
        %v898 = vsel %vm722, %v890, %v897
        %v899 = vunpack.c.l.b16 %v735
        %v900 = vunpack.c.l.b16 %v744
        %v901 = vunpack.c.l.b16 %v757
        %v902 = vunpack.c.l.b16 %v766
        %v903 = vunpack.c.l.b16 %v779
        %v904 = vunpack.c.l.b16 %v788
        %v905 = vunpack.c.l.b16 %v801
        %v906 = vunpack.c.l.b16 %v810
        %v907 = vunpack.c.l.b16 %v823
        %v908 = vunpack.c.l.b16 %v832
        %v909 = vunpack.c.l.b16 %v845
        %v910 = vunpack.c.l.b16 %v854
        %v911 = vunpack.c.l.b16 %v867
        %v912 = vunpack.c.l.b16 %v876
        %v913 = vunpack.c.l.b16 %v889
        %v914 = vunpack.c.l.b16 %v898
        %v915 = vpack.c.b16 %v900, %v899
        %v916 = vpack.c.b16 %v902, %v901
        %v917 = vpack.c.b16 %v904, %v903
        %v918 = vpack.c.b16 %v906, %v905
        %v919 = vpack.c.b16 %v908, %v907
        %v920 = vpack.c.b16 %v910, %v909
        %v921 = vpack.c.b16 %v912, %v911
        %v922 = vpack.c.b16 %v914, %v913
        %vm923 = vcmask 31744
        %v925 = vsel %vm923, %v915, 0
        %v928 = vsel %vm923, %v916, 0
        %v931 = vsel %vm923, %v917, 0
        %v934 = vsel %vm923, %v918, 0
        %v937 = vsel %vm923, %v919, 0
        %v940 = vsel %vm923, %v920, 0
        %v943 = vsel %vm923, %v921, 0
        %v946 = vsel %vm923, %v922, 0
        %vm948 = vcmask 1041408
        %v950 = vsel %vm948, %v720, 0
        %952 = vmatprep.subr.bf16.mxu0 0
        %953 = vmatpush1.bf16.msra.mxu0 0
        %954 = vmatprep.subr.bf16.mxu0 0
        %955 = vmatpush1.bf16.msra.mxu0 0
        %956 = vmatprep.subr.bf16.mxu0 0
        %957 = vmatpush1.bf16.msra.mxu0 0
        %958 = vmatprep.subr.bf16.mxu0 0
        %959 = vmatpush1.bf16.msra.mxu0 0
        %960 = vmatprep.subr.bf16.mxu0 0
        %961 = vmatpush1.bf16.msra.mxu0 0
        %962 = vmatprep.subr.bf16.mxu0 0
        %963 = vmatpush1.bf16.msra.mxu0 0
        %964 = vmatprep.subr.bf16.mxu0 0
        %965 = vmatpush1.bf16.msra.mxu0 0
        %966 = vmatprep.subr.bf16.mxu0 0
        %967 = vmatpush1.bf16.msra.mxu0 %v950
        %968 = vmatprep.subr.bf16.mxu0 0
        %969 = vmatpush2.bf16.msra.mxu0 0
        %970 = vmatprep.subr.bf16.mxu0 0
        %971 = vmatpush2.bf16.msra.mxu0 0
        %972 = vmatprep.subr.bf16.mxu0 0
        %973 = vmatpush2.bf16.msra.mxu0 0
        %974 = vmatprep.subr.bf16.mxu0 0
        %975 = vmatpush2.bf16.msra.mxu0 0
        %976 = vmatprep.subr.bf16.mxu0 0
        %977 = vmatpush2.bf16.msra.mxu0 0
        %978 = vmatprep.subr.bf16.mxu0 0
        %979 = vmatpush2.bf16.msra.mxu0 0
        %980 = vmatprep.subr.bf16.mxu0 0
        %981 = vmatpush2.bf16.msra.mxu0 0
        %982 = vmatprep.subr.bf16.mxu0 0
        %983 = vmatpush2.bf16.msra.mxu0 0
        %984 = vmatprep.mubr.bf16.mxu0 0
        %985 = vmatmul.mubr.bf16.gmra.mxu0 %v925
        %v986 = vpop.f32.mrf.mxu0
        %v987 = vadd.f32 0.0, %v986
        %v988 = vpop.f32.mrf.mxu0
        %v989 = vpop.f32.mrf.mxu0
        %v990 = vadd.f32 0.0, %v989
        %v991 = vpop.f32.mrf.mxu0
        %992 = vmatprep.mubr.bf16.mxu0 0
        %993 = vmatmul.mubr.bf16.gmra.mxu0 %v928
        %v994 = vpop.f32.mrf.mxu0
        %v995 = vadd.f32 0.0, %v994
        %v996 = vpop.f32.mrf.mxu0
        %v997 = vpop.f32.mrf.mxu0
        %v998 = vadd.f32 0.0, %v997
        %v999 = vpop.f32.mrf.mxu0
        %1000 = vmatprep.mubr.bf16.mxu0 0
        %1001 = vmatmul.mubr.bf16.gmra.mxu0 %v931
        %v1002 = vpop.f32.mrf.mxu0
        %v1003 = vadd.f32 0.0, %v1002
        %v1004 = vpop.f32.mrf.mxu0
        %v1005 = vpop.f32.mrf.mxu0
        %v1006 = vadd.f32 0.0, %v1005
        %v1007 = vpop.f32.mrf.mxu0
        %1008 = vmatprep.mubr.bf16.mxu0 0
        %1009 = vmatmul.mubr.bf16.gmra.mxu0 %v934
        %v1010 = vpop.f32.mrf.mxu0
        %v1011 = vadd.f32 0.0, %v1010
        %v1012 = vpop.f32.mrf.mxu0
        %v1013 = vpop.f32.mrf.mxu0
        %v1014 = vadd.f32 0.0, %v1013
        %v1015 = vpop.f32.mrf.mxu0
        %1016 = vmatprep.mubr.bf16.mxu0 0
        %1017 = vmatmul.mubr.bf16.gmra.mxu0 %v937
        %v1018 = vpop.f32.mrf.mxu0
        %v1019 = vadd.f32 0.0, %v1018
        %v1020 = vpop.f32.mrf.mxu0
        %v1021 = vpop.f32.mrf.mxu0
        %v1022 = vadd.f32 0.0, %v1021
        %v1023 = vpop.f32.mrf.mxu0
        %1024 = vmatprep.mubr.bf16.mxu0 0
        %1025 = vmatmul.mubr.bf16.gmra.mxu0 %v940
        %v1026 = vpop.f32.mrf.mxu0
        %v1027 = vadd.f32 0.0, %v1026
        %v1028 = vpop.f32.mrf.mxu0
        %v1029 = vpop.f32.mrf.mxu0
        %v1030 = vadd.f32 0.0, %v1029
        %v1031 = vpop.f32.mrf.mxu0
        %1032 = vmatprep.mubr.bf16.mxu0 0
        %1033 = vmatmul.mubr.bf16.gmra.mxu0 %v943
        %v1034 = vpop.f32.mrf.mxu0
        %v1035 = vadd.f32 0.0, %v1034
        %v1036 = vpop.f32.mrf.mxu0
        %v1037 = vpop.f32.mrf.mxu0
        %v1038 = vadd.f32 0.0, %v1037
        %v1039 = vpop.f32.mrf.mxu0
        %1040 = vmatprep.mubr.bf16.mxu0 0
        %1041 = vmatmul.mubr.bf16.gmra.mxu0 %v946
        %v1042 = vpop.f32.mrf.mxu0
        %v1043 = vadd.f32 0.0, %v1042
        %v1044 = vpop.f32.mrf.mxu0
        %v1045 = vpop.f32.mrf.mxu0
        %v1046 = vadd.f32 0.0, %v1045
        %v1047 = vpop.f32.mrf.mxu0
        %1048 = vdwg.mxu0
        %v1050 = vshrl.u32 %v688, 16
        %v1052 = vrot.slane %v1050, 7
        %v1053 = vrot.slane %v1052, 4
        %v1055 = vshrl.u32 %v689, 16
        %v1057 = vrot.slane %v1055, 7
        %v1058 = vshll.u32 %v689, 16
        %v1060 = vor.u32 %v1057, %v1058
        %v1061 = vsel %vm722, %v1053, %v1060
        %v1062 = vrot.slane %v1057, 4
        %v1064 = vshrl.u32 %v690, 16
        %v1066 = vrot.slane %v1064, 7
        %v1067 = vshll.u32 %v690, 16
        %v1069 = vor.u32 %v1066, %v1067
        %v1070 = vsel %vm722, %v1062, %v1069
        %v1071 = vunpack.c.l.b16 %v1061
        %v1072 = vunpack.c.l.b16 %v1070
        %v1073 = vpack.c.b16 %v1072, %v1071
        %v1075 = vsel %vm923, %v1073, 0
        %v1078 = vsel %vm948, %v718, 0
        %1080 = vmatprep.subr.bf16.mxu0 0
        %1081 = vmatpush1.bf16.msra.mxu0 0
        %1082 = vmatprep.subr.bf16.mxu0 0
        %1083 = vmatpush1.bf16.msra.mxu0 0
        %1084 = vmatprep.subr.bf16.mxu0 0
        %1085 = vmatpush1.bf16.msra.mxu0 0
        %1086 = vmatprep.subr.bf16.mxu0 0
        %1087 = vmatpush1.bf16.msra.mxu0 0
        %1088 = vmatprep.subr.bf16.mxu0 0
        %1089 = vmatpush1.bf16.msra.mxu0 0
        %1090 = vmatprep.subr.bf16.mxu0 0
        %1091 = vmatpush1.bf16.msra.mxu0 0
        %1092 = vmatprep.subr.bf16.mxu0 0
        %1093 = vmatpush1.bf16.msra.mxu0 0
        %1094 = vmatprep.subr.bf16.mxu0 0
        %1095 = vmatpush1.bf16.msra.mxu0 %v1078
        %1096 = vmatprep.subr.bf16.mxu0 0
        %1097 = vmatpush2.bf16.msra.mxu0 0
        %1098 = vmatprep.subr.bf16.mxu0 0
        %1099 = vmatpush2.bf16.msra.mxu0 0
        %1100 = vmatprep.subr.bf16.mxu0 0
        %1101 = vmatpush2.bf16.msra.mxu0 0
        %1102 = vmatprep.subr.bf16.mxu0 0
        %1103 = vmatpush2.bf16.msra.mxu0 0
        %1104 = vmatprep.subr.bf16.mxu0 0
        %1105 = vmatpush2.bf16.msra.mxu0 0
        %1106 = vmatprep.subr.bf16.mxu0 0
        %1107 = vmatpush2.bf16.msra.mxu0 0
        %1108 = vmatprep.subr.bf16.mxu0 0
        %1109 = vmatpush2.bf16.msra.mxu0 0
        %1110 = vmatprep.subr.bf16.mxu0 0
        %1111 = vmatpush2.bf16.msra.mxu0 0
        %1112 = vmatprep.mubr.bf16.mxu0 0
        %1113 = vmatmul.mubr.bf16.gmra.mxu0 %v1075
        %v1114 = vpop.f32.mrf.mxu0
        %v1115 = vadd.f32 %v987, %v1114
        %v1116 = vpop.f32.mrf.mxu0
        %v1117 = vpop.f32.mrf.mxu0
        %v1118 = vadd.f32 %v990, %v1117
        %v1119 = vpop.f32.mrf.mxu0
        %1120 = vmatprep.mubr.bf16.mxu0 0
        %1121 = vmatmul.mubr.bf16.gmra.mxu0 %v925
        %v1122 = vpop.f32.mrf.mxu0
        %v1123 = vadd.f32 %v995, %v1122
        %v1124 = vpop.f32.mrf.mxu0
        %v1125 = vpop.f32.mrf.mxu0
        %v1126 = vadd.f32 %v998, %v1125
        %v1127 = vpop.f32.mrf.mxu0
        %1128 = vmatprep.mubr.bf16.mxu0 0
        %1129 = vmatmul.mubr.bf16.gmra.mxu0 %v928
        %v1130 = vpop.f32.mrf.mxu0
        %v1131 = vadd.f32 %v1003, %v1130
        %v1132 = vpop.f32.mrf.mxu0
        %v1133 = vpop.f32.mrf.mxu0
        %v1134 = vadd.f32 %v1006, %v1133
        %v1135 = vpop.f32.mrf.mxu0
        %1136 = vmatprep.mubr.bf16.mxu0 0
        %1137 = vmatmul.mubr.bf16.gmra.mxu0 %v931
        %v1138 = vpop.f32.mrf.mxu0
        %v1139 = vadd.f32 %v1011, %v1138
        %v1140 = vpop.f32.mrf.mxu0
        %v1141 = vpop.f32.mrf.mxu0
        %v1142 = vadd.f32 %v1014, %v1141
        %v1143 = vpop.f32.mrf.mxu0
        %1144 = vmatprep.mubr.bf16.mxu0 0
        %1145 = vmatmul.mubr.bf16.gmra.mxu0 %v934
        %v1146 = vpop.f32.mrf.mxu0
        %v1147 = vadd.f32 %v1019, %v1146
        %v1148 = vpop.f32.mrf.mxu0
        %v1149 = vpop.f32.mrf.mxu0
        %v1150 = vadd.f32 %v1022, %v1149
        %v1151 = vpop.f32.mrf.mxu0
        %1152 = vmatprep.mubr.bf16.mxu0 0
        %1153 = vmatmul.mubr.bf16.gmra.mxu0 %v937
        %v1154 = vpop.f32.mrf.mxu0
        %v1155 = vadd.f32 %v1027, %v1154
        %v1156 = vpop.f32.mrf.mxu0
        %v1157 = vpop.f32.mrf.mxu0
        %v1158 = vadd.f32 %v1030, %v1157
        %v1159 = vpop.f32.mrf.mxu0
        %1160 = vmatprep.mubr.bf16.mxu0 0
        %1161 = vmatmul.mubr.bf16.gmra.mxu0 %v940
        %v1162 = vpop.f32.mrf.mxu0
        %v1163 = vadd.f32 %v1035, %v1162
        %v1164 = vpop.f32.mrf.mxu0
        %v1165 = vpop.f32.mrf.mxu0
        %v1166 = vadd.f32 %v1038, %v1165
        %v1167 = vpop.f32.mrf.mxu0
        %1168 = vmatprep.mubr.bf16.mxu0 0
        %1169 = vmatmul.mubr.bf16.gmra.mxu0 %v943
        %v1170 = vpop.f32.mrf.mxu0
        %v1171 = vadd.f32 %v1043, %v1170
        %v1172 = vpop.f32.mrf.mxu0
        %v1173 = vpop.f32.mrf.mxu0
        %v1174 = vadd.f32 %v1046, %v1173
        %v1175 = vpop.f32.mrf.mxu0
        %1176 = vdwg.mxu0
        %s1177 = scalar_lea.vmem %s1, 12
        %v1178 = vld [vmem:[%s1177] sm:$0x3]
        %v1180 = vshrl.u32 %v715, 16
        %v1182 = vrot.slane %v1180, 7
        %v1183 = vrot.slane %v1182, 4
        %v1185 = vshrl.u32 %v716, 16
        %v1187 = vrot.slane %v1185, 7
        %v1188 = vshll.u32 %v716, 16
        %v1190 = vor.u32 %v1187, %v1188
        %v1191 = vsel %vm722, %v1183, %v1190
        %v1192 = vrot.slane %v1187, 4
        %v1194 = vshrl.u32 %v717, 16
        %v1196 = vrot.slane %v1194, 7
        %v1197 = vshll.u32 %v717, 16
        %v1199 = vor.u32 %v1196, %v1197
        %v1200 = vsel %vm722, %v1192, %v1199
        %v1201 = vunpack.c.l.b16 %v1191
        %v1202 = vunpack.c.l.b16 %v1200
        %v1203 = vpack.c.b16 %v1202, %v1201
        %v1205 = vsel %vm923, %v1203, 0
        %v1208 = vsel %vm948, %v1178, 0
        %1210 = vmatprep.subr.bf16.mxu0 0
        %1211 = vmatpush1.bf16.msra.mxu0 0
        %1212 = vmatprep.subr.bf16.mxu0 0
        %1213 = vmatpush1.bf16.msra.mxu0 0
        %1214 = vmatprep.subr.bf16.mxu0 0
        %1215 = vmatpush1.bf16.msra.mxu0 0
        %1216 = vmatprep.subr.bf16.mxu0 0
        %1217 = vmatpush1.bf16.msra.mxu0 0
        %1218 = vmatprep.subr.bf16.mxu0 0
        %1219 = vmatpush1.bf16.msra.mxu0 0
        %1220 = vmatprep.subr.bf16.mxu0 0
        %1221 = vmatpush1.bf16.msra.mxu0 0
        %1222 = vmatprep.subr.bf16.mxu0 0
        %1223 = vmatpush1.bf16.msra.mxu0 0
        %1224 = vmatprep.subr.bf16.mxu0 0
        %1225 = vmatpush1.bf16.msra.mxu0 %v1208
        %1226 = vmatprep.subr.bf16.mxu0 0
        %1227 = vmatpush2.bf16.msra.mxu0 0
        %1228 = vmatprep.subr.bf16.mxu0 0
        %1229 = vmatpush2.bf16.msra.mxu0 0
        %1230 = vmatprep.subr.bf16.mxu0 0
        %1231 = vmatpush2.bf16.msra.mxu0 0
        %1232 = vmatprep.subr.bf16.mxu0 0
        %1233 = vmatpush2.bf16.msra.mxu0 0
        %1234 = vmatprep.subr.bf16.mxu0 0
        %1235 = vmatpush2.bf16.msra.mxu0 0
        %1236 = vmatprep.subr.bf16.mxu0 0
        %1237 = vmatpush2.bf16.msra.mxu0 0
        %1238 = vmatprep.subr.bf16.mxu0 0
        %1239 = vmatpush2.bf16.msra.mxu0 0
        %1240 = vmatprep.subr.bf16.mxu0 0
        %1241 = vmatpush2.bf16.msra.mxu0 0
        %1242 = vmatprep.mubr.bf16.mxu0 0
        %1243 = vmatmul.mubr.bf16.gmra.mxu0 %v928
        %v1244 = vpop.f32.mrf.mxu0
        %v1245 = vadd.f32 0.0, %v1244
        %v1246 = vpop.f32.mrf.mxu0
        %v1247 = vpop.f32.mrf.mxu0
        %v1248 = vadd.f32 0.0, %v1247
        %v1249 = vpop.f32.mrf.mxu0
        %1250 = vmatprep.mubr.bf16.mxu0 0
        %1251 = vmatmul.mubr.bf16.gmra.mxu0 %v931
        %v1252 = vpop.f32.mrf.mxu0
        %v1253 = vadd.f32 0.0, %v1252
        %v1254 = vpop.f32.mrf.mxu0
        %v1255 = vpop.f32.mrf.mxu0
        %v1256 = vadd.f32 0.0, %v1255
        %v1257 = vpop.f32.mrf.mxu0
        %1258 = vmatprep.mubr.bf16.mxu0 0
        %1259 = vmatmul.mubr.bf16.gmra.mxu0 %v934
        %v1260 = vpop.f32.mrf.mxu0
        %v1261 = vadd.f32 0.0, %v1260
        %v1262 = vpop.f32.mrf.mxu0
        %v1263 = vpop.f32.mrf.mxu0
        %v1264 = vadd.f32 0.0, %v1263
        %v1265 = vpop.f32.mrf.mxu0
        %1266 = vmatprep.mubr.bf16.mxu0 0
        %1267 = vmatmul.mubr.bf16.gmra.mxu0 %v937
        %v1268 = vpop.f32.mrf.mxu0
        %v1269 = vadd.f32 0.0, %v1268
        %v1270 = vpop.f32.mrf.mxu0
        %v1271 = vpop.f32.mrf.mxu0
        %v1272 = vadd.f32 0.0, %v1271
        %v1273 = vpop.f32.mrf.mxu0
        %1274 = vmatprep.mubr.bf16.mxu0 0
        %1275 = vmatmul.mubr.bf16.gmra.mxu0 %v940
        %v1276 = vpop.f32.mrf.mxu0
        %v1277 = vadd.f32 0.0, %v1276
        %v1278 = vpop.f32.mrf.mxu0
        %v1279 = vpop.f32.mrf.mxu0
        %v1280 = vadd.f32 0.0, %v1279
        %v1281 = vpop.f32.mrf.mxu0
        %1282 = vmatprep.mubr.bf16.mxu0 0
        %1283 = vmatmul.mubr.bf16.gmra.mxu0 %v943
        %v1284 = vpop.f32.mrf.mxu0
        %v1285 = vadd.f32 0.0, %v1284
        %v1286 = vpop.f32.mrf.mxu0
        %v1287 = vpop.f32.mrf.mxu0
        %v1288 = vadd.f32 0.0, %v1287
        %v1289 = vpop.f32.mrf.mxu0
        %1290 = vmatprep.mubr.bf16.mxu0 0
        %1291 = vmatmul.mubr.bf16.gmra.mxu0 %v946
        %v1292 = vpop.f32.mrf.mxu0
        %v1293 = vadd.f32 0.0, %v1292
        %v1294 = vpop.f32.mrf.mxu0
        %v1295 = vpop.f32.mrf.mxu0
        %v1296 = vadd.f32 0.0, %v1295
        %v1297 = vpop.f32.mrf.mxu0
        %1298 = vmatprep.mubr.bf16.mxu0 0
        %1299 = vmatmul.mubr.bf16.gmra.mxu0 %v1205
        %v1300 = vpop.f32.mrf.mxu0
        %v1301 = vadd.f32 0.0, %v1300
        %v1302 = vpop.f32.mrf.mxu0
        %v1303 = vpop.f32.mrf.mxu0
        %v1304 = vadd.f32 0.0, %v1303
        %v1305 = vpop.f32.mrf.mxu0
        %1306 = vdwg.mxu0
        %v1307 = vadd.f32 %v1115, %v1245
        %v1308 = vadd.f32 %v1118, %v1248
        %v1309 = vadd.f32 %v1123, %v1253
        %v1310 = vadd.f32 %v1126, %v1256
        %v1311 = vadd.f32 %v1131, %v1261
        %v1312 = vadd.f32 %v1134, %v1264
        %v1313 = vadd.f32 %v1139, %v1269
        %v1314 = vadd.f32 %v1142, %v1272
        %v1315 = vadd.f32 %v1147, %v1277
        %v1316 = vadd.f32 %v1150, %v1280
        %v1317 = vadd.f32 %v1155, %v1285
        %v1318 = vadd.f32 %v1158, %v1288
        %v1319 = vadd.f32 %v1163, %v1293
        %v1320 = vadd.f32 %v1166, %v1296
        %v1321 = vadd.f32 %v1171, %v1301
        %v1322 = vadd.f32 %v1174, %v1304
        %v1323 = vld [vmem:[%s687 + $0x8] sm:$0xf]
        %v1324 = vld [vmem:[%s687 + $0xc] sm:$0xf]
        %v1325 = vld [vmem:[%s687 + $0x1c] sm:$0xf]
        %v1326 = vld [vmem:[%s687 + $0x20] sm:$0xf]
        %v1327 = vld [vmem:[%s687 + $0x30] sm:$0xf]
        %v1328 = vld [vmem:[%s687 + $0x34] sm:$0xf]
        %v1329 = vld [vmem:[%s687 + $0x44] sm:$0xf]
        %v1330 = vld [vmem:[%s687 + $0x48] sm:$0xf]
        %v1331 = vld [vmem:[%s687 + $0x58] sm:$0xf]
        %v1332 = vld [vmem:[%s687 + $0x5c] sm:$0xf]
        %v1333 = vld [vmem:[%s687 + $0x6c] sm:$0xf]
        %v1334 = vld [vmem:[%s687 + $0x70] sm:$0xf]
        %v1335 = vld [vmem:[%s687 + $0x80] sm:$0xf]
        %v1336 = vld [vmem:[%s687 + $0x84] sm:$0xf]
        %v1337 = vld [vmem:[%s687 + $0x94] sm:$0xf]
        %v1338 = vld [vmem:[%s687 + $0x98] sm:$0xf]
        %v1339 = vld [vmem:[%s687 + $0xa8] sm:$0xf]
        %v1340 = vld [vmem:[%s687 + $0xac] sm:$0xf]
        %v1341 = vld [vmem:[%s687 + $0xbc] sm:$0xf]
        %v1342 = vld [vmem:[%s687 + $0xc0] sm:$0xf]
        %s1343 = scalar_lea.vmem %s1, 2
        %v1344 = vld [vmem:[%s1343] sm:$0x3]
        %v1361 = vunpack.c.l.b16 %v1323
        %v1362 = vunpack.c.l.b16 %v1324
        %v1363 = vunpack.c.l.b16 %v1325
        %v1364 = vunpack.c.l.b16 %v1326
        %v1365 = vunpack.c.l.b16 %v1327
        %v1366 = vunpack.c.l.b16 %v1328
        %v1367 = vunpack.c.l.b16 %v1329
        %v1368 = vunpack.c.l.b16 %v1330
        %v1369 = vunpack.c.l.b16 %v1331
        %v1370 = vunpack.c.l.b16 %v1332
        %v1371 = vunpack.c.l.b16 %v1333
        %v1372 = vunpack.c.l.b16 %v1334
        %v1373 = vunpack.c.l.b16 %v1335
        %v1374 = vunpack.c.l.b16 %v1336
        %v1375 = vunpack.c.l.b16 %v1337
        %v1376 = vunpack.c.l.b16 %v1338
        %v1377 = vpack.c.b16 %v1362, %v1361
        %v1378 = vpack.c.b16 %v1364, %v1363
        %v1379 = vpack.c.b16 %v1366, %v1365
        %v1380 = vpack.c.b16 %v1368, %v1367
        %v1381 = vpack.c.b16 %v1370, %v1369
        %v1382 = vpack.c.b16 %v1372, %v1371
        %v1383 = vpack.c.b16 %v1374, %v1373
        %v1384 = vpack.c.b16 %v1376, %v1375
        %v1386 = vsel %vm923, %v1377, 0
        %v1389 = vsel %vm923, %v1378, 0
        %v1392 = vsel %vm923, %v1379, 0
        %v1395 = vsel %vm923, %v1380, 0
        %v1398 = vsel %vm923, %v1381, 0
        %v1401 = vsel %vm923, %v1382, 0
        %v1404 = vsel %vm923, %v1383, 0
        %v1407 = vsel %vm923, %v1384, 0
        %v1410 = vsel %vm948, %v1344, 0
        %1412 = vmatprep.subr.bf16.mxu0 0
        %1413 = vmatpush1.bf16.msra.mxu0 0
        %1414 = vmatprep.subr.bf16.mxu0 0
        %1415 = vmatpush1.bf16.msra.mxu0 0
        %1416 = vmatprep.subr.bf16.mxu0 0
        %1417 = vmatpush1.bf16.msra.mxu0 0
        %1418 = vmatprep.subr.bf16.mxu0 0
        %1419 = vmatpush1.bf16.msra.mxu0 0
        %1420 = vmatprep.subr.bf16.mxu0 0
        %1421 = vmatpush1.bf16.msra.mxu0 0
        %1422 = vmatprep.subr.bf16.mxu0 0
        %1423 = vmatpush1.bf16.msra.mxu0 0
        %1424 = vmatprep.subr.bf16.mxu0 0
        %1425 = vmatpush1.bf16.msra.mxu0 0
        %1426 = vmatprep.subr.bf16.mxu0 0
        %1427 = vmatpush1.bf16.msra.mxu0 %v1410
        %1428 = vmatprep.subr.bf16.mxu0 0
        %1429 = vmatpush2.bf16.msra.mxu0 0
        %1430 = vmatprep.subr.bf16.mxu0 0
        %1431 = vmatpush2.bf16.msra.mxu0 0
        %1432 = vmatprep.subr.bf16.mxu0 0
        %1433 = vmatpush2.bf16.msra.mxu0 0
        %1434 = vmatprep.subr.bf16.mxu0 0
        %1435 = vmatpush2.bf16.msra.mxu0 0
        %1436 = vmatprep.subr.bf16.mxu0 0
        %1437 = vmatpush2.bf16.msra.mxu0 0
        %1438 = vmatprep.subr.bf16.mxu0 0
        %1439 = vmatpush2.bf16.msra.mxu0 0
        %1440 = vmatprep.subr.bf16.mxu0 0
        %1441 = vmatpush2.bf16.msra.mxu0 0
        %1442 = vmatprep.subr.bf16.mxu0 0
        %1443 = vmatpush2.bf16.msra.mxu0 0
        %1444 = vmatprep.mubr.bf16.mxu0 0
        %1445 = vmatmul.mubr.bf16.gmra.mxu0 %v1386
        %v1446 = vpop.f32.mrf.mxu0
        %v1447 = vadd.f32 0.0, %v1446
        %v1448 = vpop.f32.mrf.mxu0
        %v1449 = vpop.f32.mrf.mxu0
        %v1450 = vadd.f32 0.0, %v1449
        %v1451 = vpop.f32.mrf.mxu0
        %1452 = vmatprep.mubr.bf16.mxu0 0
        %1453 = vmatmul.mubr.bf16.gmra.mxu0 %v1389
        %v1454 = vpop.f32.mrf.mxu0
        %v1455 = vadd.f32 0.0, %v1454
        %v1456 = vpop.f32.mrf.mxu0
        %v1457 = vpop.f32.mrf.mxu0
        %v1458 = vadd.f32 0.0, %v1457
        %v1459 = vpop.f32.mrf.mxu0
        %1460 = vmatprep.mubr.bf16.mxu0 0
        %1461 = vmatmul.mubr.bf16.gmra.mxu0 %v1392
        %v1462 = vpop.f32.mrf.mxu0
        %v1463 = vadd.f32 0.0, %v1462
        %v1464 = vpop.f32.mrf.mxu0
        %v1465 = vpop.f32.mrf.mxu0
        %v1466 = vadd.f32 0.0, %v1465
        %v1467 = vpop.f32.mrf.mxu0
        %1468 = vmatprep.mubr.bf16.mxu0 0
        %1469 = vmatmul.mubr.bf16.gmra.mxu0 %v1395
        %v1470 = vpop.f32.mrf.mxu0
        %v1471 = vadd.f32 0.0, %v1470
        %v1472 = vpop.f32.mrf.mxu0
        %v1473 = vpop.f32.mrf.mxu0
        %v1474 = vadd.f32 0.0, %v1473
        %v1475 = vpop.f32.mrf.mxu0
        %1476 = vmatprep.mubr.bf16.mxu0 0
        %1477 = vmatmul.mubr.bf16.gmra.mxu0 %v1398
        %v1478 = vpop.f32.mrf.mxu0
        %v1479 = vadd.f32 0.0, %v1478
        %v1480 = vpop.f32.mrf.mxu0
        %v1481 = vpop.f32.mrf.mxu0
        %v1482 = vadd.f32 0.0, %v1481
        %v1483 = vpop.f32.mrf.mxu0
        %1484 = vmatprep.mubr.bf16.mxu0 0
        %1485 = vmatmul.mubr.bf16.gmra.mxu0 %v1401
        %v1486 = vpop.f32.mrf.mxu0
        %v1487 = vadd.f32 0.0, %v1486
        %v1488 = vpop.f32.mrf.mxu0
        %v1489 = vpop.f32.mrf.mxu0
        %v1490 = vadd.f32 0.0, %v1489
        %v1491 = vpop.f32.mrf.mxu0
        %1492 = vmatprep.mubr.bf16.mxu0 0
        %1493 = vmatmul.mubr.bf16.gmra.mxu0 %v1404
        %v1494 = vpop.f32.mrf.mxu0
        %v1495 = vadd.f32 0.0, %v1494
        %v1496 = vpop.f32.mrf.mxu0
        %v1497 = vpop.f32.mrf.mxu0
        %v1498 = vadd.f32 0.0, %v1497
        %v1499 = vpop.f32.mrf.mxu0
        %1500 = vmatprep.mubr.bf16.mxu0 0
        %1501 = vmatmul.mubr.bf16.gmra.mxu0 %v1407
        %v1502 = vpop.f32.mrf.mxu0
        %v1503 = vadd.f32 0.0, %v1502
        %v1504 = vpop.f32.mrf.mxu0
        %v1505 = vpop.f32.mrf.mxu0
        %v1506 = vadd.f32 0.0, %v1505
        %v1507 = vpop.f32.mrf.mxu0
        %1508 = vdwg.mxu0
        %v1509 = vadd.f32 %v1307, %v1447
        %v1510 = vadd.f32 %v1308, %v1450
        %v1511 = vadd.f32 %v1309, %v1455
        %v1512 = vadd.f32 %v1310, %v1458
        %v1513 = vadd.f32 %v1311, %v1463
        %v1514 = vadd.f32 %v1312, %v1466
        %v1515 = vadd.f32 %v1313, %v1471
        %v1516 = vadd.f32 %v1314, %v1474
        %v1517 = vadd.f32 %v1315, %v1479
        %v1518 = vadd.f32 %v1316, %v1482
        %v1519 = vadd.f32 %v1317, %v1487
        %v1520 = vadd.f32 %v1318, %v1490
        %v1521 = vadd.f32 %v1319, %v1495
        %v1522 = vadd.f32 %v1320, %v1498
        %v1523 = vadd.f32 %v1321, %v1503
        %v1524 = vadd.f32 %v1322, %v1506
        %s1525 = scalar_lea.vmem %s1, 8
        %v1526 = vld [vmem:[%s1525] sm:$0x3]
        %v1529 = vunpack.c.l.b16 %v1339
        %v1530 = vunpack.c.l.b16 %v1340
        %v1531 = vpack.c.b16 %v1530, %v1529
        %v1533 = vsel %vm923, %v1531, 0
        %v1536 = vsel %vm948, %v1526, 0
        %1538 = vmatprep.subr.bf16.mxu0 0
        %1539 = vmatpush1.bf16.msra.mxu0 0
        %1540 = vmatprep.subr.bf16.mxu0 0
        %1541 = vmatpush1.bf16.msra.mxu0 0
        %1542 = vmatprep.subr.bf16.mxu0 0
        %1543 = vmatpush1.bf16.msra.mxu0 0
        %1544 = vmatprep.subr.bf16.mxu0 0
        %1545 = vmatpush1.bf16.msra.mxu0 0
        %1546 = vmatprep.subr.bf16.mxu0 0
        %1547 = vmatpush1.bf16.msra.mxu0 0
        %1548 = vmatprep.subr.bf16.mxu0 0
        %1549 = vmatpush1.bf16.msra.mxu0 0
        %1550 = vmatprep.subr.bf16.mxu0 0
        %1551 = vmatpush1.bf16.msra.mxu0 0
        %1552 = vmatprep.subr.bf16.mxu0 0
        %1553 = vmatpush1.bf16.msra.mxu0 %v1536
        %1554 = vmatprep.subr.bf16.mxu0 0
        %1555 = vmatpush2.bf16.msra.mxu0 0
        %1556 = vmatprep.subr.bf16.mxu0 0
        %1557 = vmatpush2.bf16.msra.mxu0 0
        %1558 = vmatprep.subr.bf16.mxu0 0
        %1559 = vmatpush2.bf16.msra.mxu0 0
        %1560 = vmatprep.subr.bf16.mxu0 0
        %1561 = vmatpush2.bf16.msra.mxu0 0
        %1562 = vmatprep.subr.bf16.mxu0 0
        %1563 = vmatpush2.bf16.msra.mxu0 0
        %1564 = vmatprep.subr.bf16.mxu0 0
        %1565 = vmatpush2.bf16.msra.mxu0 0
        %1566 = vmatprep.subr.bf16.mxu0 0
        %1567 = vmatpush2.bf16.msra.mxu0 0
        %1568 = vmatprep.subr.bf16.mxu0 0
        %1569 = vmatpush2.bf16.msra.mxu0 0
        %1570 = vmatprep.mubr.bf16.mxu0 0
        %1571 = vmatmul.mubr.bf16.gmra.mxu0 %v1389
        %v1572 = vpop.f32.mrf.mxu0
        %v1573 = vadd.f32 0.0, %v1572
        %v1574 = vpop.f32.mrf.mxu0
        %v1575 = vpop.f32.mrf.mxu0
        %v1576 = vadd.f32 0.0, %v1575
        %v1577 = vpop.f32.mrf.mxu0
        %1578 = vmatprep.mubr.bf16.mxu0 0
        %1579 = vmatmul.mubr.bf16.gmra.mxu0 %v1392
        %v1580 = vpop.f32.mrf.mxu0
        %v1581 = vadd.f32 0.0, %v1580
        %v1582 = vpop.f32.mrf.mxu0
        %v1583 = vpop.f32.mrf.mxu0
        %v1584 = vadd.f32 0.0, %v1583
        %v1585 = vpop.f32.mrf.mxu0
        %1586 = vmatprep.mubr.bf16.mxu0 0
        %1587 = vmatmul.mubr.bf16.gmra.mxu0 %v1395
        %v1588 = vpop.f32.mrf.mxu0
        %v1589 = vadd.f32 0.0, %v1588
        %v1590 = vpop.f32.mrf.mxu0
        %v1591 = vpop.f32.mrf.mxu0
        %v1592 = vadd.f32 0.0, %v1591
        %v1593 = vpop.f32.mrf.mxu0
        %1594 = vmatprep.mubr.bf16.mxu0 0
        %1595 = vmatmul.mubr.bf16.gmra.mxu0 %v1398
        %v1596 = vpop.f32.mrf.mxu0
        %v1597 = vadd.f32 0.0, %v1596
        %v1598 = vpop.f32.mrf.mxu0
        %v1599 = vpop.f32.mrf.mxu0
        %v1600 = vadd.f32 0.0, %v1599
        %v1601 = vpop.f32.mrf.mxu0
        %1602 = vmatprep.mubr.bf16.mxu0 0
        %1603 = vmatmul.mubr.bf16.gmra.mxu0 %v1401
        %v1604 = vpop.f32.mrf.mxu0
        %v1605 = vadd.f32 0.0, %v1604
        %v1606 = vpop.f32.mrf.mxu0
        %v1607 = vpop.f32.mrf.mxu0
        %v1608 = vadd.f32 0.0, %v1607
        %v1609 = vpop.f32.mrf.mxu0
        %1610 = vmatprep.mubr.bf16.mxu0 0
        %1611 = vmatmul.mubr.bf16.gmra.mxu0 %v1404
        %v1612 = vpop.f32.mrf.mxu0
        %v1613 = vadd.f32 0.0, %v1612
        %v1614 = vpop.f32.mrf.mxu0
        %v1615 = vpop.f32.mrf.mxu0
        %v1616 = vadd.f32 0.0, %v1615
        %v1617 = vpop.f32.mrf.mxu0
        %1618 = vmatprep.mubr.bf16.mxu0 0
        %1619 = vmatmul.mubr.bf16.gmra.mxu0 %v1407
        %v1620 = vpop.f32.mrf.mxu0
        %v1621 = vadd.f32 0.0, %v1620
        %v1622 = vpop.f32.mrf.mxu0
        %v1623 = vpop.f32.mrf.mxu0
        %v1624 = vadd.f32 0.0, %v1623
        %v1625 = vpop.f32.mrf.mxu0
        %1626 = vmatprep.mubr.bf16.mxu0 0
        %1627 = vmatmul.mubr.bf16.gmra.mxu0 %v1533
        %v1628 = vpop.f32.mrf.mxu0
        %v1629 = vadd.f32 0.0, %v1628
        %v1630 = vpop.f32.mrf.mxu0
        %v1631 = vpop.f32.mrf.mxu0
        %v1632 = vadd.f32 0.0, %v1631
        %v1633 = vpop.f32.mrf.mxu0
        %1634 = vdwg.mxu0
        %v1635 = vadd.f32 %v1509, %v1573
        %v1636 = vadd.f32 %v1510, %v1576
        %v1637 = vadd.f32 %v1511, %v1581
        %v1638 = vadd.f32 %v1512, %v1584
        %v1639 = vadd.f32 %v1513, %v1589
        %v1640 = vadd.f32 %v1514, %v1592
        %v1641 = vadd.f32 %v1515, %v1597
        %v1642 = vadd.f32 %v1516, %v1600
        %v1643 = vadd.f32 %v1517, %v1605
        %v1644 = vadd.f32 %v1518, %v1608
        %v1645 = vadd.f32 %v1519, %v1613
        %v1646 = vadd.f32 %v1520, %v1616
        %v1647 = vadd.f32 %v1521, %v1621
        %v1648 = vadd.f32 %v1522, %v1624
        %v1649 = vadd.f32 %v1523, %v1629
        %v1650 = vadd.f32 %v1524, %v1632
        %s1651 = scalar_lea.vmem %s1, 14
        %v1652 = vld [vmem:[%s1651] sm:$0x3]
        %v1655 = vunpack.c.l.b16 %v1341
        %v1656 = vunpack.c.l.b16 %v1342
        %v1657 = vpack.c.b16 %v1656, %v1655
        %v1659 = vsel %vm923, %v1657, 0
        %v1662 = vsel %vm948, %v1652, 0
        %1664 = vmatprep.subr.bf16.mxu0 0
        %1665 = vmatpush1.bf16.msra.mxu0 0
        %1666 = vmatprep.subr.bf16.mxu0 0
        %1667 = vmatpush1.bf16.msra.mxu0 0
        %1668 = vmatprep.subr.bf16.mxu0 0
        %1669 = vmatpush1.bf16.msra.mxu0 0
        %1670 = vmatprep.subr.bf16.mxu0 0
        %1671 = vmatpush1.bf16.msra.mxu0 0
        %1672 = vmatprep.subr.bf16.mxu0 0
        %1673 = vmatpush1.bf16.msra.mxu0 0
        %1674 = vmatprep.subr.bf16.mxu0 0
        %1675 = vmatpush1.bf16.msra.mxu0 0
        %1676 = vmatprep.subr.bf16.mxu0 0
        %1677 = vmatpush1.bf16.msra.mxu0 0
        %1678 = vmatprep.subr.bf16.mxu0 0
        %1679 = vmatpush1.bf16.msra.mxu0 %v1662
        %1680 = vmatprep.subr.bf16.mxu0 0
        %1681 = vmatpush2.bf16.msra.mxu0 0
        %1682 = vmatprep.subr.bf16.mxu0 0
        %1683 = vmatpush2.bf16.msra.mxu0 0
        %1684 = vmatprep.subr.bf16.mxu0 0
        %1685 = vmatpush2.bf16.msra.mxu0 0
        %1686 = vmatprep.subr.bf16.mxu0 0
        %1687 = vmatpush2.bf16.msra.mxu0 0
        %1688 = vmatprep.subr.bf16.mxu0 0
        %1689 = vmatpush2.bf16.msra.mxu0 0
        %1690 = vmatprep.subr.bf16.mxu0 0
        %1691 = vmatpush2.bf16.msra.mxu0 0
        %1692 = vmatprep.subr.bf16.mxu0 0
        %1693 = vmatpush2.bf16.msra.mxu0 0
        %1694 = vmatprep.subr.bf16.mxu0 0
        %1695 = vmatpush2.bf16.msra.mxu0 0
        %1696 = vmatprep.mubr.bf16.mxu0 0
        %1697 = vmatmul.mubr.bf16.gmra.mxu0 %v1392
        %v1698 = vpop.f32.mrf.mxu0
        %v1699 = vadd.f32 0.0, %v1698
        %v1700 = vpop.f32.mrf.mxu0
        %v1701 = vpop.f32.mrf.mxu0
        %v1702 = vadd.f32 0.0, %v1701
        %v1703 = vpop.f32.mrf.mxu0
        %1704 = vmatprep.mubr.bf16.mxu0 0
        %1705 = vmatmul.mubr.bf16.gmra.mxu0 %v1395
        %v1706 = vpop.f32.mrf.mxu0
        %v1707 = vadd.f32 0.0, %v1706
        %v1708 = vpop.f32.mrf.mxu0
        %v1709 = vpop.f32.mrf.mxu0
        %v1710 = vadd.f32 0.0, %v1709
        %v1711 = vpop.f32.mrf.mxu0
        %1712 = vmatprep.mubr.bf16.mxu0 0
        %1713 = vmatmul.mubr.bf16.gmra.mxu0 %v1398
        %v1714 = vpop.f32.mrf.mxu0
        %v1715 = vadd.f32 0.0, %v1714
        %v1716 = vpop.f32.mrf.mxu0
        %v1717 = vpop.f32.mrf.mxu0
        %v1718 = vadd.f32 0.0, %v1717
        %v1719 = vpop.f32.mrf.mxu0
        %1720 = vmatprep.mubr.bf16.mxu0 0
        %1721 = vmatmul.mubr.bf16.gmra.mxu0 %v1401
        %v1722 = vpop.f32.mrf.mxu0
        %v1723 = vadd.f32 0.0, %v1722
        %v1724 = vpop.f32.mrf.mxu0
        %v1725 = vpop.f32.mrf.mxu0
        %v1726 = vadd.f32 0.0, %v1725
        %v1727 = vpop.f32.mrf.mxu0
        %1728 = vmatprep.mubr.bf16.mxu0 0
        %1729 = vmatmul.mubr.bf16.gmra.mxu0 %v1404
        %v1730 = vpop.f32.mrf.mxu0
        %v1731 = vadd.f32 0.0, %v1730
        %v1732 = vpop.f32.mrf.mxu0
        %v1733 = vpop.f32.mrf.mxu0
        %v1734 = vadd.f32 0.0, %v1733
        %v1735 = vpop.f32.mrf.mxu0
        %1736 = vmatprep.mubr.bf16.mxu0 0
        %1737 = vmatmul.mubr.bf16.gmra.mxu0 %v1407
        %v1738 = vpop.f32.mrf.mxu0
        %v1739 = vadd.f32 0.0, %v1738
        %v1740 = vpop.f32.mrf.mxu0
        %v1741 = vpop.f32.mrf.mxu0
        %v1742 = vadd.f32 0.0, %v1741
        %v1743 = vpop.f32.mrf.mxu0
        %1744 = vmatprep.mubr.bf16.mxu0 0
        %1745 = vmatmul.mubr.bf16.gmra.mxu0 %v1533
        %v1746 = vpop.f32.mrf.mxu0
        %v1747 = vadd.f32 0.0, %v1746
        %v1748 = vpop.f32.mrf.mxu0
        %v1749 = vpop.f32.mrf.mxu0
        %v1750 = vadd.f32 0.0, %v1749
        %v1751 = vpop.f32.mrf.mxu0
        %1752 = vmatprep.mubr.bf16.mxu0 0
        %1753 = vmatmul.mubr.bf16.gmra.mxu0 %v1659
        %v1754 = vpop.f32.mrf.mxu0
        %v1755 = vadd.f32 0.0, %v1754
        %v1756 = vpop.f32.mrf.mxu0
        %v1757 = vpop.f32.mrf.mxu0
        %v1758 = vadd.f32 0.0, %v1757
        %v1759 = vpop.f32.mrf.mxu0
        %1760 = vdwg.mxu0
        %v1761 = vadd.f32 %v1635, %v1699
        %v1762 = vadd.f32 %v1636, %v1702
        %v1763 = vadd.f32 %v1637, %v1707
        %v1764 = vadd.f32 %v1638, %v1710
        %v1765 = vadd.f32 %v1639, %v1715
        %v1766 = vadd.f32 %v1640, %v1718
        %v1767 = vadd.f32 %v1641, %v1723
        %v1768 = vadd.f32 %v1642, %v1726
        %v1769 = vadd.f32 %v1643, %v1731
        %v1770 = vadd.f32 %v1644, %v1734
        %v1771 = vadd.f32 %v1645, %v1739
        %v1772 = vadd.f32 %v1646, %v1742
        %v1773 = vadd.f32 %v1647, %v1747
        %v1774 = vadd.f32 %v1648, %v1750
        %v1775 = vadd.f32 %v1649, %v1755
        %v1776 = vadd.f32 %v1650, %v1758
        %v1777 = vld [vmem:[%s687 + $0x8] sm:$0xf]
        %v1778 = vld [vmem:[%s687 + $0xc] sm:$0xf]
        %v1779 = vld [vmem:[%s687 + $0x10] sm:$0x1]
        %v1780 = vld [vmem:[%s687 + $0x1c] sm:$0xf]
        %v1781 = vld [vmem:[%s687 + $0x20] sm:$0xf]
        %v1782 = vld [vmem:[%s687 + $0x24] sm:$0x1]
        %v1783 = vld [vmem:[%s687 + $0x30] sm:$0xf]
        %v1784 = vld [vmem:[%s687 + $0x34] sm:$0xf]
        %v1785 = vld [vmem:[%s687 + $0x38] sm:$0x1]
        %v1786 = vld [vmem:[%s687 + $0x44] sm:$0xf]
        %v1787 = vld [vmem:[%s687 + $0x48] sm:$0xf]
        %v1788 = vld [vmem:[%s687 + $0x4c] sm:$0x1]
        %v1789 = vld [vmem:[%s687 + $0x58] sm:$0xf]
        %v1790 = vld [vmem:[%s687 + $0x5c] sm:$0xf]
        %v1791 = vld [vmem:[%s687 + $0x60] sm:$0x1]
        %v1792 = vld [vmem:[%s687 + $0x6c] sm:$0xf]
        %v1793 = vld [vmem:[%s687 + $0x70] sm:$0xf]
        %v1794 = vld [vmem:[%s687 + $0x74] sm:$0x1]
        %v1795 = vld [vmem:[%s687 + $0x80] sm:$0xf]
        %v1796 = vld [vmem:[%s687 + $0x84] sm:$0xf]
        %v1797 = vld [vmem:[%s687 + $0x88] sm:$0x1]
        %v1798 = vld [vmem:[%s687 + $0x94] sm:$0xf]
        %v1799 = vld [vmem:[%s687 + $0x98] sm:$0xf]
        %v1800 = vld [vmem:[%s687 + $0x9c] sm:$0x1]
        %v1801 = vld [vmem:[%s687 + $0xa8] sm:$0xf]
        %v1802 = vld [vmem:[%s687 + $0xac] sm:$0xf]
        %v1803 = vld [vmem:[%s687 + $0xb0] sm:$0x1]
        %v1804 = vld [vmem:[%s687 + $0xbc] sm:$0xf]
        %v1805 = vld [vmem:[%s687 + $0xc0] sm:$0xf]
        %v1806 = vld [vmem:[%s687 + $0xc4] sm:$0x1]
        %s1807 = scalar_lea.vmem %s1, 4
        %v1808 = vld [vmem:[%s1807] sm:$0x3]
        %vm1809 = vsmask.f32 3328
        %vm1810 = vsmask.f32 7440
        %vm1811 = vmor %vm1809, %vm1810
        %v1813 = vshrl.u32 %v1777, 16
        %v1815 = vrot.slane %v1813, 4
        %v1816 = vshll.u32 %v1777, 16
        %v1818 = vrot.slane %v1816, 5
        %v1819 = vor.u32 %v1815, %v1818
        %v1820 = vrot.slane %v1819, 4
        %v1822 = vshll.u32 %v1778, 16
        %v1824 = vrot.slane %v1822, 5
        %v1825 = vsel %vm1811, %v1820, %v1824
        %v1826 = vshrl.u32 %v1778, 16
        %v1828 = vrot.slane %v1826, 4
        %v1829 = vor.u32 %v1828, %v1824
        %v1830 = vrot.slane %v1829, 4
        %v1832 = vshll.u32 %v1779, 16
        %v1834 = vrot.slane %v1832, 5
        %v1835 = vsel %vm1811, %v1830, %v1834
        %v1837 = vshrl.u32 %v1780, 16
        %v1839 = vrot.slane %v1837, 4
        %v1840 = vshll.u32 %v1780, 16
        %v1842 = vrot.slane %v1840, 5
        %v1843 = vor.u32 %v1839, %v1842
        %v1844 = vrot.slane %v1843, 4
        %v1846 = vshll.u32 %v1781, 16
        %v1848 = vrot.slane %v1846, 5
        %v1849 = vsel %vm1811, %v1844, %v1848
        %v1850 = vshrl.u32 %v1781, 16
        %v1852 = vrot.slane %v1850, 4
        %v1853 = vor.u32 %v1852, %v1848
        %v1854 = vrot.slane %v1853, 4
        %v1856 = vshll.u32 %v1782, 16
        %v1858 = vrot.slane %v1856, 5
        %v1859 = vsel %vm1811, %v1854, %v1858
        %v1861 = vshrl.u32 %v1783, 16
        %v1863 = vrot.slane %v1861, 4
        %v1864 = vshll.u32 %v1783, 16
        %v1866 = vrot.slane %v1864, 5
        %v1867 = vor.u32 %v1863, %v1866
        %v1868 = vrot.slane %v1867, 4
        %v1870 = vshll.u32 %v1784, 16
        %v1872 = vrot.slane %v1870, 5
        %v1873 = vsel %vm1811, %v1868, %v1872
        %v1874 = vshrl.u32 %v1784, 16
        %v1876 = vrot.slane %v1874, 4
        %v1877 = vor.u32 %v1876, %v1872
        %v1878 = vrot.slane %v1877, 4
        %v1880 = vshll.u32 %v1785, 16
        %v1882 = vrot.slane %v1880, 5
        %v1883 = vsel %vm1811, %v1878, %v1882
        %v1885 = vshrl.u32 %v1786, 16
        %v1887 = vrot.slane %v1885, 4
        %v1888 = vshll.u32 %v1786, 16
        %v1890 = vrot.slane %v1888, 5
        %v1891 = vor.u32 %v1887, %v1890
        %v1892 = vrot.slane %v1891, 4
        %v1894 = vshll.u32 %v1787, 16
        %v1896 = vrot.slane %v1894, 5
        %v1897 = vsel %vm1811, %v1892, %v1896
        %v1898 = vshrl.u32 %v1787, 16
        %v1900 = vrot.slane %v1898, 4
        %v1901 = vor.u32 %v1900, %v1896
        %v1902 = vrot.slane %v1901, 4
        %v1904 = vshll.u32 %v1788, 16
        %v1906 = vrot.slane %v1904, 5
        %v1907 = vsel %vm1811, %v1902, %v1906
        %v1909 = vshrl.u32 %v1789, 16
        %v1911 = vrot.slane %v1909, 4
        %v1912 = vshll.u32 %v1789, 16
        %v1914 = vrot.slane %v1912, 5
        %v1915 = vor.u32 %v1911, %v1914
        %v1916 = vrot.slane %v1915, 4
        %v1918 = vshll.u32 %v1790, 16
        %v1920 = vrot.slane %v1918, 5
        %v1921 = vsel %vm1811, %v1916, %v1920
        %v1922 = vshrl.u32 %v1790, 16
        %v1924 = vrot.slane %v1922, 4
        %v1925 = vor.u32 %v1924, %v1920
        %v1926 = vrot.slane %v1925, 4
        %v1928 = vshll.u32 %v1791, 16
        %v1930 = vrot.slane %v1928, 5
        %v1931 = vsel %vm1811, %v1926, %v1930
        %v1933 = vshrl.u32 %v1792, 16
        %v1935 = vrot.slane %v1933, 4
        %v1936 = vshll.u32 %v1792, 16
        %v1938 = vrot.slane %v1936, 5
        %v1939 = vor.u32 %v1935, %v1938
        %v1940 = vrot.slane %v1939, 4
        %v1942 = vshll.u32 %v1793, 16
        %v1944 = vrot.slane %v1942, 5
        %v1945 = vsel %vm1811, %v1940, %v1944
        %v1946 = vshrl.u32 %v1793, 16
        %v1948 = vrot.slane %v1946, 4
        %v1949 = vor.u32 %v1948, %v1944
        %v1950 = vrot.slane %v1949, 4
        %v1952 = vshll.u32 %v1794, 16
        %v1954 = vrot.slane %v1952, 5
        %v1955 = vsel %vm1811, %v1950, %v1954
        %v1957 = vshrl.u32 %v1795, 16
        %v1959 = vrot.slane %v1957, 4
        %v1960 = vshll.u32 %v1795, 16
        %v1962 = vrot.slane %v1960, 5
        %v1963 = vor.u32 %v1959, %v1962
        %v1964 = vrot.slane %v1963, 4
        %v1966 = vshll.u32 %v1796, 16
        %v1968 = vrot.slane %v1966, 5
        %v1969 = vsel %vm1811, %v1964, %v1968
        %v1970 = vshrl.u32 %v1796, 16
        %v1972 = vrot.slane %v1970, 4
        %v1973 = vor.u32 %v1972, %v1968
        %v1974 = vrot.slane %v1973, 4
        %v1976 = vshll.u32 %v1797, 16
        %v1978 = vrot.slane %v1976, 5
        %v1979 = vsel %vm1811, %v1974, %v1978
        %v1981 = vshrl.u32 %v1798, 16
        %v1983 = vrot.slane %v1981, 4
        %v1984 = vshll.u32 %v1798, 16
        %v1986 = vrot.slane %v1984, 5
        %v1987 = vor.u32 %v1983, %v1986
        %v1988 = vrot.slane %v1987, 4
        %v1990 = vshll.u32 %v1799, 16
        %v1992 = vrot.slane %v1990, 5
        %v1993 = vsel %vm1811, %v1988, %v1992
        %v1994 = vshrl.u32 %v1799, 16
        %v1996 = vrot.slane %v1994, 4
        %v1997 = vor.u32 %v1996, %v1992
        %v1998 = vrot.slane %v1997, 4
        %v2000 = vshll.u32 %v1800, 16
        %v2002 = vrot.slane %v2000, 5
        %v2003 = vsel %vm1811, %v1998, %v2002
        %v2004 = vunpack.c.l.b16 %v1825
        %v2005 = vunpack.c.l.b16 %v1835
        %v2006 = vunpack.c.l.b16 %v1849
        %v2007 = vunpack.c.l.b16 %v1859
        %v2008 = vunpack.c.l.b16 %v1873
        %v2009 = vunpack.c.l.b16 %v1883
        %v2010 = vunpack.c.l.b16 %v1897
        %v2011 = vunpack.c.l.b16 %v1907
        %v2012 = vunpack.c.l.b16 %v1921
        %v2013 = vunpack.c.l.b16 %v1931
        %v2014 = vunpack.c.l.b16 %v1945
        %v2015 = vunpack.c.l.b16 %v1955
        %v2016 = vunpack.c.l.b16 %v1969
        %v2017 = vunpack.c.l.b16 %v1979
        %v2018 = vunpack.c.l.b16 %v1993
        %v2019 = vunpack.c.l.b16 %v2003
        %v2020 = vpack.c.b16 %v2005, %v2004
        %v2021 = vpack.c.b16 %v2007, %v2006
        %v2022 = vpack.c.b16 %v2009, %v2008
        %v2023 = vpack.c.b16 %v2011, %v2010
        %v2024 = vpack.c.b16 %v2013, %v2012
        %v2025 = vpack.c.b16 %v2015, %v2014
        %v2026 = vpack.c.b16 %v2017, %v2016
        %v2027 = vpack.c.b16 %v2019, %v2018
        %v2029 = vsel %vm923, %v2020, 0
        %v2032 = vsel %vm923, %v2021, 0
        %v2035 = vsel %vm923, %v2022, 0
        %v2038 = vsel %vm923, %v2023, 0
        %v2041 = vsel %vm923, %v2024, 0
        %v2044 = vsel %vm923, %v2025, 0
        %v2047 = vsel %vm923, %v2026, 0
        %v2050 = vsel %vm923, %v2027, 0
        %v2053 = vsel %vm948, %v1808, 0
        %2055 = vmatprep.subr.bf16.mxu0 0
        %2056 = vmatpush1.bf16.msra.mxu0 0
        %2057 = vmatprep.subr.bf16.mxu0 0
        %2058 = vmatpush1.bf16.msra.mxu0 0
        %2059 = vmatprep.subr.bf16.mxu0 0
        %2060 = vmatpush1.bf16.msra.mxu0 0
        %2061 = vmatprep.subr.bf16.mxu0 0
        %2062 = vmatpush1.bf16.msra.mxu0 0
        %2063 = vmatprep.subr.bf16.mxu0 0
        %2064 = vmatpush1.bf16.msra.mxu0 0
        %2065 = vmatprep.subr.bf16.mxu0 0
        %2066 = vmatpush1.bf16.msra.mxu0 0
        %2067 = vmatprep.subr.bf16.mxu0 0
        %2068 = vmatpush1.bf16.msra.mxu0 0
        %2069 = vmatprep.subr.bf16.mxu0 0
        %2070 = vmatpush1.bf16.msra.mxu0 %v2053
        %2071 = vmatprep.subr.bf16.mxu0 0
        %2072 = vmatpush2.bf16.msra.mxu0 0
        %2073 = vmatprep.subr.bf16.mxu0 0
        %2074 = vmatpush2.bf16.msra.mxu0 0
        %2075 = vmatprep.subr.bf16.mxu0 0
        %2076 = vmatpush2.bf16.msra.mxu0 0
        %2077 = vmatprep.subr.bf16.mxu0 0
        %2078 = vmatpush2.bf16.msra.mxu0 0
        %2079 = vmatprep.subr.bf16.mxu0 0
        %2080 = vmatpush2.bf16.msra.mxu0 0
        %2081 = vmatprep.subr.bf16.mxu0 0
        %2082 = vmatpush2.bf16.msra.mxu0 0
        %2083 = vmatprep.subr.bf16.mxu0 0
        %2084 = vmatpush2.bf16.msra.mxu0 0
        %2085 = vmatprep.subr.bf16.mxu0 0
        %2086 = vmatpush2.bf16.msra.mxu0 0
        %2087 = vmatprep.mubr.bf16.mxu0 0
        %2088 = vmatmul.mubr.bf16.gmra.mxu0 %v2029
        %v2089 = vpop.f32.mrf.mxu0
        %v2090 = vadd.f32 0.0, %v2089
        %v2091 = vpop.f32.mrf.mxu0
        %v2092 = vpop.f32.mrf.mxu0
        %v2093 = vadd.f32 0.0, %v2092
        %v2094 = vpop.f32.mrf.mxu0
        %2095 = vmatprep.mubr.bf16.mxu0 0
        %2096 = vmatmul.mubr.bf16.gmra.mxu0 %v2032
        %v2097 = vpop.f32.mrf.mxu0
        %v2098 = vadd.f32 0.0, %v2097
        %v2099 = vpop.f32.mrf.mxu0
        %v2100 = vpop.f32.mrf.mxu0
        %v2101 = vadd.f32 0.0, %v2100
        %v2102 = vpop.f32.mrf.mxu0
        %2103 = vmatprep.mubr.bf16.mxu0 0
        %2104 = vmatmul.mubr.bf16.gmra.mxu0 %v2035
        %v2105 = vpop.f32.mrf.mxu0
        %v2106 = vadd.f32 0.0, %v2105
        %v2107 = vpop.f32.mrf.mxu0
        %v2108 = vpop.f32.mrf.mxu0
        %v2109 = vadd.f32 0.0, %v2108
        %v2110 = vpop.f32.mrf.mxu0
        %2111 = vmatprep.mubr.bf16.mxu0 0
        %2112 = vmatmul.mubr.bf16.gmra.mxu0 %v2038
        %v2113 = vpop.f32.mrf.mxu0
        %v2114 = vadd.f32 0.0, %v2113
        %v2115 = vpop.f32.mrf.mxu0
        %v2116 = vpop.f32.mrf.mxu0
        %v2117 = vadd.f32 0.0, %v2116
        %v2118 = vpop.f32.mrf.mxu0
        %2119 = vmatprep.mubr.bf16.mxu0 0
        %2120 = vmatmul.mubr.bf16.gmra.mxu0 %v2041
        %v2121 = vpop.f32.mrf.mxu0
        %v2122 = vadd.f32 0.0, %v2121
        %v2123 = vpop.f32.mrf.mxu0
        %v2124 = vpop.f32.mrf.mxu0
        %v2125 = vadd.f32 0.0, %v2124
        %v2126 = vpop.f32.mrf.mxu0
        %2127 = vmatprep.mubr.bf16.mxu0 0
        %2128 = vmatmul.mubr.bf16.gmra.mxu0 %v2044
        %v2129 = vpop.f32.mrf.mxu0
        %v2130 = vadd.f32 0.0, %v2129
        %v2131 = vpop.f32.mrf.mxu0
        %v2132 = vpop.f32.mrf.mxu0
        %v2133 = vadd.f32 0.0, %v2132
        %v2134 = vpop.f32.mrf.mxu0
        %2135 = vmatprep.mubr.bf16.mxu0 0
        %2136 = vmatmul.mubr.bf16.gmra.mxu0 %v2047
        %v2137 = vpop.f32.mrf.mxu0
        %v2138 = vadd.f32 0.0, %v2137
        %v2139 = vpop.f32.mrf.mxu0
        %v2140 = vpop.f32.mrf.mxu0
        %v2141 = vadd.f32 0.0, %v2140
        %v2142 = vpop.f32.mrf.mxu0
        %2143 = vmatprep.mubr.bf16.mxu0 0
        %2144 = vmatmul.mubr.bf16.gmra.mxu0 %v2050
        %v2145 = vpop.f32.mrf.mxu0
        %v2146 = vadd.f32 0.0, %v2145
        %v2147 = vpop.f32.mrf.mxu0
        %v2148 = vpop.f32.mrf.mxu0
        %v2149 = vadd.f32 0.0, %v2148
        %v2150 = vpop.f32.mrf.mxu0
        %2151 = vdwg.mxu0
        %v2152 = vadd.f32 %v1761, %v2090
        %v2153 = vadd.f32 %v1762, %v2093
        %v2154 = vadd.f32 %v1763, %v2098
        %v2155 = vadd.f32 %v1764, %v2101
        %v2156 = vadd.f32 %v1765, %v2106
        %v2157 = vadd.f32 %v1766, %v2109
        %v2158 = vadd.f32 %v1767, %v2114
        %v2159 = vadd.f32 %v1768, %v2117
        %v2160 = vadd.f32 %v1769, %v2122
        %v2161 = vadd.f32 %v1770, %v2125
        %v2162 = vadd.f32 %v1771, %v2130
        %v2163 = vadd.f32 %v1772, %v2133
        %v2164 = vadd.f32 %v1773, %v2138
        %v2165 = vadd.f32 %v1774, %v2141
        %v2166 = vadd.f32 %v1775, %v2146
        %v2167 = vadd.f32 %v1776, %v2149
        %s2168 = scalar_lea.vmem %s1, 10
        %v2169 = vld [vmem:[%s2168] sm:$0x3]
        %v2171 = vshrl.u32 %v1801, 16
        %v2173 = vrot.slane %v2171, 4
        %v2174 = vshll.u32 %v1801, 16
        %v2176 = vrot.slane %v2174, 5
        %v2177 = vor.u32 %v2173, %v2176
        %v2178 = vrot.slane %v2177, 4
        %v2180 = vshll.u32 %v1802, 16
        %v2182 = vrot.slane %v2180, 5
        %v2183 = vsel %vm1811, %v2178, %v2182
        %v2184 = vshrl.u32 %v1802, 16
        %v2186 = vrot.slane %v2184, 4
        %v2187 = vor.u32 %v2186, %v2182
        %v2188 = vrot.slane %v2187, 4
        %v2190 = vshll.u32 %v1803, 16
        %v2192 = vrot.slane %v2190, 5
        %v2193 = vsel %vm1811, %v2188, %v2192
        %v2194 = vunpack.c.l.b16 %v2183
        %v2195 = vunpack.c.l.b16 %v2193
        %v2196 = vpack.c.b16 %v2195, %v2194
        %v2198 = vsel %vm923, %v2196, 0
        %v2201 = vsel %vm948, %v2169, 0
        %2203 = vmatprep.subr.bf16.mxu0 0
        %2204 = vmatpush1.bf16.msra.mxu0 0
        %2205 = vmatprep.subr.bf16.mxu0 0
        %2206 = vmatpush1.bf16.msra.mxu0 0
        %2207 = vmatprep.subr.bf16.mxu0 0
        %2208 = vmatpush1.bf16.msra.mxu0 0
        %2209 = vmatprep.subr.bf16.mxu0 0
        %2210 = vmatpush1.bf16.msra.mxu0 0
        %2211 = vmatprep.subr.bf16.mxu0 0
        %2212 = vmatpush1.bf16.msra.mxu0 0
        %2213 = vmatprep.subr.bf16.mxu0 0
        %2214 = vmatpush1.bf16.msra.mxu0 0
        %2215 = vmatprep.subr.bf16.mxu0 0
        %2216 = vmatpush1.bf16.msra.mxu0 0
        %2217 = vmatprep.subr.bf16.mxu0 0
        %2218 = vmatpush1.bf16.msra.mxu0 %v2201
        %2219 = vmatprep.subr.bf16.mxu0 0
        %2220 = vmatpush2.bf16.msra.mxu0 0
        %2221 = vmatprep.subr.bf16.mxu0 0
        %2222 = vmatpush2.bf16.msra.mxu0 0
        %2223 = vmatprep.subr.bf16.mxu0 0
        %2224 = vmatpush2.bf16.msra.mxu0 0
        %2225 = vmatprep.subr.bf16.mxu0 0
        %2226 = vmatpush2.bf16.msra.mxu0 0
        %2227 = vmatprep.subr.bf16.mxu0 0
        %2228 = vmatpush2.bf16.msra.mxu0 0
        %2229 = vmatprep.subr.bf16.mxu0 0
        %2230 = vmatpush2.bf16.msra.mxu0 0
        %2231 = vmatprep.subr.bf16.mxu0 0
        %2232 = vmatpush2.bf16.msra.mxu0 0
        %2233 = vmatprep.subr.bf16.mxu0 0
        %2234 = vmatpush2.bf16.msra.mxu0 0
        %2235 = vmatprep.mubr.bf16.mxu0 0
        %2236 = vmatmul.mubr.bf16.gmra.mxu0 %v2032
        %v2237 = vpop.f32.mrf.mxu0
        %v2238 = vadd.f32 0.0, %v2237
        %v2239 = vpop.f32.mrf.mxu0
        %v2240 = vpop.f32.mrf.mxu0
        %v2241 = vadd.f32 0.0, %v2240
        %v2242 = vpop.f32.mrf.mxu0
        %2243 = vmatprep.mubr.bf16.mxu0 0
        %2244 = vmatmul.mubr.bf16.gmra.mxu0 %v2035
        %v2245 = vpop.f32.mrf.mxu0
        %v2246 = vadd.f32 0.0, %v2245
        %v2247 = vpop.f32.mrf.mxu0
        %v2248 = vpop.f32.mrf.mxu0
        %v2249 = vadd.f32 0.0, %v2248
        %v2250 = vpop.f32.mrf.mxu0
        %2251 = vmatprep.mubr.bf16.mxu0 0
        %2252 = vmatmul.mubr.bf16.gmra.mxu0 %v2038
        %v2253 = vpop.f32.mrf.mxu0
        %v2254 = vadd.f32 0.0, %v2253
        %v2255 = vpop.f32.mrf.mxu0
        %v2256 = vpop.f32.mrf.mxu0
        %v2257 = vadd.f32 0.0, %v2256
        %v2258 = vpop.f32.mrf.mxu0
        %2259 = vmatprep.mubr.bf16.mxu0 0
        %2260 = vmatmul.mubr.bf16.gmra.mxu0 %v2041
        %v2261 = vpop.f32.mrf.mxu0
        %v2262 = vadd.f32 0.0, %v2261
        %v2263 = vpop.f32.mrf.mxu0
        %v2264 = vpop.f32.mrf.mxu0
        %v2265 = vadd.f32 0.0, %v2264
        %v2266 = vpop.f32.mrf.mxu0
        %2267 = vmatprep.mubr.bf16.mxu0 0
        %2268 = vmatmul.mubr.bf16.gmra.mxu0 %v2044
        %v2269 = vpop.f32.mrf.mxu0
        %v2270 = vadd.f32 0.0, %v2269
        %v2271 = vpop.f32.mrf.mxu0
        %v2272 = vpop.f32.mrf.mxu0
        %v2273 = vadd.f32 0.0, %v2272
        %v2274 = vpop.f32.mrf.mxu0
        %2275 = vmatprep.mubr.bf16.mxu0 0
        %2276 = vmatmul.mubr.bf16.gmra.mxu0 %v2047
        %v2277 = vpop.f32.mrf.mxu0
        %v2278 = vadd.f32 0.0, %v2277
        %v2279 = vpop.f32.mrf.mxu0
        %v2280 = vpop.f32.mrf.mxu0
        %v2281 = vadd.f32 0.0, %v2280
        %v2282 = vpop.f32.mrf.mxu0
        %2283 = vmatprep.mubr.bf16.mxu0 0
        %2284 = vmatmul.mubr.bf16.gmra.mxu0 %v2050
        %v2285 = vpop.f32.mrf.mxu0
        %v2286 = vadd.f32 0.0, %v2285
        %v2287 = vpop.f32.mrf.mxu0
        %v2288 = vpop.f32.mrf.mxu0
        %v2289 = vadd.f32 0.0, %v2288
        %v2290 = vpop.f32.mrf.mxu0
        %2291 = vmatprep.mubr.bf16.mxu0 0
        %2292 = vmatmul.mubr.bf16.gmra.mxu0 %v2198
        %v2293 = vpop.f32.mrf.mxu0
        %v2294 = vadd.f32 0.0, %v2293
        %v2295 = vpop.f32.mrf.mxu0
        %v2296 = vpop.f32.mrf.mxu0
        %v2297 = vadd.f32 0.0, %v2296
        %v2298 = vpop.f32.mrf.mxu0
        %2299 = vdwg.mxu0
        %v2300 = vadd.f32 %v2152, %v2238
        %v2301 = vadd.f32 %v2153, %v2241
        %v2302 = vadd.f32 %v2154, %v2246
        %v2303 = vadd.f32 %v2155, %v2249
        %v2304 = vadd.f32 %v2156, %v2254
        %v2305 = vadd.f32 %v2157, %v2257
        %v2306 = vadd.f32 %v2158, %v2262
        %v2307 = vadd.f32 %v2159, %v2265
        %v2308 = vadd.f32 %v2160, %v2270
        %v2309 = vadd.f32 %v2161, %v2273
        %v2310 = vadd.f32 %v2162, %v2278
        %v2311 = vadd.f32 %v2163, %v2281
        %v2312 = vadd.f32 %v2164, %v2286
        %v2313 = vadd.f32 %v2165, %v2289
        %v2314 = vadd.f32 %v2166, %v2294
        %v2315 = vadd.f32 %v2167, %v2297
        %s2316 = scalar_lea.vmem %s1, 16
        %v2317 = vld [vmem:[%s2316] sm:$0x3]
        %v2319 = vshrl.u32 %v1804, 16
        %v2321 = vrot.slane %v2319, 4
        %v2322 = vshll.u32 %v1804, 16
        %v2324 = vrot.slane %v2322, 5
        %v2325 = vor.u32 %v2321, %v2324
        %v2326 = vrot.slane %v2325, 4
        %v2328 = vshll.u32 %v1805, 16
        %v2330 = vrot.slane %v2328, 5
        %v2331 = vsel %vm1811, %v2326, %v2330
        %v2332 = vshrl.u32 %v1805, 16
        %v2334 = vrot.slane %v2332, 4
        %v2335 = vor.u32 %v2334, %v2330
        %v2336 = vrot.slane %v2335, 4
        %v2338 = vshll.u32 %v1806, 16
        %v2340 = vrot.slane %v2338, 5
        %v2341 = vsel %vm1811, %v2336, %v2340
        %v2342 = vunpack.c.l.b16 %v2331
        %v2343 = vunpack.c.l.b16 %v2341
        %v2344 = vpack.c.b16 %v2343, %v2342
        %v2346 = vsel %vm923, %v2344, 0
        %v2349 = vsel %vm948, %v2317, 0
        %2351 = vmatprep.subr.bf16.mxu0 0
        %2352 = vmatpush1.bf16.msra.mxu0 0
        %2353 = vmatprep.subr.bf16.mxu0 0
        %2354 = vmatpush1.bf16.msra.mxu0 0
        %2355 = vmatprep.subr.bf16.mxu0 0
        %2356 = vmatpush1.bf16.msra.mxu0 0
        %2357 = vmatprep.subr.bf16.mxu0 0
        %2358 = vmatpush1.bf16.msra.mxu0 0
        %2359 = vmatprep.subr.bf16.mxu0 0
        %2360 = vmatpush1.bf16.msra.mxu0 0
        %2361 = vmatprep.subr.bf16.mxu0 0
        %2362 = vmatpush1.bf16.msra.mxu0 0
        %2363 = vmatprep.subr.bf16.mxu0 0
        %2364 = vmatpush1.bf16.msra.mxu0 0
        %2365 = vmatprep.subr.bf16.mxu0 0
        %2366 = vmatpush1.bf16.msra.mxu0 %v2349
        %2367 = vmatprep.subr.bf16.mxu0 0
        %2368 = vmatpush2.bf16.msra.mxu0 0
        %2369 = vmatprep.subr.bf16.mxu0 0
        %2370 = vmatpush2.bf16.msra.mxu0 0
        %2371 = vmatprep.subr.bf16.mxu0 0
        %2372 = vmatpush2.bf16.msra.mxu0 0
        %2373 = vmatprep.subr.bf16.mxu0 0
        %2374 = vmatpush2.bf16.msra.mxu0 0
        %2375 = vmatprep.subr.bf16.mxu0 0
        %2376 = vmatpush2.bf16.msra.mxu0 0
        %2377 = vmatprep.subr.bf16.mxu0 0
        %2378 = vmatpush2.bf16.msra.mxu0 0
        %2379 = vmatprep.subr.bf16.mxu0 0
        %2380 = vmatpush2.bf16.msra.mxu0 0
        %2381 = vmatprep.subr.bf16.mxu0 0
        %2382 = vmatpush2.bf16.msra.mxu0 0
        %2383 = vmatprep.mubr.bf16.mxu0 0
        %2384 = vmatmul.mubr.bf16.gmra.mxu0 %v2035
        %v2385 = vpop.f32.mrf.mxu0
        %v2386 = vadd.f32 0.0, %v2385
        %v2387 = vpop.f32.mrf.mxu0
        %v2388 = vpop.f32.mrf.mxu0
        %v2389 = vadd.f32 0.0, %v2388
        %v2390 = vpop.f32.mrf.mxu0
        %2391 = vmatprep.mubr.bf16.mxu0 0
        %2392 = vmatmul.mubr.bf16.gmra.mxu0 %v2038
        %v2393 = vpop.f32.mrf.mxu0
        %v2394 = vadd.f32 0.0, %v2393
        %v2395 = vpop.f32.mrf.mxu0
        %v2396 = vpop.f32.mrf.mxu0
        %v2397 = vadd.f32 0.0, %v2396
        %v2398 = vpop.f32.mrf.mxu0
        %2399 = vmatprep.mubr.bf16.mxu0 0
        %2400 = vmatmul.mubr.bf16.gmra.mxu0 %v2041
        %v2401 = vpop.f32.mrf.mxu0
        %v2402 = vadd.f32 0.0, %v2401
        %v2403 = vpop.f32.mrf.mxu0
        %v2404 = vpop.f32.mrf.mxu0
        %v2405 = vadd.f32 0.0, %v2404
        %v2406 = vpop.f32.mrf.mxu0
        %2407 = vmatprep.mubr.bf16.mxu0 0
        %2408 = vmatmul.mubr.bf16.gmra.mxu0 %v2044
        %v2409 = vpop.f32.mrf.mxu0
        %v2410 = vadd.f32 0.0, %v2409
        %v2411 = vpop.f32.mrf.mxu0
        %v2412 = vpop.f32.mrf.mxu0
        %v2413 = vadd.f32 0.0, %v2412
        %v2414 = vpop.f32.mrf.mxu0
        %2415 = vmatprep.mubr.bf16.mxu0 0
        %2416 = vmatmul.mubr.bf16.gmra.mxu0 %v2047
        %v2417 = vpop.f32.mrf.mxu0
        %v2418 = vadd.f32 0.0, %v2417
        %v2419 = vpop.f32.mrf.mxu0
        %v2420 = vpop.f32.mrf.mxu0
        %v2421 = vadd.f32 0.0, %v2420
        %v2422 = vpop.f32.mrf.mxu0
        %2423 = vmatprep.mubr.bf16.mxu0 0
        %2424 = vmatmul.mubr.bf16.gmra.mxu0 %v2050
        %v2425 = vpop.f32.mrf.mxu0
        %v2426 = vadd.f32 0.0, %v2425
        %v2427 = vpop.f32.mrf.mxu0
        %v2428 = vpop.f32.mrf.mxu0
        %v2429 = vadd.f32 0.0, %v2428
        %v2430 = vpop.f32.mrf.mxu0
        %2431 = vmatprep.mubr.bf16.mxu0 0
        %2432 = vmatmul.mubr.bf16.gmra.mxu0 %v2198
        %v2433 = vpop.f32.mrf.mxu0
        %v2434 = vadd.f32 0.0, %v2433
        %v2435 = vpop.f32.mrf.mxu0
        %v2436 = vpop.f32.mrf.mxu0
        %v2437 = vadd.f32 0.0, %v2436
        %v2438 = vpop.f32.mrf.mxu0
        %2439 = vmatprep.mubr.bf16.mxu0 0
        %2440 = vmatmul.mubr.bf16.gmra.mxu0 %v2346
        %v2441 = vpop.f32.mrf.mxu0
        %v2442 = vadd.f32 0.0, %v2441
        %v2443 = vpop.f32.mrf.mxu0
        %v2444 = vpop.f32.mrf.mxu0
        %v2445 = vadd.f32 0.0, %v2444
        %v2446 = vpop.f32.mrf.mxu0
        %2447 = vdwg.mxu0
        %v2448 = vadd.f32 %v2300, %v2386
        %v2449 = vadd.f32 %v2301, %v2389
        %v2450 = vadd.f32 %v2302, %v2394
        %v2451 = vadd.f32 %v2303, %v2397
        %v2452 = vadd.f32 %v2304, %v2402
        %v2453 = vadd.f32 %v2305, %v2405
        %v2454 = vadd.f32 %v2306, %v2410
        %v2455 = vadd.f32 %v2307, %v2413
        %v2456 = vadd.f32 %v2308, %v2418
        %v2457 = vadd.f32 %v2309, %v2421
        %v2458 = vadd.f32 %v2310, %v2426
        %v2459 = vadd.f32 %v2311, %v2429
        %v2460 = vadd.f32 %v2312, %v2434
        %v2461 = vadd.f32 %v2313, %v2437
        %v2462 = vadd.f32 %v2314, %v2442
        %v2463 = vadd.f32 %v2315, %v2445
        %v2464 = vld [vmem:[%s2] sm:$0x1]
        %v2466 = vlaneseq
        %v2467 = vshrl.u32 %v2466, 7
        %v2468 = vsub.s32 0, %v2467
        %v2469 = vrot.slane %v2464, %v2468
        %v2471 = vadd.f32 %v2448, %v2469
        %v2472 = vadd.f32 %v2449, %v2469
        %v2473 = vadd.f32 %v2450, %v2469
        %v2474 = vadd.f32 %v2451, %v2469
        %v2475 = vadd.f32 %v2452, %v2469
        %v2476 = vadd.f32 %v2453, %v2469
        %v2477 = vadd.f32 %v2454, %v2469
        %v2478 = vadd.f32 %v2455, %v2469
        %v2479 = vadd.f32 %v2456, %v2469
        %v2480 = vadd.f32 %v2457, %v2469
        %v2481 = vadd.f32 %v2458, %v2469
        %v2482 = vadd.f32 %v2459, %v2469
        %v2483 = vadd.f32 %v2460, %v2469
        %v2484 = vadd.f32 %v2461, %v2469
        %v2485 = vadd.f32 %v2462, %v2469
        %v2486 = vadd.f32 %v2463, %v2469
        %vm2487 = vcmp.ge.f32.partialorder %v2471, 0.0
        %vm2488 = vcmp.ge.f32.partialorder %v2472, 0.0
        %vm2489 = vcmp.ge.f32.partialorder %v2473, 0.0
        %vm2490 = vcmp.ge.f32.partialorder %v2474, 0.0
        %vm2491 = vcmp.ge.f32.partialorder %v2475, 0.0
        %vm2492 = vcmp.ge.f32.partialorder %v2476, 0.0
        %vm2493 = vcmp.ge.f32.partialorder %v2477, 0.0
        %vm2494 = vcmp.ge.f32.partialorder %v2478, 0.0
        %vm2495 = vcmp.ge.f32.partialorder %v2479, 0.0
        %vm2496 = vcmp.ge.f32.partialorder %v2480, 0.0
        %vm2497 = vcmp.ge.f32.partialorder %v2481, 0.0
        %vm2498 = vcmp.ge.f32.partialorder %v2482, 0.0
        %vm2499 = vcmp.ge.f32.partialorder %v2483, 0.0
        %vm2500 = vcmp.ge.f32.partialorder %v2484, 0.0
        %vm2501 = vcmp.ge.f32.partialorder %v2485, 0.0
        %vm2502 = vcmp.ge.f32.partialorder %v2486, 0.0
        %v2503 = vstv %s254
        %v2504 = vmul.f32 %v2503, %v2471
        %v2505 = vmul.f32 %v2503, %v2472
        %v2506 = vmul.f32 %v2503, %v2473
        %v2507 = vmul.f32 %v2503, %v2474
        %v2508 = vmul.f32 %v2503, %v2475
        %v2509 = vmul.f32 %v2503, %v2476
        %v2510 = vmul.f32 %v2503, %v2477
        %v2511 = vmul.f32 %v2503, %v2478
        %v2512 = vmul.f32 %v2503, %v2479
        %v2513 = vmul.f32 %v2503, %v2480
        %v2514 = vmul.f32 %v2503, %v2481
        %v2515 = vmul.f32 %v2503, %v2482
        %v2516 = vmul.f32 %v2503, %v2483
        %v2517 = vmul.f32 %v2503, %v2484
        %v2518 = vmul.f32 %v2503, %v2485
        %v2519 = vmul.f32 %v2503, %v2486
        %v2520 = vsel %vm2487, %v2471, %v2504
        %v2521 = vsel %vm2488, %v2472, %v2505
        %v2522 = vsel %vm2489, %v2473, %v2506
        %v2523 = vsel %vm2490, %v2474, %v2507
        %v2524 = vsel %vm2491, %v2475, %v2508
        %v2525 = vsel %vm2492, %v2476, %v2509
        %v2526 = vsel %vm2493, %v2477, %v2510
        %v2527 = vsel %vm2494, %v2478, %v2511
        %v2528 = vsel %vm2495, %v2479, %v2512
        %v2529 = vsel %vm2496, %v2480, %v2513
        %v2530 = vsel %vm2497, %v2481, %v2514
        %v2531 = vsel %vm2498, %v2482, %v2515
        %v2532 = vsel %vm2499, %v2483, %v2516
        %v2533 = vsel %vm2500, %v2484, %v2517
        %v2534 = vsel %vm2501, %v2485, %v2518
        %v2535 = vsel %vm2502, %v2486, %v2519
        %v2536 = vpack.c.bf16 %v2521, %v2520
        %v2537 = vpack.c.bf16 %v2523, %v2522
        %v2538 = vpack.c.bf16 %v2525, %v2524
        %v2539 = vpack.c.bf16 %v2527, %v2526
        %v2540 = vpack.c.bf16 %v2529, %v2528
        %v2541 = vpack.c.bf16 %v2531, %v2530
        %v2542 = vpack.c.bf16 %v2533, %v2532
        %v2543 = vpack.c.bf16 %v2535, %v2534
        %s2544 = sadd.s32 %s684, 1
        %v2553 = vunpack.c.l.b16 %v2536
        %v2554 = vunpack.c.h.b16 %v2536
        %v2555 = vunpack.c.l.b16 %v2537
        %v2556 = vunpack.c.h.b16 %v2537
        %v2557 = vunpack.c.l.b16 %v2538
        %v2558 = vunpack.c.h.b16 %v2538
        %v2559 = vunpack.c.l.b16 %v2539
        %v2560 = vunpack.c.h.b16 %v2539
        %v2561 = vunpack.c.l.b16 %v2540
        %v2562 = vunpack.c.h.b16 %v2540
        %v2563 = vunpack.c.l.b16 %v2541
        %v2564 = vunpack.c.h.b16 %v2541
        %v2565 = vunpack.c.l.b16 %v2542
        %v2566 = vunpack.c.h.b16 %v2542
        %v2567 = vunpack.c.l.b16 %v2543
        %v2568 = vunpack.c.h.b16 %v2543
        %v2569 = vpack.c.b16 %v2553, %v2553
        %v2570 = vpack.c.b16 %v2554, %v2554
        %v2571 = vpack.c.b16 %v2555, %v2555
        %v2572 = vpack.c.b16 %v2556, %v2556
        %v2573 = vpack.c.b16 %v2557, %v2557
        %v2574 = vpack.c.b16 %v2558, %v2558
        %v2575 = vpack.c.b16 %v2559, %v2559
        %v2576 = vpack.c.b16 %v2560, %v2560
        %v2577 = vpack.c.b16 %v2561, %v2561
        %v2578 = vpack.c.b16 %v2562, %v2562
        %v2579 = vpack.c.b16 %v2563, %v2563
        %v2580 = vpack.c.b16 %v2564, %v2564
        %v2581 = vpack.c.b16 %v2565, %v2565
        %v2582 = vpack.c.b16 %v2566, %v2566
        %v2583 = vpack.c.b16 %v2567, %v2567
        %v2584 = vpack.c.b16 %v2568, %v2568
        %s2601 = smul.u32 %s2544, 5
        %s2602 = smul.addr %s2601, 4
        %s2603 = scalar_lea.vmem [#allocation3], %s2602
        %2604 = vst.msk [vmem:[%s2603 + $0x8] sm:$0xf] %vm255, %v2569
        %2605 = vst.msk [vmem:[%s2603 + $0xc] sm:$0xf] %vm255, %v2570
        %2606 = vst.msk [vmem:[%s2603 + $0x1c] sm:$0xf] %vm255, %v2571
        %2607 = vst.msk [vmem:[%s2603 + $0x20] sm:$0xf] %vm255, %v2572
        %2608 = vst.msk [vmem:[%s2603 + $0x30] sm:$0xf] %vm255, %v2573
        %2609 = vst.msk [vmem:[%s2603 + $0x34] sm:$0xf] %vm255, %v2574
        %2610 = vst.msk [vmem:[%s2603 + $0x44] sm:$0xf] %vm255, %v2575
        %2611 = vst.msk [vmem:[%s2603 + $0x48] sm:$0xf] %vm255, %v2576
        %2612 = vst.msk [vmem:[%s2603 + $0x58] sm:$0xf] %vm255, %v2577
        %2613 = vst.msk [vmem:[%s2603 + $0x5c] sm:$0xf] %vm255, %v2578
        %2614 = vst.msk [vmem:[%s2603 + $0x6c] sm:$0xf] %vm255, %v2579
        %2615 = vst.msk [vmem:[%s2603 + $0x70] sm:$0xf] %vm255, %v2580
        %2616 = vst.msk [vmem:[%s2603 + $0x80] sm:$0xf] %vm255, %v2581
        %2617 = vst.msk [vmem:[%s2603 + $0x84] sm:$0xf] %vm255, %v2582
        %2618 = vst.msk [vmem:[%s2603 + $0x94] sm:$0xf] %vm255, %v2583
        %2619 = vst.msk [vmem:[%s2603 + $0x98] sm:$0xf] %vm255, %v2584
      $region49: #{tpu_custom_call.1} parent=43 // loop_footer
        %s683 = sadd.s32 1, %s679
      $region50: #{tpu_custom_call.1} parent=43 // loop_footer_branch
        %678 = sbr.rel target = $region46
      $region51: #{tpu_custom_call.1} parent=43 // loop_exit
        _
      loop: start=0, step=1, limit=2
      $region52: #{tpu_custom_call.1} parent=43 // loop_pre_header
        _
      $region53: #{tpu_custom_call.1} parent=43 // loop_header
        %s2621 = sphi 0, %s2625
        %p2622 = scmp.ge.s32.totalorder %s2621, 2
      $region54: #{tpu_custom_call.1} parent=43 // loop_header_branch
        %2624 = sbr.rel (%p2622) target = $region58
      $region55: #{tpu_custom_call.1} parent=43 // loop_body
        %s2626 = smul.u32 %s2621, 8
        %s2627 = smul.u32 %s2626, 5
        %s2628 = smul.addr %s2627, 4
        %s2629 = scalar_lea.vmem [#allocation3], %s2628
        %v2630 = vld [vmem:[%s2629 + $0x4] sm:$0x8]
        %v2631 = vld [vmem:[%s2629 + $0x8] sm:$0xf]
        %v2632 = vld [vmem:[%s2629 + $0xc] sm:$0xf]
        %v2633 = vld [vmem:[%s2629 + $0x18] sm:$0x8]
        %v2634 = vld [vmem:[%s2629 + $0x1c] sm:$0xf]
        %v2635 = vld [vmem:[%s2629 + $0x20] sm:$0xf]
        %v2636 = vld [vmem:[%s2629 + $0x2c] sm:$0x8]
        %v2637 = vld [vmem:[%s2629 + $0x30] sm:$0xf]
        %v2638 = vld [vmem:[%s2629 + $0x34] sm:$0xf]
        %v2639 = vld [vmem:[%s2629 + $0x40] sm:$0x8]
        %v2640 = vld [vmem:[%s2629 + $0x44] sm:$0xf]
        %v2641 = vld [vmem:[%s2629 + $0x48] sm:$0xf]
        %v2642 = vld [vmem:[%s2629 + $0x54] sm:$0x8]
        %v2643 = vld [vmem:[%s2629 + $0x58] sm:$0xf]
        %v2644 = vld [vmem:[%s2629 + $0x5c] sm:$0xf]
        %v2645 = vld [vmem:[%s2629 + $0x68] sm:$0x8]
        %v2646 = vld [vmem:[%s2629 + $0x6c] sm:$0xf]
        %v2647 = vld [vmem:[%s2629 + $0x70] sm:$0xf]
        %v2648 = vld [vmem:[%s2629 + $0x7c] sm:$0x8]
        %v2649 = vld [vmem:[%s2629 + $0x80] sm:$0xf]
        %v2650 = vld [vmem:[%s2629 + $0x84] sm:$0xf]
        %v2651 = vld [vmem:[%s2629 + $0x90] sm:$0x8]
        %v2652 = vld [vmem:[%s2629 + $0x94] sm:$0xf]
        %v2653 = vld [vmem:[%s2629 + $0x98] sm:$0xf]
        %v2654 = vld [vmem:[%s2629 + $0xa4] sm:$0x8]
        %v2655 = vld [vmem:[%s2629 + $0xa8] sm:$0xf]
        %v2656 = vld [vmem:[%s2629 + $0xac] sm:$0xf]
        %v2657 = vld [vmem:[%s2629 + $0xb8] sm:$0x8]
        %v2658 = vld [vmem:[%s2629 + $0xbc] sm:$0xf]
        %v2659 = vld [vmem:[%s2629 + $0xc0] sm:$0xf]
        %v2660 = vld [vmem:[%s3] sm:$0x3]
        %s2661 = scalar_lea.vmem %s3, 6
        %v2662 = vld [vmem:[%s2661] sm:$0x3]
        %vm2663 = vsmask.f32 4368
        %vm2664 = vmor %vm261, %vm2663
        %v2666 = vshrl.u32 %v2633, 16
        %v2668 = vrot.slane %v2666, 7
        %v2669 = vrot.slane %v2668, 4
        %v2671 = vshrl.u32 %v2634, 16
        %v2673 = vrot.slane %v2671, 7
        %v2674 = vshll.u32 %v2634, 16
        %v2676 = vor.u32 %v2673, %v2674
        %v2677 = vsel %vm2664, %v2669, %v2676
        %v2678 = vrot.slane %v2673, 4
        %v2680 = vshrl.u32 %v2635, 16
        %v2682 = vrot.slane %v2680, 7
        %v2683 = vshll.u32 %v2635, 16
        %v2685 = vor.u32 %v2682, %v2683
        %v2686 = vsel %vm2664, %v2678, %v2685
        %v2688 = vshrl.u32 %v2636, 16
        %v2690 = vrot.slane %v2688, 7
        %v2691 = vrot.slane %v2690, 4
        %v2693 = vshrl.u32 %v2637, 16
        %v2695 = vrot.slane %v2693, 7
        %v2696 = vshll.u32 %v2637, 16
        %v2698 = vor.u32 %v2695, %v2696
        %v2699 = vsel %vm2664, %v2691, %v2698
        %v2700 = vrot.slane %v2695, 4
        %v2702 = vshrl.u32 %v2638, 16
        %v2704 = vrot.slane %v2702, 7
        %v2705 = vshll.u32 %v2638, 16
        %v2707 = vor.u32 %v2704, %v2705
        %v2708 = vsel %vm2664, %v2700, %v2707
        %v2710 = vshrl.u32 %v2639, 16
        %v2712 = vrot.slane %v2710, 7
        %v2713 = vrot.slane %v2712, 4
        %v2715 = vshrl.u32 %v2640, 16
        %v2717 = vrot.slane %v2715, 7
        %v2718 = vshll.u32 %v2640, 16
        %v2720 = vor.u32 %v2717, %v2718
        %v2721 = vsel %vm2664, %v2713, %v2720
        %v2722 = vrot.slane %v2717, 4
        %v2724 = vshrl.u32 %v2641, 16
        %v2726 = vrot.slane %v2724, 7
        %v2727 = vshll.u32 %v2641, 16
        %v2729 = vor.u32 %v2726, %v2727
        %v2730 = vsel %vm2664, %v2722, %v2729
        %v2732 = vshrl.u32 %v2642, 16
        %v2734 = vrot.slane %v2732, 7
        %v2735 = vrot.slane %v2734, 4
        %v2737 = vshrl.u32 %v2643, 16
        %v2739 = vrot.slane %v2737, 7
        %v2740 = vshll.u32 %v2643, 16
        %v2742 = vor.u32 %v2739, %v2740
        %v2743 = vsel %vm2664, %v2735, %v2742
        %v2744 = vrot.slane %v2739, 4
        %v2746 = vshrl.u32 %v2644, 16
        %v2748 = vrot.slane %v2746, 7
        %v2749 = vshll.u32 %v2644, 16
        %v2751 = vor.u32 %v2748, %v2749
        %v2752 = vsel %vm2664, %v2744, %v2751
        %v2754 = vshrl.u32 %v2645, 16
        %v2756 = vrot.slane %v2754, 7
        %v2757 = vrot.slane %v2756, 4
        %v2759 = vshrl.u32 %v2646, 16
        %v2761 = vrot.slane %v2759, 7
        %v2762 = vshll.u32 %v2646, 16
        %v2764 = vor.u32 %v2761, %v2762
        %v2765 = vsel %vm2664, %v2757, %v2764
        %v2766 = vrot.slane %v2761, 4
        %v2768 = vshrl.u32 %v2647, 16
        %v2770 = vrot.slane %v2768, 7
        %v2771 = vshll.u32 %v2647, 16
        %v2773 = vor.u32 %v2770, %v2771
        %v2774 = vsel %vm2664, %v2766, %v2773
        %v2776 = vshrl.u32 %v2648, 16
        %v2778 = vrot.slane %v2776, 7
        %v2779 = vrot.slane %v2778, 4
        %v2781 = vshrl.u32 %v2649, 16
        %v2783 = vrot.slane %v2781, 7
        %v2784 = vshll.u32 %v2649, 16
        %v2786 = vor.u32 %v2783, %v2784
        %v2787 = vsel %vm2664, %v2779, %v2786
        %v2788 = vrot.slane %v2783, 4
        %v2790 = vshrl.u32 %v2650, 16
        %v2792 = vrot.slane %v2790, 7
        %v2793 = vshll.u32 %v2650, 16
        %v2795 = vor.u32 %v2792, %v2793
        %v2796 = vsel %vm2664, %v2788, %v2795
        %v2798 = vshrl.u32 %v2651, 16
        %v2800 = vrot.slane %v2798, 7
        %v2801 = vrot.slane %v2800, 4
        %v2803 = vshrl.u32 %v2652, 16
        %v2805 = vrot.slane %v2803, 7
        %v2806 = vshll.u32 %v2652, 16
        %v2808 = vor.u32 %v2805, %v2806
        %v2809 = vsel %vm2664, %v2801, %v2808
        %v2810 = vrot.slane %v2805, 4
        %v2812 = vshrl.u32 %v2653, 16
        %v2814 = vrot.slane %v2812, 7
        %v2815 = vshll.u32 %v2653, 16
        %v2817 = vor.u32 %v2814, %v2815
        %v2818 = vsel %vm2664, %v2810, %v2817
        %v2820 = vshrl.u32 %v2654, 16
        %v2822 = vrot.slane %v2820, 7
        %v2823 = vrot.slane %v2822, 4
        %v2825 = vshrl.u32 %v2655, 16
        %v2827 = vrot.slane %v2825, 7
        %v2828 = vshll.u32 %v2655, 16
        %v2830 = vor.u32 %v2827, %v2828
        %v2831 = vsel %vm2664, %v2823, %v2830
        %v2832 = vrot.slane %v2827, 4
        %v2834 = vshrl.u32 %v2656, 16
        %v2836 = vrot.slane %v2834, 7
        %v2837 = vshll.u32 %v2656, 16
        %v2839 = vor.u32 %v2836, %v2837
        %v2840 = vsel %vm2664, %v2832, %v2839
        %v2841 = vunpack.c.l.b16 %v2677
        %v2842 = vunpack.c.l.b16 %v2686
        %v2843 = vunpack.c.l.b16 %v2699
        %v2844 = vunpack.c.l.b16 %v2708
        %v2845 = vunpack.c.l.b16 %v2721
        %v2846 = vunpack.c.l.b16 %v2730
        %v2847 = vunpack.c.l.b16 %v2743
        %v2848 = vunpack.c.l.b16 %v2752
        %v2849 = vunpack.c.l.b16 %v2765
        %v2850 = vunpack.c.l.b16 %v2774
        %v2851 = vunpack.c.l.b16 %v2787
        %v2852 = vunpack.c.l.b16 %v2796
        %v2853 = vunpack.c.l.b16 %v2809
        %v2854 = vunpack.c.l.b16 %v2818
        %v2855 = vunpack.c.l.b16 %v2831
        %v2856 = vunpack.c.l.b16 %v2840
        %v2857 = vpack.c.b16 %v2842, %v2841
        %v2858 = vpack.c.b16 %v2844, %v2843
        %v2859 = vpack.c.b16 %v2846, %v2845
        %v2860 = vpack.c.b16 %v2848, %v2847
        %v2861 = vpack.c.b16 %v2850, %v2849
        %v2862 = vpack.c.b16 %v2852, %v2851
        %v2863 = vpack.c.b16 %v2854, %v2853
        %v2864 = vpack.c.b16 %v2856, %v2855
        %vm2865 = vcmask 31744
        %v2867 = vsel %vm2865, %v2857, 0
        %v2870 = vsel %vm2865, %v2858, 0
        %v2873 = vsel %vm2865, %v2859, 0
        %v2876 = vsel %vm2865, %v2860, 0
        %v2879 = vsel %vm2865, %v2861, 0
        %v2882 = vsel %vm2865, %v2862, 0
        %v2885 = vsel %vm2865, %v2863, 0
        %v2888 = vsel %vm2865, %v2864, 0
        %vm2890 = vcmask 1041408
        %v2892 = vsel %vm2890, %v2662, 0
        %2894 = vmatprep.subr.bf16.mxu0 0
        %2895 = vmatpush1.bf16.msra.mxu0 0
        %2896 = vmatprep.subr.bf16.mxu0 0
        %2897 = vmatpush1.bf16.msra.mxu0 0
        %2898 = vmatprep.subr.bf16.mxu0 0
        %2899 = vmatpush1.bf16.msra.mxu0 0
        %2900 = vmatprep.subr.bf16.mxu0 0
        %2901 = vmatpush1.bf16.msra.mxu0 0
        %2902 = vmatprep.subr.bf16.mxu0 0
        %2903 = vmatpush1.bf16.msra.mxu0 0
        %2904 = vmatprep.subr.bf16.mxu0 0
        %2905 = vmatpush1.bf16.msra.mxu0 0
        %2906 = vmatprep.subr.bf16.mxu0 0
        %2907 = vmatpush1.bf16.msra.mxu0 0
        %2908 = vmatprep.subr.bf16.mxu0 0
        %2909 = vmatpush1.bf16.msra.mxu0 %v2892
        %2910 = vmatprep.subr.bf16.mxu0 0
        %2911 = vmatpush2.bf16.msra.mxu0 0
        %2912 = vmatprep.subr.bf16.mxu0 0
        %2913 = vmatpush2.bf16.msra.mxu0 0
        %2914 = vmatprep.subr.bf16.mxu0 0
        %2915 = vmatpush2.bf16.msra.mxu0 0
        %2916 = vmatprep.subr.bf16.mxu0 0
        %2917 = vmatpush2.bf16.msra.mxu0 0
        %2918 = vmatprep.subr.bf16.mxu0 0
        %2919 = vmatpush2.bf16.msra.mxu0 0
        %2920 = vmatprep.subr.bf16.mxu0 0
        %2921 = vmatpush2.bf16.msra.mxu0 0
        %2922 = vmatprep.subr.bf16.mxu0 0
        %2923 = vmatpush2.bf16.msra.mxu0 0
        %2924 = vmatprep.subr.bf16.mxu0 0
        %2925 = vmatpush2.bf16.msra.mxu0 0
        %2926 = vmatprep.mubr.bf16.mxu0 0
        %2927 = vmatmul.mubr.bf16.gmra.mxu0 %v2867
        %v2928 = vpop.f32.mrf.mxu0
        %v2929 = vadd.f32 0.0, %v2928
        %v2930 = vpop.f32.mrf.mxu0
        %v2931 = vpop.f32.mrf.mxu0
        %v2932 = vadd.f32 0.0, %v2931
        %v2933 = vpop.f32.mrf.mxu0
        %2934 = vmatprep.mubr.bf16.mxu0 0
        %2935 = vmatmul.mubr.bf16.gmra.mxu0 %v2870
        %v2936 = vpop.f32.mrf.mxu0
        %v2937 = vadd.f32 0.0, %v2936
        %v2938 = vpop.f32.mrf.mxu0
        %v2939 = vpop.f32.mrf.mxu0
        %v2940 = vadd.f32 0.0, %v2939
        %v2941 = vpop.f32.mrf.mxu0
        %2942 = vmatprep.mubr.bf16.mxu0 0
        %2943 = vmatmul.mubr.bf16.gmra.mxu0 %v2873
        %v2944 = vpop.f32.mrf.mxu0
        %v2945 = vadd.f32 0.0, %v2944
        %v2946 = vpop.f32.mrf.mxu0
        %v2947 = vpop.f32.mrf.mxu0
        %v2948 = vadd.f32 0.0, %v2947
        %v2949 = vpop.f32.mrf.mxu0
        %2950 = vmatprep.mubr.bf16.mxu0 0
        %2951 = vmatmul.mubr.bf16.gmra.mxu0 %v2876
        %v2952 = vpop.f32.mrf.mxu0
        %v2953 = vadd.f32 0.0, %v2952
        %v2954 = vpop.f32.mrf.mxu0
        %v2955 = vpop.f32.mrf.mxu0
        %v2956 = vadd.f32 0.0, %v2955
        %v2957 = vpop.f32.mrf.mxu0
        %2958 = vmatprep.mubr.bf16.mxu0 0
        %2959 = vmatmul.mubr.bf16.gmra.mxu0 %v2879
        %v2960 = vpop.f32.mrf.mxu0
        %v2961 = vadd.f32 0.0, %v2960
        %v2962 = vpop.f32.mrf.mxu0
        %v2963 = vpop.f32.mrf.mxu0
        %v2964 = vadd.f32 0.0, %v2963
        %v2965 = vpop.f32.mrf.mxu0
        %2966 = vmatprep.mubr.bf16.mxu0 0
        %2967 = vmatmul.mubr.bf16.gmra.mxu0 %v2882
        %v2968 = vpop.f32.mrf.mxu0
        %v2969 = vadd.f32 0.0, %v2968
        %v2970 = vpop.f32.mrf.mxu0
        %v2971 = vpop.f32.mrf.mxu0
        %v2972 = vadd.f32 0.0, %v2971
        %v2973 = vpop.f32.mrf.mxu0
        %2974 = vmatprep.mubr.bf16.mxu0 0
        %2975 = vmatmul.mubr.bf16.gmra.mxu0 %v2885
        %v2976 = vpop.f32.mrf.mxu0
        %v2977 = vadd.f32 0.0, %v2976
        %v2978 = vpop.f32.mrf.mxu0
        %v2979 = vpop.f32.mrf.mxu0
        %v2980 = vadd.f32 0.0, %v2979
        %v2981 = vpop.f32.mrf.mxu0
        %2982 = vmatprep.mubr.bf16.mxu0 0
        %2983 = vmatmul.mubr.bf16.gmra.mxu0 %v2888
        %v2984 = vpop.f32.mrf.mxu0
        %v2985 = vadd.f32 0.0, %v2984
        %v2986 = vpop.f32.mrf.mxu0
        %v2987 = vpop.f32.mrf.mxu0
        %v2988 = vadd.f32 0.0, %v2987
        %v2989 = vpop.f32.mrf.mxu0
        %2990 = vdwg.mxu0
        %v2992 = vshrl.u32 %v2630, 16
        %v2994 = vrot.slane %v2992, 7
        %v2995 = vrot.slane %v2994, 4
        %v2997 = vshrl.u32 %v2631, 16
        %v2999 = vrot.slane %v2997, 7
        %v3000 = vshll.u32 %v2631, 16
        %v3002 = vor.u32 %v2999, %v3000
        %v3003 = vsel %vm2664, %v2995, %v3002
        %v3004 = vrot.slane %v2999, 4
        %v3006 = vshrl.u32 %v2632, 16
        %v3008 = vrot.slane %v3006, 7
        %v3009 = vshll.u32 %v2632, 16
        %v3011 = vor.u32 %v3008, %v3009
        %v3012 = vsel %vm2664, %v3004, %v3011
        %v3013 = vunpack.c.l.b16 %v3003
        %v3014 = vunpack.c.l.b16 %v3012
        %v3015 = vpack.c.b16 %v3014, %v3013
        %v3017 = vsel %vm2865, %v3015, 0
        %v3020 = vsel %vm2890, %v2660, 0
        %3022 = vmatprep.subr.bf16.mxu0 0
        %3023 = vmatpush1.bf16.msra.mxu0 0
        %3024 = vmatprep.subr.bf16.mxu0 0
        %3025 = vmatpush1.bf16.msra.mxu0 0
        %3026 = vmatprep.subr.bf16.mxu0 0
        %3027 = vmatpush1.bf16.msra.mxu0 0
        %3028 = vmatprep.subr.bf16.mxu0 0
        %3029 = vmatpush1.bf16.msra.mxu0 0
        %3030 = vmatprep.subr.bf16.mxu0 0
        %3031 = vmatpush1.bf16.msra.mxu0 0
        %3032 = vmatprep.subr.bf16.mxu0 0
        %3033 = vmatpush1.bf16.msra.mxu0 0
        %3034 = vmatprep.subr.bf16.mxu0 0
        %3035 = vmatpush1.bf16.msra.mxu0 0
        %3036 = vmatprep.subr.bf16.mxu0 0
        %3037 = vmatpush1.bf16.msra.mxu0 %v3020
        %3038 = vmatprep.subr.bf16.mxu0 0
        %3039 = vmatpush2.bf16.msra.mxu0 0
        %3040 = vmatprep.subr.bf16.mxu0 0
        %3041 = vmatpush2.bf16.msra.mxu0 0
        %3042 = vmatprep.subr.bf16.mxu0 0
        %3043 = vmatpush2.bf16.msra.mxu0 0
        %3044 = vmatprep.subr.bf16.mxu0 0
        %3045 = vmatpush2.bf16.msra.mxu0 0
        %3046 = vmatprep.subr.bf16.mxu0 0
        %3047 = vmatpush2.bf16.msra.mxu0 0
        %3048 = vmatprep.subr.bf16.mxu0 0
        %3049 = vmatpush2.bf16.msra.mxu0 0
        %3050 = vmatprep.subr.bf16.mxu0 0
        %3051 = vmatpush2.bf16.msra.mxu0 0
        %3052 = vmatprep.subr.bf16.mxu0 0
        %3053 = vmatpush2.bf16.msra.mxu0 0
        %3054 = vmatprep.mubr.bf16.mxu0 0
        %3055 = vmatmul.mubr.bf16.gmra.mxu0 %v3017
        %v3056 = vpop.f32.mrf.mxu0
        %v3057 = vadd.f32 %v2929, %v3056
        %v3058 = vpop.f32.mrf.mxu0
        %v3059 = vpop.f32.mrf.mxu0
        %v3060 = vadd.f32 %v2932, %v3059
        %v3061 = vpop.f32.mrf.mxu0
        %3062 = vmatprep.mubr.bf16.mxu0 0
        %3063 = vmatmul.mubr.bf16.gmra.mxu0 %v2867
        %v3064 = vpop.f32.mrf.mxu0
        %v3065 = vadd.f32 %v2937, %v3064
        %v3066 = vpop.f32.mrf.mxu0
        %v3067 = vpop.f32.mrf.mxu0
        %v3068 = vadd.f32 %v2940, %v3067
        %v3069 = vpop.f32.mrf.mxu0
        %3070 = vmatprep.mubr.bf16.mxu0 0
        %3071 = vmatmul.mubr.bf16.gmra.mxu0 %v2870
        %v3072 = vpop.f32.mrf.mxu0
        %v3073 = vadd.f32 %v2945, %v3072
        %v3074 = vpop.f32.mrf.mxu0
        %v3075 = vpop.f32.mrf.mxu0
        %v3076 = vadd.f32 %v2948, %v3075
        %v3077 = vpop.f32.mrf.mxu0
        %3078 = vmatprep.mubr.bf16.mxu0 0
        %3079 = vmatmul.mubr.bf16.gmra.mxu0 %v2873
        %v3080 = vpop.f32.mrf.mxu0
        %v3081 = vadd.f32 %v2953, %v3080
        %v3082 = vpop.f32.mrf.mxu0
        %v3083 = vpop.f32.mrf.mxu0
        %v3084 = vadd.f32 %v2956, %v3083
        %v3085 = vpop.f32.mrf.mxu0
        %3086 = vmatprep.mubr.bf16.mxu0 0
        %3087 = vmatmul.mubr.bf16.gmra.mxu0 %v2876
        %v3088 = vpop.f32.mrf.mxu0
        %v3089 = vadd.f32 %v2961, %v3088
        %v3090 = vpop.f32.mrf.mxu0
        %v3091 = vpop.f32.mrf.mxu0
        %v3092 = vadd.f32 %v2964, %v3091
        %v3093 = vpop.f32.mrf.mxu0
        %3094 = vmatprep.mubr.bf16.mxu0 0
        %3095 = vmatmul.mubr.bf16.gmra.mxu0 %v2879
        %v3096 = vpop.f32.mrf.mxu0
        %v3097 = vadd.f32 %v2969, %v3096
        %v3098 = vpop.f32.mrf.mxu0
        %v3099 = vpop.f32.mrf.mxu0
        %v3100 = vadd.f32 %v2972, %v3099
        %v3101 = vpop.f32.mrf.mxu0
        %3102 = vmatprep.mubr.bf16.mxu0 0
        %3103 = vmatmul.mubr.bf16.gmra.mxu0 %v2882
        %v3104 = vpop.f32.mrf.mxu0
        %v3105 = vadd.f32 %v2977, %v3104
        %v3106 = vpop.f32.mrf.mxu0
        %v3107 = vpop.f32.mrf.mxu0
        %v3108 = vadd.f32 %v2980, %v3107
        %v3109 = vpop.f32.mrf.mxu0
        %3110 = vmatprep.mubr.bf16.mxu0 0
        %3111 = vmatmul.mubr.bf16.gmra.mxu0 %v2885
        %v3112 = vpop.f32.mrf.mxu0
        %v3113 = vadd.f32 %v2985, %v3112
        %v3114 = vpop.f32.mrf.mxu0
        %v3115 = vpop.f32.mrf.mxu0
        %v3116 = vadd.f32 %v2988, %v3115
        %v3117 = vpop.f32.mrf.mxu0
        %3118 = vdwg.mxu0
        %s3119 = scalar_lea.vmem %s3, 12
        %v3120 = vld [vmem:[%s3119] sm:$0x3]
        %v3122 = vshrl.u32 %v2657, 16
        %v3124 = vrot.slane %v3122, 7
        %v3125 = vrot.slane %v3124, 4
        %v3127 = vshrl.u32 %v2658, 16
        %v3129 = vrot.slane %v3127, 7
        %v3130 = vshll.u32 %v2658, 16
        %v3132 = vor.u32 %v3129, %v3130
        %v3133 = vsel %vm2664, %v3125, %v3132
        %v3134 = vrot.slane %v3129, 4
        %v3136 = vshrl.u32 %v2659, 16
        %v3138 = vrot.slane %v3136, 7
        %v3139 = vshll.u32 %v2659, 16
        %v3141 = vor.u32 %v3138, %v3139
        %v3142 = vsel %vm2664, %v3134, %v3141
        %v3143 = vunpack.c.l.b16 %v3133
        %v3144 = vunpack.c.l.b16 %v3142
        %v3145 = vpack.c.b16 %v3144, %v3143
        %v3147 = vsel %vm2865, %v3145, 0
        %v3150 = vsel %vm2890, %v3120, 0
        %3152 = vmatprep.subr.bf16.mxu0 0
        %3153 = vmatpush1.bf16.msra.mxu0 0
        %3154 = vmatprep.subr.bf16.mxu0 0
        %3155 = vmatpush1.bf16.msra.mxu0 0
        %3156 = vmatprep.subr.bf16.mxu0 0
        %3157 = vmatpush1.bf16.msra.mxu0 0
        %3158 = vmatprep.subr.bf16.mxu0 0
        %3159 = vmatpush1.bf16.msra.mxu0 0
        %3160 = vmatprep.subr.bf16.mxu0 0
        %3161 = vmatpush1.bf16.msra.mxu0 0
        %3162 = vmatprep.subr.bf16.mxu0 0
        %3163 = vmatpush1.bf16.msra.mxu0 0
        %3164 = vmatprep.subr.bf16.mxu0 0
        %3165 = vmatpush1.bf16.msra.mxu0 0
        %3166 = vmatprep.subr.bf16.mxu0 0
        %3167 = vmatpush1.bf16.msra.mxu0 %v3150
        %3168 = vmatprep.subr.bf16.mxu0 0
        %3169 = vmatpush2.bf16.msra.mxu0 0
        %3170 = vmatprep.subr.bf16.mxu0 0
        %3171 = vmatpush2.bf16.msra.mxu0 0
        %3172 = vmatprep.subr.bf16.mxu0 0
        %3173 = vmatpush2.bf16.msra.mxu0 0
        %3174 = vmatprep.subr.bf16.mxu0 0
        %3175 = vmatpush2.bf16.msra.mxu0 0
        %3176 = vmatprep.subr.bf16.mxu0 0
        %3177 = vmatpush2.bf16.msra.mxu0 0
        %3178 = vmatprep.subr.bf16.mxu0 0
        %3179 = vmatpush2.bf16.msra.mxu0 0
        %3180 = vmatprep.subr.bf16.mxu0 0
        %3181 = vmatpush2.bf16.msra.mxu0 0
        %3182 = vmatprep.subr.bf16.mxu0 0
        %3183 = vmatpush2.bf16.msra.mxu0 0
        %3184 = vmatprep.mubr.bf16.mxu0 0
        %3185 = vmatmul.mubr.bf16.gmra.mxu0 %v2870
        %v3186 = vpop.f32.mrf.mxu0
        %v3187 = vadd.f32 0.0, %v3186
        %v3188 = vpop.f32.mrf.mxu0
        %v3189 = vpop.f32.mrf.mxu0
        %v3190 = vadd.f32 0.0, %v3189
        %v3191 = vpop.f32.mrf.mxu0
        %3192 = vmatprep.mubr.bf16.mxu0 0
        %3193 = vmatmul.mubr.bf16.gmra.mxu0 %v2873
        %v3194 = vpop.f32.mrf.mxu0
        %v3195 = vadd.f32 0.0, %v3194
        %v3196 = vpop.f32.mrf.mxu0
        %v3197 = vpop.f32.mrf.mxu0
        %v3198 = vadd.f32 0.0, %v3197
        %v3199 = vpop.f32.mrf.mxu0
        %3200 = vmatprep.mubr.bf16.mxu0 0
        %3201 = vmatmul.mubr.bf16.gmra.mxu0 %v2876
        %v3202 = vpop.f32.mrf.mxu0
        %v3203 = vadd.f32 0.0, %v3202
        %v3204 = vpop.f32.mrf.mxu0
        %v3205 = vpop.f32.mrf.mxu0
        %v3206 = vadd.f32 0.0, %v3205
        %v3207 = vpop.f32.mrf.mxu0
        %3208 = vmatprep.mubr.bf16.mxu0 0
        %3209 = vmatmul.mubr.bf16.gmra.mxu0 %v2879
        %v3210 = vpop.f32.mrf.mxu0
        %v3211 = vadd.f32 0.0, %v3210
        %v3212 = vpop.f32.mrf.mxu0
        %v3213 = vpop.f32.mrf.mxu0
        %v3214 = vadd.f32 0.0, %v3213
        %v3215 = vpop.f32.mrf.mxu0
        %3216 = vmatprep.mubr.bf16.mxu0 0
        %3217 = vmatmul.mubr.bf16.gmra.mxu0 %v2882
        %v3218 = vpop.f32.mrf.mxu0
        %v3219 = vadd.f32 0.0, %v3218
        %v3220 = vpop.f32.mrf.mxu0
        %v3221 = vpop.f32.mrf.mxu0
        %v3222 = vadd.f32 0.0, %v3221
        %v3223 = vpop.f32.mrf.mxu0
        %3224 = vmatprep.mubr.bf16.mxu0 0
        %3225 = vmatmul.mubr.bf16.gmra.mxu0 %v2885
        %v3226 = vpop.f32.mrf.mxu0
        %v3227 = vadd.f32 0.0, %v3226
        %v3228 = vpop.f32.mrf.mxu0
        %v3229 = vpop.f32.mrf.mxu0
        %v3230 = vadd.f32 0.0, %v3229
        %v3231 = vpop.f32.mrf.mxu0
        %3232 = vmatprep.mubr.bf16.mxu0 0
        %3233 = vmatmul.mubr.bf16.gmra.mxu0 %v2888
        %v3234 = vpop.f32.mrf.mxu0
        %v3235 = vadd.f32 0.0, %v3234
        %v3236 = vpop.f32.mrf.mxu0
        %v3237 = vpop.f32.mrf.mxu0
        %v3238 = vadd.f32 0.0, %v3237
        %v3239 = vpop.f32.mrf.mxu0
        %3240 = vmatprep.mubr.bf16.mxu0 0
        %3241 = vmatmul.mubr.bf16.gmra.mxu0 %v3147
        %v3242 = vpop.f32.mrf.mxu0
        %v3243 = vadd.f32 0.0, %v3242
        %v3244 = vpop.f32.mrf.mxu0
        %v3245 = vpop.f32.mrf.mxu0
        %v3246 = vadd.f32 0.0, %v3245
        %v3247 = vpop.f32.mrf.mxu0
        %3248 = vdwg.mxu0
        %v3249 = vadd.f32 %v3057, %v3187
        %v3250 = vadd.f32 %v3060, %v3190
        %v3251 = vadd.f32 %v3065, %v3195
        %v3252 = vadd.f32 %v3068, %v3198
        %v3253 = vadd.f32 %v3073, %v3203
        %v3254 = vadd.f32 %v3076, %v3206
        %v3255 = vadd.f32 %v3081, %v3211
        %v3256 = vadd.f32 %v3084, %v3214
        %v3257 = vadd.f32 %v3089, %v3219
        %v3258 = vadd.f32 %v3092, %v3222
        %v3259 = vadd.f32 %v3097, %v3227
        %v3260 = vadd.f32 %v3100, %v3230
        %v3261 = vadd.f32 %v3105, %v3235
        %v3262 = vadd.f32 %v3108, %v3238
        %v3263 = vadd.f32 %v3113, %v3243
        %v3264 = vadd.f32 %v3116, %v3246
        %v3265 = vld [vmem:[%s2629 + $0x8] sm:$0xf]
        %v3266 = vld [vmem:[%s2629 + $0xc] sm:$0xf]
        %v3267 = vld [vmem:[%s2629 + $0x1c] sm:$0xf]
        %v3268 = vld [vmem:[%s2629 + $0x20] sm:$0xf]
        %v3269 = vld [vmem:[%s2629 + $0x30] sm:$0xf]
        %v3270 = vld [vmem:[%s2629 + $0x34] sm:$0xf]
        %v3271 = vld [vmem:[%s2629 + $0x44] sm:$0xf]
        %v3272 = vld [vmem:[%s2629 + $0x48] sm:$0xf]
        %v3273 = vld [vmem:[%s2629 + $0x58] sm:$0xf]
        %v3274 = vld [vmem:[%s2629 + $0x5c] sm:$0xf]
        %v3275 = vld [vmem:[%s2629 + $0x6c] sm:$0xf]
        %v3276 = vld [vmem:[%s2629 + $0x70] sm:$0xf]
        %v3277 = vld [vmem:[%s2629 + $0x80] sm:$0xf]
        %v3278 = vld [vmem:[%s2629 + $0x84] sm:$0xf]
        %v3279 = vld [vmem:[%s2629 + $0x94] sm:$0xf]
        %v3280 = vld [vmem:[%s2629 + $0x98] sm:$0xf]
        %v3281 = vld [vmem:[%s2629 + $0xa8] sm:$0xf]
        %v3282 = vld [vmem:[%s2629 + $0xac] sm:$0xf]
        %v3283 = vld [vmem:[%s2629 + $0xbc] sm:$0xf]
        %v3284 = vld [vmem:[%s2629 + $0xc0] sm:$0xf]
        %s3285 = scalar_lea.vmem %s3, 2
        %v3286 = vld [vmem:[%s3285] sm:$0x3]
        %v3303 = vunpack.c.l.b16 %v3265
        %v3304 = vunpack.c.l.b16 %v3266
        %v3305 = vunpack.c.l.b16 %v3267
        %v3306 = vunpack.c.l.b16 %v3268
        %v3307 = vunpack.c.l.b16 %v3269
        %v3308 = vunpack.c.l.b16 %v3270
        %v3309 = vunpack.c.l.b16 %v3271
        %v3310 = vunpack.c.l.b16 %v3272
        %v3311 = vunpack.c.l.b16 %v3273
        %v3312 = vunpack.c.l.b16 %v3274
        %v3313 = vunpack.c.l.b16 %v3275
        %v3314 = vunpack.c.l.b16 %v3276
        %v3315 = vunpack.c.l.b16 %v3277
        %v3316 = vunpack.c.l.b16 %v3278
        %v3317 = vunpack.c.l.b16 %v3279
        %v3318 = vunpack.c.l.b16 %v3280
        %v3319 = vpack.c.b16 %v3304, %v3303
        %v3320 = vpack.c.b16 %v3306, %v3305
        %v3321 = vpack.c.b16 %v3308, %v3307
        %v3322 = vpack.c.b16 %v3310, %v3309
        %v3323 = vpack.c.b16 %v3312, %v3311
        %v3324 = vpack.c.b16 %v3314, %v3313
        %v3325 = vpack.c.b16 %v3316, %v3315
        %v3326 = vpack.c.b16 %v3318, %v3317
        %v3328 = vsel %vm2865, %v3319, 0
        %v3331 = vsel %vm2865, %v3320, 0
        %v3334 = vsel %vm2865, %v3321, 0
        %v3337 = vsel %vm2865, %v3322, 0
        %v3340 = vsel %vm2865, %v3323, 0
        %v3343 = vsel %vm2865, %v3324, 0
        %v3346 = vsel %vm2865, %v3325, 0
        %v3349 = vsel %vm2865, %v3326, 0
        %v3352 = vsel %vm2890, %v3286, 0
        %3354 = vmatprep.subr.bf16.mxu0 0
        %3355 = vmatpush1.bf16.msra.mxu0 0
        %3356 = vmatprep.subr.bf16.mxu0 0
        %3357 = vmatpush1.bf16.msra.mxu0 0
        %3358 = vmatprep.subr.bf16.mxu0 0
        %3359 = vmatpush1.bf16.msra.mxu0 0
        %3360 = vmatprep.subr.bf16.mxu0 0
        %3361 = vmatpush1.bf16.msra.mxu0 0
        %3362 = vmatprep.subr.bf16.mxu0 0
        %3363 = vmatpush1.bf16.msra.mxu0 0
        %3364 = vmatprep.subr.bf16.mxu0 0
        %3365 = vmatpush1.bf16.msra.mxu0 0
        %3366 = vmatprep.subr.bf16.mxu0 0
        %3367 = vmatpush1.bf16.msra.mxu0 0
        %3368 = vmatprep.subr.bf16.mxu0 0
        %3369 = vmatpush1.bf16.msra.mxu0 %v3352
        %3370 = vmatprep.subr.bf16.mxu0 0
        %3371 = vmatpush2.bf16.msra.mxu0 0
        %3372 = vmatprep.subr.bf16.mxu0 0
        %3373 = vmatpush2.bf16.msra.mxu0 0
        %3374 = vmatprep.subr.bf16.mxu0 0
        %3375 = vmatpush2.bf16.msra.mxu0 0
        %3376 = vmatprep.subr.bf16.mxu0 0
        %3377 = vmatpush2.bf16.msra.mxu0 0
        %3378 = vmatprep.subr.bf16.mxu0 0
        %3379 = vmatpush2.bf16.msra.mxu0 0
        %3380 = vmatprep.subr.bf16.mxu0 0
        %3381 = vmatpush2.bf16.msra.mxu0 0
        %3382 = vmatprep.subr.bf16.mxu0 0
        %3383 = vmatpush2.bf16.msra.mxu0 0
        %3384 = vmatprep.subr.bf16.mxu0 0
        %3385 = vmatpush2.bf16.msra.mxu0 0
        %3386 = vmatprep.mubr.bf16.mxu0 0
        %3387 = vmatmul.mubr.bf16.gmra.mxu0 %v3328
        %v3388 = vpop.f32.mrf.mxu0
        %v3389 = vadd.f32 0.0, %v3388
        %v3390 = vpop.f32.mrf.mxu0
        %v3391 = vpop.f32.mrf.mxu0
        %v3392 = vadd.f32 0.0, %v3391
        %v3393 = vpop.f32.mrf.mxu0
        %3394 = vmatprep.mubr.bf16.mxu0 0
        %3395 = vmatmul.mubr.bf16.gmra.mxu0 %v3331
        %v3396 = vpop.f32.mrf.mxu0
        %v3397 = vadd.f32 0.0, %v3396
        %v3398 = vpop.f32.mrf.mxu0
        %v3399 = vpop.f32.mrf.mxu0
        %v3400 = vadd.f32 0.0, %v3399
        %v3401 = vpop.f32.mrf.mxu0
        %3402 = vmatprep.mubr.bf16.mxu0 0
        %3403 = vmatmul.mubr.bf16.gmra.mxu0 %v3334
        %v3404 = vpop.f32.mrf.mxu0
        %v3405 = vadd.f32 0.0, %v3404
        %v3406 = vpop.f32.mrf.mxu0
        %v3407 = vpop.f32.mrf.mxu0
        %v3408 = vadd.f32 0.0, %v3407
        %v3409 = vpop.f32.mrf.mxu0
        %3410 = vmatprep.mubr.bf16.mxu0 0
        %3411 = vmatmul.mubr.bf16.gmra.mxu0 %v3337
        %v3412 = vpop.f32.mrf.mxu0
        %v3413 = vadd.f32 0.0, %v3412
        %v3414 = vpop.f32.mrf.mxu0
        %v3415 = vpop.f32.mrf.mxu0
        %v3416 = vadd.f32 0.0, %v3415
        %v3417 = vpop.f32.mrf.mxu0
        %3418 = vmatprep.mubr.bf16.mxu0 0
        %3419 = vmatmul.mubr.bf16.gmra.mxu0 %v3340
        %v3420 = vpop.f32.mrf.mxu0
        %v3421 = vadd.f32 0.0, %v3420
        %v3422 = vpop.f32.mrf.mxu0
        %v3423 = vpop.f32.mrf.mxu0
        %v3424 = vadd.f32 0.0, %v3423
        %v3425 = vpop.f32.mrf.mxu0
        %3426 = vmatprep.mubr.bf16.mxu0 0
        %3427 = vmatmul.mubr.bf16.gmra.mxu0 %v3343
        %v3428 = vpop.f32.mrf.mxu0
        %v3429 = vadd.f32 0.0, %v3428
        %v3430 = vpop.f32.mrf.mxu0
        %v3431 = vpop.f32.mrf.mxu0
        %v3432 = vadd.f32 0.0, %v3431
        %v3433 = vpop.f32.mrf.mxu0
        %3434 = vmatprep.mubr.bf16.mxu0 0
        %3435 = vmatmul.mubr.bf16.gmra.mxu0 %v3346
        %v3436 = vpop.f32.mrf.mxu0
        %v3437 = vadd.f32 0.0, %v3436
        %v3438 = vpop.f32.mrf.mxu0
        %v3439 = vpop.f32.mrf.mxu0
        %v3440 = vadd.f32 0.0, %v3439
        %v3441 = vpop.f32.mrf.mxu0
        %3442 = vmatprep.mubr.bf16.mxu0 0
        %3443 = vmatmul.mubr.bf16.gmra.mxu0 %v3349
        %v3444 = vpop.f32.mrf.mxu0
        %v3445 = vadd.f32 0.0, %v3444
        %v3446 = vpop.f32.mrf.mxu0
        %v3447 = vpop.f32.mrf.mxu0
        %v3448 = vadd.f32 0.0, %v3447
        %v3449 = vpop.f32.mrf.mxu0
        %3450 = vdwg.mxu0
        %v3451 = vadd.f32 %v3249, %v3389
        %v3452 = vadd.f32 %v3250, %v3392
        %v3453 = vadd.f32 %v3251, %v3397
        %v3454 = vadd.f32 %v3252, %v3400
        %v3455 = vadd.f32 %v3253, %v3405
        %v3456 = vadd.f32 %v3254, %v3408
        %v3457 = vadd.f32 %v3255, %v3413
        %v3458 = vadd.f32 %v3256, %v3416
        %v3459 = vadd.f32 %v3257, %v3421
        %v3460 = vadd.f32 %v3258, %v3424
        %v3461 = vadd.f32 %v3259, %v3429
        %v3462 = vadd.f32 %v3260, %v3432
        %v3463 = vadd.f32 %v3261, %v3437
        %v3464 = vadd.f32 %v3262, %v3440
        %v3465 = vadd.f32 %v3263, %v3445
        %v3466 = vadd.f32 %v3264, %v3448
        %s3467 = scalar_lea.vmem %s3, 8
        %v3468 = vld [vmem:[%s3467] sm:$0x3]
        %v3471 = vunpack.c.l.b16 %v3281
        %v3472 = vunpack.c.l.b16 %v3282
        %v3473 = vpack.c.b16 %v3472, %v3471
        %v3475 = vsel %vm2865, %v3473, 0
        %v3478 = vsel %vm2890, %v3468, 0
        %3480 = vmatprep.subr.bf16.mxu0 0
        %3481 = vmatpush1.bf16.msra.mxu0 0
        %3482 = vmatprep.subr.bf16.mxu0 0
        %3483 = vmatpush1.bf16.msra.mxu0 0
        %3484 = vmatprep.subr.bf16.mxu0 0
        %3485 = vmatpush1.bf16.msra.mxu0 0
        %3486 = vmatprep.subr.bf16.mxu0 0
        %3487 = vmatpush1.bf16.msra.mxu0 0
        %3488 = vmatprep.subr.bf16.mxu0 0
        %3489 = vmatpush1.bf16.msra.mxu0 0
        %3490 = vmatprep.subr.bf16.mxu0 0
        %3491 = vmatpush1.bf16.msra.mxu0 0
        %3492 = vmatprep.subr.bf16.mxu0 0
        %3493 = vmatpush1.bf16.msra.mxu0 0
        %3494 = vmatprep.subr.bf16.mxu0 0
        %3495 = vmatpush1.bf16.msra.mxu0 %v3478
        %3496 = vmatprep.subr.bf16.mxu0 0
        %3497 = vmatpush2.bf16.msra.mxu0 0
        %3498 = vmatprep.subr.bf16.mxu0 0
        %3499 = vmatpush2.bf16.msra.mxu0 0
        %3500 = vmatprep.subr.bf16.mxu0 0
        %3501 = vmatpush2.bf16.msra.mxu0 0
        %3502 = vmatprep.subr.bf16.mxu0 0
        %3503 = vmatpush2.bf16.msra.mxu0 0
        %3504 = vmatprep.subr.bf16.mxu0 0
        %3505 = vmatpush2.bf16.msra.mxu0 0
        %3506 = vmatprep.subr.bf16.mxu0 0
        %3507 = vmatpush2.bf16.msra.mxu0 0
        %3508 = vmatprep.subr.bf16.mxu0 0
        %3509 = vmatpush2.bf16.msra.mxu0 0
        %3510 = vmatprep.subr.bf16.mxu0 0
        %3511 = vmatpush2.bf16.msra.mxu0 0
        %3512 = vmatprep.mubr.bf16.mxu0 0
        %3513 = vmatmul.mubr.bf16.gmra.mxu0 %v3331
        %v3514 = vpop.f32.mrf.mxu0
        %v3515 = vadd.f32 0.0, %v3514
        %v3516 = vpop.f32.mrf.mxu0
        %v3517 = vpop.f32.mrf.mxu0
        %v3518 = vadd.f32 0.0, %v3517
        %v3519 = vpop.f32.mrf.mxu0
        %3520 = vmatprep.mubr.bf16.mxu0 0
        %3521 = vmatmul.mubr.bf16.gmra.mxu0 %v3334
        %v3522 = vpop.f32.mrf.mxu0
        %v3523 = vadd.f32 0.0, %v3522
        %v3524 = vpop.f32.mrf.mxu0
        %v3525 = vpop.f32.mrf.mxu0
        %v3526 = vadd.f32 0.0, %v3525
        %v3527 = vpop.f32.mrf.mxu0
        %3528 = vmatprep.mubr.bf16.mxu0 0
        %3529 = vmatmul.mubr.bf16.gmra.mxu0 %v3337
        %v3530 = vpop.f32.mrf.mxu0
        %v3531 = vadd.f32 0.0, %v3530
        %v3532 = vpop.f32.mrf.mxu0
        %v3533 = vpop.f32.mrf.mxu0
        %v3534 = vadd.f32 0.0, %v3533
        %v3535 = vpop.f32.mrf.mxu0
        %3536 = vmatprep.mubr.bf16.mxu0 0
        %3537 = vmatmul.mubr.bf16.gmra.mxu0 %v3340
        %v3538 = vpop.f32.mrf.mxu0
        %v3539 = vadd.f32 0.0, %v3538
        %v3540 = vpop.f32.mrf.mxu0
        %v3541 = vpop.f32.mrf.mxu0
        %v3542 = vadd.f32 0.0, %v3541
        %v3543 = vpop.f32.mrf.mxu0
        %3544 = vmatprep.mubr.bf16.mxu0 0
        %3545 = vmatmul.mubr.bf16.gmra.mxu0 %v3343
        %v3546 = vpop.f32.mrf.mxu0
        %v3547 = vadd.f32 0.0, %v3546
        %v3548 = vpop.f32.mrf.mxu0
        %v3549 = vpop.f32.mrf.mxu0
        %v3550 = vadd.f32 0.0, %v3549
        %v3551 = vpop.f32.mrf.mxu0
        %3552 = vmatprep.mubr.bf16.mxu0 0
        %3553 = vmatmul.mubr.bf16.gmra.mxu0 %v3346
        %v3554 = vpop.f32.mrf.mxu0
        %v3555 = vadd.f32 0.0, %v3554
        %v3556 = vpop.f32.mrf.mxu0
        %v3557 = vpop.f32.mrf.mxu0
        %v3558 = vadd.f32 0.0, %v3557
        %v3559 = vpop.f32.mrf.mxu0
        %3560 = vmatprep.mubr.bf16.mxu0 0
        %3561 = vmatmul.mubr.bf16.gmra.mxu0 %v3349
        %v3562 = vpop.f32.mrf.mxu0
        %v3563 = vadd.f32 0.0, %v3562
        %v3564 = vpop.f32.mrf.mxu0
        %v3565 = vpop.f32.mrf.mxu0
        %v3566 = vadd.f32 0.0, %v3565
        %v3567 = vpop.f32.mrf.mxu0
        %3568 = vmatprep.mubr.bf16.mxu0 0
        %3569 = vmatmul.mubr.bf16.gmra.mxu0 %v3475
        %v3570 = vpop.f32.mrf.mxu0
        %v3571 = vadd.f32 0.0, %v3570
        %v3572 = vpop.f32.mrf.mxu0
        %v3573 = vpop.f32.mrf.mxu0
        %v3574 = vadd.f32 0.0, %v3573
        %v3575 = vpop.f32.mrf.mxu0
        %3576 = vdwg.mxu0
        %v3577 = vadd.f32 %v3451, %v3515
        %v3578 = vadd.f32 %v3452, %v3518
        %v3579 = vadd.f32 %v3453, %v3523
        %v3580 = vadd.f32 %v3454, %v3526
        %v3581 = vadd.f32 %v3455, %v3531
        %v3582 = vadd.f32 %v3456, %v3534
        %v3583 = vadd.f32 %v3457, %v3539
        %v3584 = vadd.f32 %v3458, %v3542
        %v3585 = vadd.f32 %v3459, %v3547
        %v3586 = vadd.f32 %v3460, %v3550
        %v3587 = vadd.f32 %v3461, %v3555
        %v3588 = vadd.f32 %v3462, %v3558
        %v3589 = vadd.f32 %v3463, %v3563
        %v3590 = vadd.f32 %v3464, %v3566
        %v3591 = vadd.f32 %v3465, %v3571
        %v3592 = vadd.f32 %v3466, %v3574
        %s3593 = scalar_lea.vmem %s3, 14
        %v3594 = vld [vmem:[%s3593] sm:$0x3]
        %v3597 = vunpack.c.l.b16 %v3283
        %v3598 = vunpack.c.l.b16 %v3284
        %v3599 = vpack.c.b16 %v3598, %v3597
        %v3601 = vsel %vm2865, %v3599, 0
        %v3604 = vsel %vm2890, %v3594, 0
        %3606 = vmatprep.subr.bf16.mxu0 0
        %3607 = vmatpush1.bf16.msra.mxu0 0
        %3608 = vmatprep.subr.bf16.mxu0 0
        %3609 = vmatpush1.bf16.msra.mxu0 0
        %3610 = vmatprep.subr.bf16.mxu0 0
        %3611 = vmatpush1.bf16.msra.mxu0 0
        %3612 = vmatprep.subr.bf16.mxu0 0
        %3613 = vmatpush1.bf16.msra.mxu0 0
        %3614 = vmatprep.subr.bf16.mxu0 0
        %3615 = vmatpush1.bf16.msra.mxu0 0
        %3616 = vmatprep.subr.bf16.mxu0 0
        %3617 = vmatpush1.bf16.msra.mxu0 0
        %3618 = vmatprep.subr.bf16.mxu0 0
        %3619 = vmatpush1.bf16.msra.mxu0 0
        %3620 = vmatprep.subr.bf16.mxu0 0
        %3621 = vmatpush1.bf16.msra.mxu0 %v3604
        %3622 = vmatprep.subr.bf16.mxu0 0
        %3623 = vmatpush2.bf16.msra.mxu0 0
        %3624 = vmatprep.subr.bf16.mxu0 0
        %3625 = vmatpush2.bf16.msra.mxu0 0
        %3626 = vmatprep.subr.bf16.mxu0 0
        %3627 = vmatpush2.bf16.msra.mxu0 0
        %3628 = vmatprep.subr.bf16.mxu0 0
        %3629 = vmatpush2.bf16.msra.mxu0 0
        %3630 = vmatprep.subr.bf16.mxu0 0
        %3631 = vmatpush2.bf16.msra.mxu0 0
        %3632 = vmatprep.subr.bf16.mxu0 0
        %3633 = vmatpush2.bf16.msra.mxu0 0
        %3634 = vmatprep.subr.bf16.mxu0 0
        %3635 = vmatpush2.bf16.msra.mxu0 0
        %3636 = vmatprep.subr.bf16.mxu0 0
        %3637 = vmatpush2.bf16.msra.mxu0 0
        %3638 = vmatprep.mubr.bf16.mxu0 0
        %3639 = vmatmul.mubr.bf16.gmra.mxu0 %v3334
        %v3640 = vpop.f32.mrf.mxu0
        %v3641 = vadd.f32 0.0, %v3640
        %v3642 = vpop.f32.mrf.mxu0
        %v3643 = vpop.f32.mrf.mxu0
        %v3644 = vadd.f32 0.0, %v3643
        %v3645 = vpop.f32.mrf.mxu0
        %3646 = vmatprep.mubr.bf16.mxu0 0
        %3647 = vmatmul.mubr.bf16.gmra.mxu0 %v3337
        %v3648 = vpop.f32.mrf.mxu0
        %v3649 = vadd.f32 0.0, %v3648
        %v3650 = vpop.f32.mrf.mxu0
        %v3651 = vpop.f32.mrf.mxu0
        %v3652 = vadd.f32 0.0, %v3651
        %v3653 = vpop.f32.mrf.mxu0
        %3654 = vmatprep.mubr.bf16.mxu0 0
        %3655 = vmatmul.mubr.bf16.gmra.mxu0 %v3340
        %v3656 = vpop.f32.mrf.mxu0
        %v3657 = vadd.f32 0.0, %v3656
        %v3658 = vpop.f32.mrf.mxu0
        %v3659 = vpop.f32.mrf.mxu0
        %v3660 = vadd.f32 0.0, %v3659
        %v3661 = vpop.f32.mrf.mxu0
        %3662 = vmatprep.mubr.bf16.mxu0 0
        %3663 = vmatmul.mubr.bf16.gmra.mxu0 %v3343
        %v3664 = vpop.f32.mrf.mxu0
        %v3665 = vadd.f32 0.0, %v3664
        %v3666 = vpop.f32.mrf.mxu0
        %v3667 = vpop.f32.mrf.mxu0
        %v3668 = vadd.f32 0.0, %v3667
        %v3669 = vpop.f32.mrf.mxu0
        %3670 = vmatprep.mubr.bf16.mxu0 0
        %3671 = vmatmul.mubr.bf16.gmra.mxu0 %v3346
        %v3672 = vpop.f32.mrf.mxu0
        %v3673 = vadd.f32 0.0, %v3672
        %v3674 = vpop.f32.mrf.mxu0
        %v3675 = vpop.f32.mrf.mxu0
        %v3676 = vadd.f32 0.0, %v3675
        %v3677 = vpop.f32.mrf.mxu0
        %3678 = vmatprep.mubr.bf16.mxu0 0
        %3679 = vmatmul.mubr.bf16.gmra.mxu0 %v3349
        %v3680 = vpop.f32.mrf.mxu0
        %v3681 = vadd.f32 0.0, %v3680
        %v3682 = vpop.f32.mrf.mxu0
        %v3683 = vpop.f32.mrf.mxu0
        %v3684 = vadd.f32 0.0, %v3683
        %v3685 = vpop.f32.mrf.mxu0
        %3686 = vmatprep.mubr.bf16.mxu0 0
        %3687 = vmatmul.mubr.bf16.gmra.mxu0 %v3475
        %v3688 = vpop.f32.mrf.mxu0
        %v3689 = vadd.f32 0.0, %v3688
        %v3690 = vpop.f32.mrf.mxu0
        %v3691 = vpop.f32.mrf.mxu0
        %v3692 = vadd.f32 0.0, %v3691
        %v3693 = vpop.f32.mrf.mxu0
        %3694 = vmatprep.mubr.bf16.mxu0 0
        %3695 = vmatmul.mubr.bf16.gmra.mxu0 %v3601
        %v3696 = vpop.f32.mrf.mxu0
        %v3697 = vadd.f32 0.0, %v3696
        %v3698 = vpop.f32.mrf.mxu0
        %v3699 = vpop.f32.mrf.mxu0
        %v3700 = vadd.f32 0.0, %v3699
        %v3701 = vpop.f32.mrf.mxu0
        %3702 = vdwg.mxu0
        %v3703 = vadd.f32 %v3577, %v3641
        %v3704 = vadd.f32 %v3578, %v3644
        %v3705 = vadd.f32 %v3579, %v3649
        %v3706 = vadd.f32 %v3580, %v3652
        %v3707 = vadd.f32 %v3581, %v3657
        %v3708 = vadd.f32 %v3582, %v3660
        %v3709 = vadd.f32 %v3583, %v3665
        %v3710 = vadd.f32 %v3584, %v3668
        %v3711 = vadd.f32 %v3585, %v3673
        %v3712 = vadd.f32 %v3586, %v3676
        %v3713 = vadd.f32 %v3587, %v3681
        %v3714 = vadd.f32 %v3588, %v3684
        %v3715 = vadd.f32 %v3589, %v3689
        %v3716 = vadd.f32 %v3590, %v3692
        %v3717 = vadd.f32 %v3591, %v3697
        %v3718 = vadd.f32 %v3592, %v3700
        %v3719 = vld [vmem:[%s2629 + $0x8] sm:$0xf]
        %v3720 = vld [vmem:[%s2629 + $0xc] sm:$0xf]
        %v3721 = vld [vmem:[%s2629 + $0x10] sm:$0x1]
        %v3722 = vld [vmem:[%s2629 + $0x1c] sm:$0xf]
        %v3723 = vld [vmem:[%s2629 + $0x20] sm:$0xf]
        %v3724 = vld [vmem:[%s2629 + $0x24] sm:$0x1]
        %v3725 = vld [vmem:[%s2629 + $0x30] sm:$0xf]
        %v3726 = vld [vmem:[%s2629 + $0x34] sm:$0xf]
        %v3727 = vld [vmem:[%s2629 + $0x38] sm:$0x1]
        %v3728 = vld [vmem:[%s2629 + $0x44] sm:$0xf]
        %v3729 = vld [vmem:[%s2629 + $0x48] sm:$0xf]
        %v3730 = vld [vmem:[%s2629 + $0x4c] sm:$0x1]
        %v3731 = vld [vmem:[%s2629 + $0x58] sm:$0xf]
        %v3732 = vld [vmem:[%s2629 + $0x5c] sm:$0xf]
        %v3733 = vld [vmem:[%s2629 + $0x60] sm:$0x1]
        %v3734 = vld [vmem:[%s2629 + $0x6c] sm:$0xf]
        %v3735 = vld [vmem:[%s2629 + $0x70] sm:$0xf]
        %v3736 = vld [vmem:[%s2629 + $0x74] sm:$0x1]
        %v3737 = vld [vmem:[%s2629 + $0x80] sm:$0xf]
        %v3738 = vld [vmem:[%s2629 + $0x84] sm:$0xf]
        %v3739 = vld [vmem:[%s2629 + $0x88] sm:$0x1]
        %v3740 = vld [vmem:[%s2629 + $0x94] sm:$0xf]
        %v3741 = vld [vmem:[%s2629 + $0x98] sm:$0xf]
        %v3742 = vld [vmem:[%s2629 + $0x9c] sm:$0x1]
        %v3743 = vld [vmem:[%s2629 + $0xa8] sm:$0xf]
        %v3744 = vld [vmem:[%s2629 + $0xac] sm:$0xf]
        %v3745 = vld [vmem:[%s2629 + $0xb0] sm:$0x1]
        %v3746 = vld [vmem:[%s2629 + $0xbc] sm:$0xf]
        %v3747 = vld [vmem:[%s2629 + $0xc0] sm:$0xf]
        %v3748 = vld [vmem:[%s2629 + $0xc4] sm:$0x1]
        %s3749 = scalar_lea.vmem %s3, 4
        %v3750 = vld [vmem:[%s3749] sm:$0x3]
        %vm3751 = vsmask.f32 3328
        %vm3752 = vsmask.f32 7440
        %vm3753 = vmor %vm3751, %vm3752
        %v3755 = vshrl.u32 %v3719, 16
        %v3757 = vrot.slane %v3755, 4
        %v3758 = vshll.u32 %v3719, 16
        %v3760 = vrot.slane %v3758, 5
        %v3761 = vor.u32 %v3757, %v3760
        %v3762 = vrot.slane %v3761, 4
        %v3764 = vshll.u32 %v3720, 16
        %v3766 = vrot.slane %v3764, 5
        %v3767 = vsel %vm3753, %v3762, %v3766
        %v3768 = vshrl.u32 %v3720, 16
        %v3770 = vrot.slane %v3768, 4
        %v3771 = vor.u32 %v3770, %v3766
        %v3772 = vrot.slane %v3771, 4
        %v3774 = vshll.u32 %v3721, 16
        %v3776 = vrot.slane %v3774, 5
        %v3777 = vsel %vm3753, %v3772, %v3776
        %v3779 = vshrl.u32 %v3722, 16
        %v3781 = vrot.slane %v3779, 4
        %v3782 = vshll.u32 %v3722, 16
        %v3784 = vrot.slane %v3782, 5
        %v3785 = vor.u32 %v3781, %v3784
        %v3786 = vrot.slane %v3785, 4
        %v3788 = vshll.u32 %v3723, 16
        %v3790 = vrot.slane %v3788, 5
        %v3791 = vsel %vm3753, %v3786, %v3790
        %v3792 = vshrl.u32 %v3723, 16
        %v3794 = vrot.slane %v3792, 4
        %v3795 = vor.u32 %v3794, %v3790
        %v3796 = vrot.slane %v3795, 4
        %v3798 = vshll.u32 %v3724, 16
        %v3800 = vrot.slane %v3798, 5
        %v3801 = vsel %vm3753, %v3796, %v3800
        %v3803 = vshrl.u32 %v3725, 16
        %v3805 = vrot.slane %v3803, 4
        %v3806 = vshll.u32 %v3725, 16
        %v3808 = vrot.slane %v3806, 5
        %v3809 = vor.u32 %v3805, %v3808
        %v3810 = vrot.slane %v3809, 4
        %v3812 = vshll.u32 %v3726, 16
        %v3814 = vrot.slane %v3812, 5
        %v3815 = vsel %vm3753, %v3810, %v3814
        %v3816 = vshrl.u32 %v3726, 16
        %v3818 = vrot.slane %v3816, 4
        %v3819 = vor.u32 %v3818, %v3814
        %v3820 = vrot.slane %v3819, 4
        %v3822 = vshll.u32 %v3727, 16
        %v3824 = vrot.slane %v3822, 5
        %v3825 = vsel %vm3753, %v3820, %v3824
        %v3827 = vshrl.u32 %v3728, 16
        %v3829 = vrot.slane %v3827, 4
        %v3830 = vshll.u32 %v3728, 16
        %v3832 = vrot.slane %v3830, 5
        %v3833 = vor.u32 %v3829, %v3832
        %v3834 = vrot.slane %v3833, 4
        %v3836 = vshll.u32 %v3729, 16
        %v3838 = vrot.slane %v3836, 5
        %v3839 = vsel %vm3753, %v3834, %v3838
        %v3840 = vshrl.u32 %v3729, 16
        %v3842 = vrot.slane %v3840, 4
        %v3843 = vor.u32 %v3842, %v3838
        %v3844 = vrot.slane %v3843, 4
        %v3846 = vshll.u32 %v3730, 16
        %v3848 = vrot.slane %v3846, 5
        %v3849 = vsel %vm3753, %v3844, %v3848
        %v3851 = vshrl.u32 %v3731, 16
        %v3853 = vrot.slane %v3851, 4
        %v3854 = vshll.u32 %v3731, 16
        %v3856 = vrot.slane %v3854, 5
        %v3857 = vor.u32 %v3853, %v3856
        %v3858 = vrot.slane %v3857, 4
        %v3860 = vshll.u32 %v3732, 16
        %v3862 = vrot.slane %v3860, 5
        %v3863 = vsel %vm3753, %v3858, %v3862
        %v3864 = vshrl.u32 %v3732, 16
        %v3866 = vrot.slane %v3864, 4
        %v3867 = vor.u32 %v3866, %v3862
        %v3868 = vrot.slane %v3867, 4
        %v3870 = vshll.u32 %v3733, 16
        %v3872 = vrot.slane %v3870, 5
        %v3873 = vsel %vm3753, %v3868, %v3872
        %v3875 = vshrl.u32 %v3734, 16
        %v3877 = vrot.slane %v3875, 4
        %v3878 = vshll.u32 %v3734, 16
        %v3880 = vrot.slane %v3878, 5
        %v3881 = vor.u32 %v3877, %v3880
        %v3882 = vrot.slane %v3881, 4
        %v3884 = vshll.u32 %v3735, 16
        %v3886 = vrot.slane %v3884, 5
        %v3887 = vsel %vm3753, %v3882, %v3886
        %v3888 = vshrl.u32 %v3735, 16
        %v3890 = vrot.slane %v3888, 4
        %v3891 = vor.u32 %v3890, %v3886
        %v3892 = vrot.slane %v3891, 4
        %v3894 = vshll.u32 %v3736, 16
        %v3896 = vrot.slane %v3894, 5
        %v3897 = vsel %vm3753, %v3892, %v3896
        %v3899 = vshrl.u32 %v3737, 16
        %v3901 = vrot.slane %v3899, 4
        %v3902 = vshll.u32 %v3737, 16
        %v3904 = vrot.slane %v3902, 5
        %v3905 = vor.u32 %v3901, %v3904
        %v3906 = vrot.slane %v3905, 4
        %v3908 = vshll.u32 %v3738, 16
        %v3910 = vrot.slane %v3908, 5
        %v3911 = vsel %vm3753, %v3906, %v3910
        %v3912 = vshrl.u32 %v3738, 16
        %v3914 = vrot.slane %v3912, 4
        %v3915 = vor.u32 %v3914, %v3910
        %v3916 = vrot.slane %v3915, 4
        %v3918 = vshll.u32 %v3739, 16
        %v3920 = vrot.slane %v3918, 5
        %v3921 = vsel %vm3753, %v3916, %v3920
        %v3923 = vshrl.u32 %v3740, 16
        %v3925 = vrot.slane %v3923, 4
        %v3926 = vshll.u32 %v3740, 16
        %v3928 = vrot.slane %v3926, 5
        %v3929 = vor.u32 %v3925, %v3928
        %v3930 = vrot.slane %v3929, 4
        %v3932 = vshll.u32 %v3741, 16
        %v3934 = vrot.slane %v3932, 5
        %v3935 = vsel %vm3753, %v3930, %v3934
        %v3936 = vshrl.u32 %v3741, 16
        %v3938 = vrot.slane %v3936, 4
        %v3939 = vor.u32 %v3938, %v3934
        %v3940 = vrot.slane %v3939, 4
        %v3942 = vshll.u32 %v3742, 16
        %v3944 = vrot.slane %v3942, 5
        %v3945 = vsel %vm3753, %v3940, %v3944
        %v3946 = vunpack.c.l.b16 %v3767
        %v3947 = vunpack.c.l.b16 %v3777
        %v3948 = vunpack.c.l.b16 %v3791
        %v3949 = vunpack.c.l.b16 %v3801
        %v3950 = vunpack.c.l.b16 %v3815
        %v3951 = vunpack.c.l.b16 %v3825
        %v3952 = vunpack.c.l.b16 %v3839
        %v3953 = vunpack.c.l.b16 %v3849
        %v3954 = vunpack.c.l.b16 %v3863
        %v3955 = vunpack.c.l.b16 %v3873
        %v3956 = vunpack.c.l.b16 %v3887
        %v3957 = vunpack.c.l.b16 %v3897
        %v3958 = vunpack.c.l.b16 %v3911
        %v3959 = vunpack.c.l.b16 %v3921
        %v3960 = vunpack.c.l.b16 %v3935
        %v3961 = vunpack.c.l.b16 %v3945
        %v3962 = vpack.c.b16 %v3947, %v3946
        %v3963 = vpack.c.b16 %v3949, %v3948
        %v3964 = vpack.c.b16 %v3951, %v3950
        %v3965 = vpack.c.b16 %v3953, %v3952
        %v3966 = vpack.c.b16 %v3955, %v3954
        %v3967 = vpack.c.b16 %v3957, %v3956
        %v3968 = vpack.c.b16 %v3959, %v3958
        %v3969 = vpack.c.b16 %v3961, %v3960
        %v3971 = vsel %vm2865, %v3962, 0
        %v3974 = vsel %vm2865, %v3963, 0
        %v3977 = vsel %vm2865, %v3964, 0
        %v3980 = vsel %vm2865, %v3965, 0
        %v3983 = vsel %vm2865, %v3966, 0
        %v3986 = vsel %vm2865, %v3967, 0
        %v3989 = vsel %vm2865, %v3968, 0
        %v3992 = vsel %vm2865, %v3969, 0
        %v3995 = vsel %vm2890, %v3750, 0
        %3997 = vmatprep.subr.bf16.mxu0 0
        %3998 = vmatpush1.bf16.msra.mxu0 0
        %3999 = vmatprep.subr.bf16.mxu0 0
        %4000 = vmatpush1.bf16.msra.mxu0 0
        %4001 = vmatprep.subr.bf16.mxu0 0
        %4002 = vmatpush1.bf16.msra.mxu0 0
        %4003 = vmatprep.subr.bf16.mxu0 0
        %4004 = vmatpush1.bf16.msra.mxu0 0
        %4005 = vmatprep.subr.bf16.mxu0 0
        %4006 = vmatpush1.bf16.msra.mxu0 0
        %4007 = vmatprep.subr.bf16.mxu0 0
        %4008 = vmatpush1.bf16.msra.mxu0 0
        %4009 = vmatprep.subr.bf16.mxu0 0
        %4010 = vmatpush1.bf16.msra.mxu0 0
        %4011 = vmatprep.subr.bf16.mxu0 0
        %4012 = vmatpush1.bf16.msra.mxu0 %v3995
        %4013 = vmatprep.subr.bf16.mxu0 0
        %4014 = vmatpush2.bf16.msra.mxu0 0
        %4015 = vmatprep.subr.bf16.mxu0 0
        %4016 = vmatpush2.bf16.msra.mxu0 0
        %4017 = vmatprep.subr.bf16.mxu0 0
        %4018 = vmatpush2.bf16.msra.mxu0 0
        %4019 = vmatprep.subr.bf16.mxu0 0
        %4020 = vmatpush2.bf16.msra.mxu0 0
        %4021 = vmatprep.subr.bf16.mxu0 0
        %4022 = vmatpush2.bf16.msra.mxu0 0
        %4023 = vmatprep.subr.bf16.mxu0 0
        %4024 = vmatpush2.bf16.msra.mxu0 0
        %4025 = vmatprep.subr.bf16.mxu0 0
        %4026 = vmatpush2.bf16.msra.mxu0 0
        %4027 = vmatprep.subr.bf16.mxu0 0
        %4028 = vmatpush2.bf16.msra.mxu0 0
        %4029 = vmatprep.mubr.bf16.mxu0 0
        %4030 = vmatmul.mubr.bf16.gmra.mxu0 %v3971
        %v4031 = vpop.f32.mrf.mxu0
        %v4032 = vadd.f32 0.0, %v4031
        %v4033 = vpop.f32.mrf.mxu0
        %v4034 = vpop.f32.mrf.mxu0
        %v4035 = vadd.f32 0.0, %v4034
        %v4036 = vpop.f32.mrf.mxu0
        %4037 = vmatprep.mubr.bf16.mxu0 0
        %4038 = vmatmul.mubr.bf16.gmra.mxu0 %v3974
        %v4039 = vpop.f32.mrf.mxu0
        %v4040 = vadd.f32 0.0, %v4039
        %v4041 = vpop.f32.mrf.mxu0
        %v4042 = vpop.f32.mrf.mxu0
        %v4043 = vadd.f32 0.0, %v4042
        %v4044 = vpop.f32.mrf.mxu0
        %4045 = vmatprep.mubr.bf16.mxu0 0
        %4046 = vmatmul.mubr.bf16.gmra.mxu0 %v3977
        %v4047 = vpop.f32.mrf.mxu0
        %v4048 = vadd.f32 0.0, %v4047
        %v4049 = vpop.f32.mrf.mxu0
        %v4050 = vpop.f32.mrf.mxu0
        %v4051 = vadd.f32 0.0, %v4050
        %v4052 = vpop.f32.mrf.mxu0
        %4053 = vmatprep.mubr.bf16.mxu0 0
        %4054 = vmatmul.mubr.bf16.gmra.mxu0 %v3980
        %v4055 = vpop.f32.mrf.mxu0
        %v4056 = vadd.f32 0.0, %v4055
        %v4057 = vpop.f32.mrf.mxu0
        %v4058 = vpop.f32.mrf.mxu0
        %v4059 = vadd.f32 0.0, %v4058
        %v4060 = vpop.f32.mrf.mxu0
        %4061 = vmatprep.mubr.bf16.mxu0 0
        %4062 = vmatmul.mubr.bf16.gmra.mxu0 %v3983
        %v4063 = vpop.f32.mrf.mxu0
        %v4064 = vadd.f32 0.0, %v4063
        %v4065 = vpop.f32.mrf.mxu0
        %v4066 = vpop.f32.mrf.mxu0
        %v4067 = vadd.f32 0.0, %v4066
        %v4068 = vpop.f32.mrf.mxu0
        %4069 = vmatprep.mubr.bf16.mxu0 0
        %4070 = vmatmul.mubr.bf16.gmra.mxu0 %v3986
        %v4071 = vpop.f32.mrf.mxu0
        %v4072 = vadd.f32 0.0, %v4071
        %v4073 = vpop.f32.mrf.mxu0
        %v4074 = vpop.f32.mrf.mxu0
        %v4075 = vadd.f32 0.0, %v4074
        %v4076 = vpop.f32.mrf.mxu0
        %4077 = vmatprep.mubr.bf16.mxu0 0
        %4078 = vmatmul.mubr.bf16.gmra.mxu0 %v3989
        %v4079 = vpop.f32.mrf.mxu0
        %v4080 = vadd.f32 0.0, %v4079
        %v4081 = vpop.f32.mrf.mxu0
        %v4082 = vpop.f32.mrf.mxu0
        %v4083 = vadd.f32 0.0, %v4082
        %v4084 = vpop.f32.mrf.mxu0
        %4085 = vmatprep.mubr.bf16.mxu0 0
        %4086 = vmatmul.mubr.bf16.gmra.mxu0 %v3992
        %v4087 = vpop.f32.mrf.mxu0
        %v4088 = vadd.f32 0.0, %v4087
        %v4089 = vpop.f32.mrf.mxu0
        %v4090 = vpop.f32.mrf.mxu0
        %v4091 = vadd.f32 0.0, %v4090
        %v4092 = vpop.f32.mrf.mxu0
        %4093 = vdwg.mxu0
        %v4094 = vadd.f32 %v3703, %v4032
        %v4095 = vadd.f32 %v3704, %v4035
        %v4096 = vadd.f32 %v3705, %v4040
        %v4097 = vadd.f32 %v3706, %v4043
        %v4098 = vadd.f32 %v3707, %v4048
        %v4099 = vadd.f32 %v3708, %v4051
        %v4100 = vadd.f32 %v3709, %v4056
        %v4101 = vadd.f32 %v3710, %v4059
        %v4102 = vadd.f32 %v3711, %v4064
        %v4103 = vadd.f32 %v3712, %v4067
        %v4104 = vadd.f32 %v3713, %v4072
        %v4105 = vadd.f32 %v3714, %v4075
        %v4106 = vadd.f32 %v3715, %v4080
        %v4107 = vadd.f32 %v3716, %v4083
        %v4108 = vadd.f32 %v3717, %v4088
        %v4109 = vadd.f32 %v3718, %v4091
        %s4110 = scalar_lea.vmem %s3, 10
        %v4111 = vld [vmem:[%s4110] sm:$0x3]
        %v4113 = vshrl.u32 %v3743, 16
        %v4115 = vrot.slane %v4113, 4
        %v4116 = vshll.u32 %v3743, 16
        %v4118 = vrot.slane %v4116, 5
        %v4119 = vor.u32 %v4115, %v4118
        %v4120 = vrot.slane %v4119, 4
        %v4122 = vshll.u32 %v3744, 16
        %v4124 = vrot.slane %v4122, 5
        %v4125 = vsel %vm3753, %v4120, %v4124
        %v4126 = vshrl.u32 %v3744, 16
        %v4128 = vrot.slane %v4126, 4
        %v4129 = vor.u32 %v4128, %v4124
        %v4130 = vrot.slane %v4129, 4
        %v4132 = vshll.u32 %v3745, 16
        %v4134 = vrot.slane %v4132, 5
        %v4135 = vsel %vm3753, %v4130, %v4134
        %v4136 = vunpack.c.l.b16 %v4125
        %v4137 = vunpack.c.l.b16 %v4135
        %v4138 = vpack.c.b16 %v4137, %v4136
        %v4140 = vsel %vm2865, %v4138, 0
        %v4143 = vsel %vm2890, %v4111, 0
        %4145 = vmatprep.subr.bf16.mxu0 0
        %4146 = vmatpush1.bf16.msra.mxu0 0
        %4147 = vmatprep.subr.bf16.mxu0 0
        %4148 = vmatpush1.bf16.msra.mxu0 0
        %4149 = vmatprep.subr.bf16.mxu0 0
        %4150 = vmatpush1.bf16.msra.mxu0 0
        %4151 = vmatprep.subr.bf16.mxu0 0
        %4152 = vmatpush1.bf16.msra.mxu0 0
        %4153 = vmatprep.subr.bf16.mxu0 0
        %4154 = vmatpush1.bf16.msra.mxu0 0
        %4155 = vmatprep.subr.bf16.mxu0 0
        %4156 = vmatpush1.bf16.msra.mxu0 0
        %4157 = vmatprep.subr.bf16.mxu0 0
        %4158 = vmatpush1.bf16.msra.mxu0 0
        %4159 = vmatprep.subr.bf16.mxu0 0
        %4160 = vmatpush1.bf16.msra.mxu0 %v4143
        %4161 = vmatprep.subr.bf16.mxu0 0
        %4162 = vmatpush2.bf16.msra.mxu0 0
        %4163 = vmatprep.subr.bf16.mxu0 0
        %4164 = vmatpush2.bf16.msra.mxu0 0
        %4165 = vmatprep.subr.bf16.mxu0 0
        %4166 = vmatpush2.bf16.msra.mxu0 0
        %4167 = vmatprep.subr.bf16.mxu0 0
        %4168 = vmatpush2.bf16.msra.mxu0 0
        %4169 = vmatprep.subr.bf16.mxu0 0
        %4170 = vmatpush2.bf16.msra.mxu0 0
        %4171 = vmatprep.subr.bf16.mxu0 0
        %4172 = vmatpush2.bf16.msra.mxu0 0
        %4173 = vmatprep.subr.bf16.mxu0 0
        %4174 = vmatpush2.bf16.msra.mxu0 0
        %4175 = vmatprep.subr.bf16.mxu0 0
        %4176 = vmatpush2.bf16.msra.mxu0 0
        %4177 = vmatprep.mubr.bf16.mxu0 0
        %4178 = vmatmul.mubr.bf16.gmra.mxu0 %v3974
        %v4179 = vpop.f32.mrf.mxu0
        %v4180 = vadd.f32 0.0, %v4179
        %v4181 = vpop.f32.mrf.mxu0
        %v4182 = vpop.f32.mrf.mxu0
        %v4183 = vadd.f32 0.0, %v4182
        %v4184 = vpop.f32.mrf.mxu0
        %4185 = vmatprep.mubr.bf16.mxu0 0
        %4186 = vmatmul.mubr.bf16.gmra.mxu0 %v3977
        %v4187 = vpop.f32.mrf.mxu0
        %v4188 = vadd.f32 0.0, %v4187
        %v4189 = vpop.f32.mrf.mxu0
        %v4190 = vpop.f32.mrf.mxu0
        %v4191 = vadd.f32 0.0, %v4190
        %v4192 = vpop.f32.mrf.mxu0
        %4193 = vmatprep.mubr.bf16.mxu0 0
        %4194 = vmatmul.mubr.bf16.gmra.mxu0 %v3980
        %v4195 = vpop.f32.mrf.mxu0
        %v4196 = vadd.f32 0.0, %v4195
        %v4197 = vpop.f32.mrf.mxu0
        %v4198 = vpop.f32.mrf.mxu0
        %v4199 = vadd.f32 0.0, %v4198
        %v4200 = vpop.f32.mrf.mxu0
        %4201 = vmatprep.mubr.bf16.mxu0 0
        %4202 = vmatmul.mubr.bf16.gmra.mxu0 %v3983
        %v4203 = vpop.f32.mrf.mxu0
        %v4204 = vadd.f32 0.0, %v4203
        %v4205 = vpop.f32.mrf.mxu0
        %v4206 = vpop.f32.mrf.mxu0
        %v4207 = vadd.f32 0.0, %v4206
        %v4208 = vpop.f32.mrf.mxu0
        %4209 = vmatprep.mubr.bf16.mxu0 0
        %4210 = vmatmul.mubr.bf16.gmra.mxu0 %v3986
        %v4211 = vpop.f32.mrf.mxu0
        %v4212 = vadd.f32 0.0, %v4211
        %v4213 = vpop.f32.mrf.mxu0
        %v4214 = vpop.f32.mrf.mxu0
        %v4215 = vadd.f32 0.0, %v4214
        %v4216 = vpop.f32.mrf.mxu0
        %4217 = vmatprep.mubr.bf16.mxu0 0
        %4218 = vmatmul.mubr.bf16.gmra.mxu0 %v3989
        %v4219 = vpop.f32.mrf.mxu0
        %v4220 = vadd.f32 0.0, %v4219
        %v4221 = vpop.f32.mrf.mxu0
        %v4222 = vpop.f32.mrf.mxu0
        %v4223 = vadd.f32 0.0, %v4222
        %v4224 = vpop.f32.mrf.mxu0
        %4225 = vmatprep.mubr.bf16.mxu0 0
        %4226 = vmatmul.mubr.bf16.gmra.mxu0 %v3992
        %v4227 = vpop.f32.mrf.mxu0
        %v4228 = vadd.f32 0.0, %v4227
        %v4229 = vpop.f32.mrf.mxu0
        %v4230 = vpop.f32.mrf.mxu0
        %v4231 = vadd.f32 0.0, %v4230
        %v4232 = vpop.f32.mrf.mxu0
        %4233 = vmatprep.mubr.bf16.mxu0 0
        %4234 = vmatmul.mubr.bf16.gmra.mxu0 %v4140
        %v4235 = vpop.f32.mrf.mxu0
        %v4236 = vadd.f32 0.0, %v4235
        %v4237 = vpop.f32.mrf.mxu0
        %v4238 = vpop.f32.mrf.mxu0
        %v4239 = vadd.f32 0.0, %v4238
        %v4240 = vpop.f32.mrf.mxu0
        %4241 = vdwg.mxu0
        %v4242 = vadd.f32 %v4094, %v4180
        %v4243 = vadd.f32 %v4095, %v4183
        %v4244 = vadd.f32 %v4096, %v4188
        %v4245 = vadd.f32 %v4097, %v4191
        %v4246 = vadd.f32 %v4098, %v4196
        %v4247 = vadd.f32 %v4099, %v4199
        %v4248 = vadd.f32 %v4100, %v4204
        %v4249 = vadd.f32 %v4101, %v4207
        %v4250 = vadd.f32 %v4102, %v4212
        %v4251 = vadd.f32 %v4103, %v4215
        %v4252 = vadd.f32 %v4104, %v4220
        %v4253 = vadd.f32 %v4105, %v4223
        %v4254 = vadd.f32 %v4106, %v4228
        %v4255 = vadd.f32 %v4107, %v4231
        %v4256 = vadd.f32 %v4108, %v4236
        %v4257 = vadd.f32 %v4109, %v4239
        %s4258 = scalar_lea.vmem %s3, 16
        %v4259 = vld [vmem:[%s4258] sm:$0x3]
        %v4261 = vshrl.u32 %v3746, 16
        %v4263 = vrot.slane %v4261, 4
        %v4264 = vshll.u32 %v3746, 16
        %v4266 = vrot.slane %v4264, 5
        %v4267 = vor.u32 %v4263, %v4266
        %v4268 = vrot.slane %v4267, 4
        %v4270 = vshll.u32 %v3747, 16
        %v4272 = vrot.slane %v4270, 5
        %v4273 = vsel %vm3753, %v4268, %v4272
        %v4274 = vshrl.u32 %v3747, 16
        %v4276 = vrot.slane %v4274, 4
        %v4277 = vor.u32 %v4276, %v4272
        %v4278 = vrot.slane %v4277, 4
        %v4280 = vshll.u32 %v3748, 16
        %v4282 = vrot.slane %v4280, 5
        %v4283 = vsel %vm3753, %v4278, %v4282
        %v4284 = vunpack.c.l.b16 %v4273
        %v4285 = vunpack.c.l.b16 %v4283
        %v4286 = vpack.c.b16 %v4285, %v4284
        %v4288 = vsel %vm2865, %v4286, 0
        %v4291 = vsel %vm2890, %v4259, 0
        %4293 = vmatprep.subr.bf16.mxu0 0
        %4294 = vmatpush1.bf16.msra.mxu0 0
        %4295 = vmatprep.subr.bf16.mxu0 0
        %4296 = vmatpush1.bf16.msra.mxu0 0
        %4297 = vmatprep.subr.bf16.mxu0 0
        %4298 = vmatpush1.bf16.msra.mxu0 0
        %4299 = vmatprep.subr.bf16.mxu0 0
        %4300 = vmatpush1.bf16.msra.mxu0 0
        %4301 = vmatprep.subr.bf16.mxu0 0
        %4302 = vmatpush1.bf16.msra.mxu0 0
        %4303 = vmatprep.subr.bf16.mxu0 0
        %4304 = vmatpush1.bf16.msra.mxu0 0
        %4305 = vmatprep.subr.bf16.mxu0 0
        %4306 = vmatpush1.bf16.msra.mxu0 0
        %4307 = vmatprep.subr.bf16.mxu0 0
        %4308 = vmatpush1.bf16.msra.mxu0 %v4291
        %4309 = vmatprep.subr.bf16.mxu0 0
        %4310 = vmatpush2.bf16.msra.mxu0 0
        %4311 = vmatprep.subr.bf16.mxu0 0
        %4312 = vmatpush2.bf16.msra.mxu0 0
        %4313 = vmatprep.subr.bf16.mxu0 0
        %4314 = vmatpush2.bf16.msra.mxu0 0
        %4315 = vmatprep.subr.bf16.mxu0 0
        %4316 = vmatpush2.bf16.msra.mxu0 0
        %4317 = vmatprep.subr.bf16.mxu0 0
        %4318 = vmatpush2.bf16.msra.mxu0 0
        %4319 = vmatprep.subr.bf16.mxu0 0
        %4320 = vmatpush2.bf16.msra.mxu0 0
        %4321 = vmatprep.subr.bf16.mxu0 0
        %4322 = vmatpush2.bf16.msra.mxu0 0
        %4323 = vmatprep.subr.bf16.mxu0 0
        %4324 = vmatpush2.bf16.msra.mxu0 0
        %4325 = vmatprep.mubr.bf16.mxu0 0
        %4326 = vmatmul.mubr.bf16.gmra.mxu0 %v3977
        %v4327 = vpop.f32.mrf.mxu0
        %v4328 = vadd.f32 0.0, %v4327
        %v4329 = vpop.f32.mrf.mxu0
        %v4330 = vpop.f32.mrf.mxu0
        %v4331 = vadd.f32 0.0, %v4330
        %v4332 = vpop.f32.mrf.mxu0
        %4333 = vmatprep.mubr.bf16.mxu0 0
        %4334 = vmatmul.mubr.bf16.gmra.mxu0 %v3980
        %v4335 = vpop.f32.mrf.mxu0
        %v4336 = vadd.f32 0.0, %v4335
        %v4337 = vpop.f32.mrf.mxu0
        %v4338 = vpop.f32.mrf.mxu0
        %v4339 = vadd.f32 0.0, %v4338
        %v4340 = vpop.f32.mrf.mxu0
        %4341 = vmatprep.mubr.bf16.mxu0 0
        %4342 = vmatmul.mubr.bf16.gmra.mxu0 %v3983
        %v4343 = vpop.f32.mrf.mxu0
        %v4344 = vadd.f32 0.0, %v4343
        %v4345 = vpop.f32.mrf.mxu0
        %v4346 = vpop.f32.mrf.mxu0
        %v4347 = vadd.f32 0.0, %v4346
        %v4348 = vpop.f32.mrf.mxu0
        %4349 = vmatprep.mubr.bf16.mxu0 0
        %4350 = vmatmul.mubr.bf16.gmra.mxu0 %v3986
        %v4351 = vpop.f32.mrf.mxu0
        %v4352 = vadd.f32 0.0, %v4351
        %v4353 = vpop.f32.mrf.mxu0
        %v4354 = vpop.f32.mrf.mxu0
        %v4355 = vadd.f32 0.0, %v4354
        %v4356 = vpop.f32.mrf.mxu0
        %4357 = vmatprep.mubr.bf16.mxu0 0
        %4358 = vmatmul.mubr.bf16.gmra.mxu0 %v3989
        %v4359 = vpop.f32.mrf.mxu0
        %v4360 = vadd.f32 0.0, %v4359
        %v4361 = vpop.f32.mrf.mxu0
        %v4362 = vpop.f32.mrf.mxu0
        %v4363 = vadd.f32 0.0, %v4362
        %v4364 = vpop.f32.mrf.mxu0
        %4365 = vmatprep.mubr.bf16.mxu0 0
        %4366 = vmatmul.mubr.bf16.gmra.mxu0 %v3992
        %v4367 = vpop.f32.mrf.mxu0
        %v4368 = vadd.f32 0.0, %v4367
        %v4369 = vpop.f32.mrf.mxu0
        %v4370 = vpop.f32.mrf.mxu0
        %v4371 = vadd.f32 0.0, %v4370
        %v4372 = vpop.f32.mrf.mxu0
        %4373 = vmatprep.mubr.bf16.mxu0 0
        %4374 = vmatmul.mubr.bf16.gmra.mxu0 %v4140
        %v4375 = vpop.f32.mrf.mxu0
        %v4376 = vadd.f32 0.0, %v4375
        %v4377 = vpop.f32.mrf.mxu0
        %v4378 = vpop.f32.mrf.mxu0
        %v4379 = vadd.f32 0.0, %v4378
        %v4380 = vpop.f32.mrf.mxu0
        %4381 = vmatprep.mubr.bf16.mxu0 0
        %4382 = vmatmul.mubr.bf16.gmra.mxu0 %v4288
        %v4383 = vpop.f32.mrf.mxu0
        %v4384 = vadd.f32 0.0, %v4383
        %v4385 = vpop.f32.mrf.mxu0
        %v4386 = vpop.f32.mrf.mxu0
        %v4387 = vadd.f32 0.0, %v4386
        %v4388 = vpop.f32.mrf.mxu0
        %4389 = vdwg.mxu0
        %v4390 = vadd.f32 %v4242, %v4328
        %v4391 = vadd.f32 %v4243, %v4331
        %v4392 = vadd.f32 %v4244, %v4336
        %v4393 = vadd.f32 %v4245, %v4339
        %v4394 = vadd.f32 %v4246, %v4344
        %v4395 = vadd.f32 %v4247, %v4347
        %v4396 = vadd.f32 %v4248, %v4352
        %v4397 = vadd.f32 %v4249, %v4355
        %v4398 = vadd.f32 %v4250, %v4360
        %v4399 = vadd.f32 %v4251, %v4363
        %v4400 = vadd.f32 %v4252, %v4368
        %v4401 = vadd.f32 %v4253, %v4371
        %v4402 = vadd.f32 %v4254, %v4376
        %v4403 = vadd.f32 %v4255, %v4379
        %v4404 = vadd.f32 %v4256, %v4384
        %v4405 = vadd.f32 %v4257, %v4387
        %v4406 = vld [vmem:[%s4] sm:$0x1]
        %v4408 = vlaneseq
        %v4409 = vshrl.u32 %v4408, 7
        %v4410 = vsub.s32 0, %v4409
        %v4411 = vrot.slane %v4406, %v4410
        %v4413 = vadd.f32 %v4390, %v4411
        %v4414 = vadd.f32 %v4391, %v4411
        %v4415 = vadd.f32 %v4392, %v4411
        %v4416 = vadd.f32 %v4393, %v4411
        %v4417 = vadd.f32 %v4394, %v4411
        %v4418 = vadd.f32 %v4395, %v4411
        %v4419 = vadd.f32 %v4396, %v4411
        %v4420 = vadd.f32 %v4397, %v4411
        %v4421 = vadd.f32 %v4398, %v4411
        %v4422 = vadd.f32 %v4399, %v4411
        %v4423 = vadd.f32 %v4400, %v4411
        %v4424 = vadd.f32 %v4401, %v4411
        %v4425 = vadd.f32 %v4402, %v4411
        %v4426 = vadd.f32 %v4403, %v4411
        %v4427 = vadd.f32 %v4404, %v4411
        %v4428 = vadd.f32 %v4405, %v4411
        %s4429 = smul.u32 %s2626, 16
        %s4430 = scalar_lea.vmem %s247, %s4429
        %v4431 = vld [vmem:[%s4430] sm:$0xff]
        %v4432 = vld [vmem:[%s4430 + $0x8] sm:$0xff]
        %v4433 = vld [vmem:[%s4430 + $0x10] sm:$0xff]
        %v4434 = vld [vmem:[%s4430 + $0x18] sm:$0xff]
        %v4435 = vld [vmem:[%s4430 + $0x20] sm:$0xff]
        %v4436 = vld [vmem:[%s4430 + $0x28] sm:$0xff]
        %v4437 = vld [vmem:[%s4430 + $0x30] sm:$0xff]
        %v4438 = vld [vmem:[%s4430 + $0x38] sm:$0xff]
        %v4439 = vld [vmem:[%s4430 + $0x40] sm:$0xff]
        %v4440 = vld [vmem:[%s4430 + $0x48] sm:$0xff]
        %v4441 = vld [vmem:[%s4430 + $0x50] sm:$0xff]
        %v4442 = vld [vmem:[%s4430 + $0x58] sm:$0xff]
        %v4443 = vld [vmem:[%s4430 + $0x60] sm:$0xff]
        %v4444 = vld [vmem:[%s4430 + $0x68] sm:$0xff]
        %v4445 = vld [vmem:[%s4430 + $0x70] sm:$0xff]
        %v4446 = vld [vmem:[%s4430 + $0x78] sm:$0xff]
        %v4447 = vadd.f32 %v4431, %v4413
        %v4448 = vadd.f32 %v4432, %v4414
        %v4449 = vadd.f32 %v4433, %v4415
        %v4450 = vadd.f32 %v4434, %v4416
        %v4451 = vadd.f32 %v4435, %v4417
        %v4452 = vadd.f32 %v4436, %v4418
        %v4453 = vadd.f32 %v4437, %v4419
        %v4454 = vadd.f32 %v4438, %v4420
        %v4455 = vadd.f32 %v4439, %v4421
        %v4456 = vadd.f32 %v4440, %v4422
        %v4457 = vadd.f32 %v4441, %v4423
        %v4458 = vadd.f32 %v4442, %v4424
        %v4459 = vadd.f32 %v4443, %v4425
        %v4460 = vadd.f32 %v4444, %v4426
        %v4461 = vadd.f32 %v4445, %v4427
        %v4462 = vadd.f32 %v4446, %v4428
        %s4463 = scalar_lea.vmem %s252, %s4429
        %4464 = vst.msk [vmem:[%s4463] sm:$0xff] %vm2865, %v4447
        %4465 = vst.msk [vmem:[%s4463 + $0x8] sm:$0xff] %vm2865, %v4448
        %4466 = vst.msk [vmem:[%s4463 + $0x10] sm:$0xff] %vm2865, %v4449
        %4467 = vst.msk [vmem:[%s4463 + $0x18] sm:$0xff] %vm2865, %v4450
        %4468 = vst.msk [vmem:[%s4463 + $0x20] sm:$0xff] %vm2865, %v4451
        %4469 = vst.msk [vmem:[%s4463 + $0x28] sm:$0xff] %vm2865, %v4452
        %4470 = vst.msk [vmem:[%s4463 + $0x30] sm:$0xff] %vm2865, %v4453
        %4471 = vst.msk [vmem:[%s4463 + $0x38] sm:$0xff] %vm2865, %v4454
        %4472 = vst.msk [vmem:[%s4463 + $0x40] sm:$0xff] %vm2865, %v4455
        %4473 = vst.msk [vmem:[%s4463 + $0x48] sm:$0xff] %vm2865, %v4456
        %4474 = vst.msk [vmem:[%s4463 + $0x50] sm:$0xff] %vm2865, %v4457
        %4475 = vst.msk [vmem:[%s4463 + $0x58] sm:$0xff] %vm2865, %v4458
        %4476 = vst.msk [vmem:[%s4463 + $0x60] sm:$0xff] %vm2865, %v4459
        %4477 = vst.msk [vmem:[%s4463 + $0x68] sm:$0xff] %vm2865, %v4460
        %4478 = vst.msk [vmem:[%s4463 + $0x70] sm:$0xff] %vm2865, %v4461
        %4479 = vst.msk [vmem:[%s4463 + $0x78] sm:$0xff] %vm2865, %v4462
      $region56: #{tpu_custom_call.1} parent=43 // loop_footer
        %s2625 = sadd.s32 1, %s2621
      $region57: #{tpu_custom_call.1} parent=43 // loop_footer_branch
        %2620 = sbr.rel target = $region53
      $region58: #{tpu_custom_call.1} parent=43 // loop_exit
        _
      %p4480 = scmp.lt.s32.totalorder %s18, 1
      %s4481 = scalar_select %p4480, %s18, 1
      %s4482 = smul.addr %s4481, 32
      %s4483 = smul.addr %s4482, 8
      %s4484 = scalar_lea.vmem %s6, %s4483
      // Predicated region
      $region59: #{tpu_custom_call.1} parent=43 // pred_check
        %p4485 = pneg %p167
      $region60: #{tpu_custom_call.1} parent=43 // pred_check_branch
        %4487 = sbr.rel (%p4485) target = $region62
      $region61: #{tpu_custom_call.1} parent=43 // pred_region
        _
      $region62: #{tpu_custom_call.1} parent=43 // pred_fallthru
        _
    $region44: #{tpu_custom_call.1} parent=5 // pred_fallthru
      _
    %p4488 = scmp.le.s32.totalorder 2, %s13
    // Predicated region
    $region63: #{tpu_custom_call.1} parent=5 // pred_check
      %p4489 = pneg %p4488
    $region64: #{tpu_custom_call.1} parent=5 // pred_check_branch
      %4491 = sbr.rel (%p4489) target = $region66
    $region65: #{tpu_custom_call.1} parent=5 // pred_region
      %s4492 = ssub.s32 %s13, 2
      // Predicated region
      $region67: #{tpu_custom_call.1} parent=65 // pred_check
        %p4493 = pneg %p173
      $region68: #{tpu_custom_call.1} parent=65 // pred_check_branch
        %4495 = sbr.rel (%p4493) target = $region70
      $region69: #{tpu_custom_call.1} parent=65 // pred_region
        %p4496 = scmp.lt.s32.totalorder %s19, 1
        %s4497 = scalar_select %p4496, %s19, 1
        %s4498 = smul.addr %s4497, 32
        %s4499 = smul.addr %s4498, 8
        %s4500 = scalar_lea.vmem %s6, %s4499
      $region70: #{tpu_custom_call.1} parent=65 // pred_fallthru
        _
    $region66: #{tpu_custom_call.1} parent=5 // pred_fallthru
      _
  $region6: #{tpu_custom_call.1} parent=0 // loop_footer
    %s17 = sadd.s32 1, %s13
  $region7: #{tpu_custom_call.1} parent=0 // loop_footer_branch
    %12 = sbr.rel target = $region3
  $region8: #{tpu_custom_call.1} parent=0 // loop_exit
    _

</llo_original>
